<compile_context>
chip_gen: v7x
topology: tpu7x:2x2x1
jax: 0.10.0
libtpu: 0.0.40
codegen_flags: <defaults>
</compile_context>

<pallas_src>
import math

import jax
import jax.numpy as jnp
from jax.experimental import pallas as pl
from jax.experimental.pallas import tpu as pltpu

EPS = 1e-5   # nn.BatchNorm3d default eps
K = 3        # kernel_size


def _make_conv_kernel(td, h, w, cins, cout, fuse_in_act, mxu_dtype):
    """Fused Conv3d(k=3, p=1, bias=False) for one (sample, D-tile).

    Inputs are one or more channel streams laid out (1, td, h, w*cin_s) plus
    1-row D halos; W taps live in block-banded weights T[kd*3+kh] of shape
    (w*cin_s, w*cout), so the conv is 9 accumulating MXU dots per stream.
    Optionally fuses the previous layer's BatchNorm+ReLU into the input path
    and always emits lane-dense per-tile (sum, sumsq) channel statistics.
    """
    n_s = len(cins)
    wcout = w * cout
    ph = td * h

    def kernel(*refs):
        i = 0
        xrefs = [refs[i + 3 * s: i + 3 * s + 3] for s in range(n_s)]
        i += 3 * n_s
        wrefs = refs[i:i + n_s]
        i += n_s
        if fuse_in_act:
            sc_ref, sh_ref = refs[i], refs[i + 1]
            i += 2
        y_ref, stats_ref = refs[i], refs[i + 1]
        i += 2
        pads = refs[i:i + n_s]

        d = pl.program_id(1)
        nd = pl.num_programs(1)

        if fuse_in_act:
            # hoisted: load folded BN scale/shift once (not once per act site)
            sc = sc_ref[...]            # (1, w*cin)
            sh = sh_ref[...]

        def act(v):
            v = v.astype(jnp.float32)
            if fuse_in_act:
                v = jnp.maximum(v * sc + sh, 0.0)
            return v

        # ---- assemble the D/H-halo'd tile of each input stream -------------
        def assemble(xm, xp, xn, pad):
            wc = pad.shape[-1]
            # H zero-padding border (never written with data); D-halo planes
            # are only cleared when the corresponding halo copy is skipped.
            pad[:, 0:1, :] = jnp.zeros((td + 2, 1, wc), jnp.float32)
            pad[:, h + 1:h + 2, :] = jnp.zeros((td + 2, 1, wc), jnp.float32)
            pad[1:td + 1, 1:h + 1, :] = act(xm[0])

            @pl.when(d > 0)
            def _():
                pad[0:1, 1:h + 1, :] = act(xp[0])

            @pl.when(d == 0)
            def _():
                pad[0:1, 1:h + 1, :] = jnp.zeros((1, h, wc), jnp.float32)

            @pl.when(d < nd - 1)
            def _():
                pad[td + 1:td + 2, 1:h + 1, :] = act(xn[0])

            @pl.when(d == nd - 1)
            def _():
                pad[td + 1:td + 2, 1:h + 1, :] = jnp.zeros((1, h, wc),
                                                           jnp.float32)

        for s in range(n_s):
            assemble(xrefs[s][0], xrefs[s][1], xrefs[s][2], pads[s])

        # ---- 9 accumulating MXU dots per stream (banded W taps) ------------
        acc = jnp.zeros((ph, wcout), jnp.float32)
        for s in range(n_s):
            wcs = w * cins[s]
            for kd in range(K):
                for kh in range(K):
                    lhs = pads[s][kd:kd + td, kh:kh + h, :]
                    lhs = lhs.reshape(ph, wcs).astype(mxu_dtype)
                    acc = acc + jnp.dot(lhs, wrefs[s][kd * K + kh],
                                        preferred_element_type=jnp.float32)

        # ---- lane-dense output store + packed BN statistics ----------------
        y_ref[...] = acc.reshape(1, td, h, wcout).astype(y_ref.dtype)
        s_row = jnp.sum(acc, axis=0, keepdims=True)           # (1, w*cout)
        q_row = jnp.sum(acc * acc, axis=0, keepdims=True)     # (1, w*cout)
        stats_ref[...] = jnp.concatenate([s_row, q_row],
                                         axis=0).reshape(1, 1, 2, wcout)

    return kernel


def _conv3d_bn_stats(streams, banded_ws, *, w, cout, d_tile,
                     in_scale=None, in_shift=None,
                     out_dtype=jnp.float32, mxu_dtype=jnp.bfloat16):
    """One fused conv layer: returns (raw_conv (N,D,H,W*Cout), stats (N,nd,2,W*Cout))."""
    n, d, h, _ = streams[0].shape
    assert d % d_tile == 0, (d, d_tile)
    nd = d // d_tile
    cins = tuple(xs.shape[3] // w for xs in streams)
    fuse = in_scale is not None
    assert (not fuse) or len(streams) == 1
    wcout = w * cout

    kernel = _make_conv_kernel(d_tile, h, w, cins, cout, fuse, mxu_dtype)

    in_specs, operands = [], []
    for xs in streams:
        wcs = xs.shape[3]
        in_specs += [
            pl.BlockSpec((1, d_tile, h, wcs), lambda b, i: (b, i, 0, 0)),
            pl.BlockSpec((1, 1, h, wcs),
                         lambda b, i: (b, jnp.maximum(i * d_tile - 1, 0), 0, 0)),
            pl.BlockSpec((1, 1, h, wcs),
                         lambda b, i: (b, jnp.minimum(i * d_tile + d_tile,
                                                      d - 1), 0, 0)),
        ]
        operands += [xs, xs, xs]
    for wb in banded_ws:
        # constant-index weight block, resident across the whole grid
        in_specs.append(pl.BlockSpec(wb.shape, lambda b, i: (0, 0, 0)))
        operands.append(wb)
    if fuse:
        wcin = streams[0].shape[3]
        in_specs += [pl.BlockSpec((1, wcin), lambda b, i: (0, 0))] * 2
        operands += [in_scale.reshape(1, wcin).astype(jnp.float32),
                     in_shift.reshape(1, wcin).astype(jnp.float32)]

    out_shape = (jax.ShapeDtypeStruct((n, d, h, wcout), out_dtype),
                 jax.ShapeDtypeStruct((n, nd, 2, wcout), jnp.float32))
    out_specs = [pl.BlockSpec((1, d_tile, h, wcout), lambda b, i: (b, i, 0, 0)),
                 pl.BlockSpec((1, 1, 2, wcout), lambda b, i: (b, i, 0, 0))]
    scratch_shapes = [pltpu.VMEM((d_tile + 2, h + 2, xs.shape[3]), jnp.float32)
                      for xs in streams]

    # VMEM budget from actual buffer sizes (double-buffered ins/outs, weights,
    # scratch) plus headroom.  TODO(synk): cap nearer 40-48 MiB + add H/W
    # tiling for large spatial extents when targeting v7x (64 MiB VMEM).
    def _nbytes(shape, dtype):
        return math.prod(shape) * jnp.dtype(dtype).itemsize

    vmem = 0
    for xs in streams:
        wcs = xs.shape[3]
        vmem += 2 * (_nbytes((1, d_tile, h, wcs), xs.dtype)
                     + 2 * _nbytes((1, 1, h, wcs), xs.dtype))
        vmem += _nbytes((d_tile + 2, h + 2, wcs), jnp.float32)
    for wb in banded_ws:
        vmem += 2 * _nbytes(wb.shape, wb.dtype)
    vmem += 2 * (_nbytes((1, d_tile, h, wcout), out_dtype)
                 + _nbytes((1, 1, 2, wcout), jnp.float32))
    vmem_limit = int(min(max(2 * vmem + (8 << 20), 32 << 20), 112 << 20))

    return pl.pallas_call(
        kernel,
        out_shape=out_shape,
        grid_spec=pltpu.PrefetchScalarGridSpec(
            num_scalar_prefetch=0,
            grid=(n, nd),
            in_specs=in_specs,
            out_specs=out_specs,
            scratch_shapes=scratch_shapes),
        compiler_params=pltpu.CompilerParams(
            dimension_semantics=("parallel", "parallel"),
            vmem_limit_bytes=vmem_limit),
    )(*operands)


def _banded_weights(w_oidhw, w_len, dtype):
    """(Cout, Cin, 3,3,3) torch-layout weight -> 9 block-banded matrices
    T[kd*3+kh] of shape (w_len*Cin, w_len*Cout); the W taps and the W
    zero-padding are folded into the band structure."""
    cout, cin = w_oidhw.shape[0], w_oidhw.shape[1]
    wt = jnp.transpose(w_oidhw, (2, 3, 4, 1, 0)).astype(jnp.float32)  # kd,kh,kw,ci,co
    band = jnp.stack([jnp.eye(w_len, k=1 - kw, dtype=jnp.float32)
                      for kw in range(K)])                            # kw,w_in,w_out
    t = jnp.einsum("abkcf,kio->abicof", wt, band)
    return t.reshape(K * K, w_len * cin, w_len * cout).astype(dtype)


def _bn_affine_from_stats(stats, gamma, beta, count, w, cout):
    """Fold training-mode BatchNorm into a per-channel scale/shift."""
    tot = jnp.sum(stats, axis=(0, 1))            # (2, w*cout)
    tot = tot.reshape(2, w, cout).sum(axis=1)    # (2, cout)
    mean = tot[0] / count
    # TODO(synk): single-pass E[x^2]-mean^2 (clamped); use a two-pass/Welford
    #             reduction if |mean| >> std on real activations.
    var = jnp.maximum(tot[1] / count - mean * mean, 0.0)
    scale = gamma * jax.lax.rsqrt(var + EPS)
    shift = beta - mean * scale
    return scale, shift


def decoder_block_forward(x, skip, params, *, d_tile=4,
                          mxu_dtype=jnp.bfloat16, y1_dtype=jnp.bfloat16):
    """DecoderBlock.forward (attention_type=None, use_batchnorm=True).

    x:    (N, C_in, D0, H0, W0)          NCDHW, like PyTorch
    skip: (N, C_skip, 2*D0, 2*H0, 2*W0)  or None
    """
    w1, g1, b1 = params["w1"], params["gamma1"], params["beta1"]
    w2, g2, b2 = params["w2"], params["gamma2"], params["beta2"]
    cout = w1.shape[0]
    cx = x.shape[1]

    # nearest x2 upsample via reshape+broadcast (no triple jnp.repeat); no
    # concat tensor is materialised: conv1 consumes two separate streams.
    xt = jnp.transpose(x, (0, 2, 3, 4, 1))                   # (n, d0, h0, w0, cx)
    n, d0, h0, w0, _ = xt.shape
    d, h, w = 2 * d0, 2 * h0, 2 * w0
    xt = jnp.broadcast_to(xt[:, :, None, :, None, :, None, :],
                          (n, d0, 2, h0, 2, w0, 2, cx))
    xt = xt.reshape(n, d, h, w * cx)                         # lane-dense NDH(WC)

    streams = [xt]
    w1_splits = [w1[:, :cx]]
    if skip is not None:
        cs = skip.shape[1]
        st = jnp.transpose(skip, (0, 2, 3, 4, 1))
        assert st.shape[1:4] == (d, h, w), st.shape
        streams.append(st.reshape(n, d, h, w * cs))
        w1_splits.append(w1[:, cx:])

    d_tile = min(d_tile, d)
    count = n * d * h * w

    # ---- conv1: two streams, split banded weights, bf16 intermediate -------
    w1b = [_banded_weights(ws, w, mxu_dtype) for ws in w1_splits]
    y1, st1 = _conv3d_bn_stats(streams, w1b, w=w, cout=cout, d_tile=d_tile,
                               out_dtype=y1_dtype, mxu_dtype=mxu_dtype)
    scale1, shift1 = _bn_affine_from_stats(st1, g1, b1, count, w, cout)

    # ---- conv2, with conv1's BatchNorm+ReLU fused into its input path ------
    w2b = [_banded_weights(w2, w, mxu_dtype)]
    y2, st2 = _conv3d_bn_stats([y1], w2b, w=w, cout=cout, d_tile=d_tile,
                               in_scale=jnp.tile(scale1, w),
                               in_shift=jnp.tile(shift1, w),
                               out_dtype=jnp.float32, mxu_dtype=mxu_dtype)
    scale2, shift2 = _bn_affine_from_stats(st2, g2, b2, count, w, cout)

    # ---- final BatchNorm+ReLU: pointwise in the lane-dense layout ----------
    out = jnp.maximum(y2 * jnp.tile(scale2, w) + jnp.tile(shift2, w), 0.0)
    out = out.reshape(n, d, h, w, cout)
    return jnp.transpose(out, (0, 4, 1, 2, 3))               # NCDHW


# ----------------------------- pure-JAX reference ---------------------------

def _bn_relu_ref(y, gamma, beta):
    mean = jnp.mean(y, axis=(0, 2, 3, 4), keepdims=True)
    var = jnp.mean((y - mean) ** 2, axis=(0, 2, 3, 4), keepdims=True)
    y = (y - mean) * jax.lax.rsqrt(var + EPS)
    y = y * gamma.reshape(1, -1, 1, 1, 1) + beta.reshape(1, -1, 1, 1, 1)
    return jnp.maximum(y, 0.0)


def reference(x, skip, params):
    xu = jnp.repeat(jnp.repeat(jnp.repeat(x, 2, axis=2), 2, axis=3), 2, axis=4)
    z = jnp.concatenate([xu, skip], axis=1) if skip is not None else xu

    def conv(v, wgt):
        return jax.lax.conv_general_dilated(
            v, wgt, window_strides=(1, 1, 1),
            padding=((1, 1), (1, 1), (1, 1)),
            dimension_numbers=("NCDHW", "OIDHW", "NCDHW"),
            precision=jax.lax.Precision.HIGHEST)

    y = _bn_relu_ref(conv(z, params["w1"]), params["gamma1"], params["beta1"])
    y = _bn_relu_ref(conv(y, params["w2"]), params["gamma2"], params["beta2"])
    return y


if __name__ == "__main__":
    key = jax.random.PRNGKey(0)
    n = 2
    in_ch, skip_ch, out_ch = 16, 16, 16
    d0 = h0 = w0 = 4                 # x spatial; skip / output spatial = 2x
    # output W*Cout = 8*16 = 128 -> fully lane-dense stores / loads.

    ks = jax.random.split(key, 8)
    x = jax.random.normal(ks[0], (n, in_ch, d0, h0, w0), jnp.float32)
    skip = jax.random.normal(ks[1], (n, skip_ch, 2 * d0, 2 * h0, 2 * w0),
                             jnp.float32)

    cin1 = in_ch + skip_ch
    fan1 = cin1 * K ** 3
    fan2 = out_ch * K ** 3
    params = dict(
        w1=jax.random.uniform(ks[2], (out_ch, cin1, K, K, K), jnp.float32,
                              -1.0 / math.sqrt(fan1), 1.0 / math.sqrt(fan1)),
        gamma1=jax.random.uniform(ks[3], (out_ch,), jnp.float32, 0.5, 1.5),
        beta1=jax.random.uniform(ks[4], (out_ch,), jnp.float32, -0.5, 0.5),
        w2=jax.random.uniform(ks[5], (out_ch, out_ch, K, K, K), jnp.float32,
                              -1.0 / math.sqrt(fan2), 1.0 / math.sqrt(fan2)),
        gamma2=jax.random.uniform(ks[6], (out_ch,), jnp.float32, 0.5, 1.5),
        beta2=jax.random.uniform(ks[7], (out_ch,), jnp.float32, -0.5, 0.5),
    )

    ref = reference(x, skip, params)

    # f32 path: tight numerical validation of the kernel structure.
    out_f32 = decoder_block_forward(x, skip, params, d_tile=4,
                                    mxu_dtype=jnp.float32,
                                    y1_dtype=jnp.float32)
    out_f32 = jax.block_until_ready(out_f32)
    assert out_f32.shape == ref.shape == (n, out_ch, 2 * d0, 2 * h0, 2 * w0)
    err32 = float(jnp.max(jnp.abs(out_f32 - ref)))
    assert jnp.allclose(out_f32, ref, atol=1e-3, rtol=1e-3), \
        f"f32 max abs err {err32}"

    # default performance path: bf16 MXU operands + bf16 pre-BN intermediate;
    # looser tolerance is expected from bf16 through two conv+BN layers
    # (exact structure already validated by the f32 run above).
    out_bf = decoder_block_forward(x, skip, params, d_tile=4)
    out_bf = jax.block_until_ready(out_bf)
    errbf = float(jnp.max(jnp.abs(out_bf - ref)))
    assert jnp.allclose(out_bf, ref, atol=5e-2, rtol=5e-2), \
        f"bf16 max abs err {errbf}"

    print("KERNEL_OK")
</pallas_src>

<mosaic_0001>
module attributes {stable_mosaic.version = 11 : i64} {
  func.func @kernel(%arg0: i32, %arg1: i32, %arg2: memref<1x4x8x128xf32, #tpu.memory_space<vmem>>, %arg3: memref<1x1x8x128xf32, #tpu.memory_space<vmem>>, %arg4: memref<1x1x8x128xf32, #tpu.memory_space<vmem>>, %arg5: memref<1x4x8x128xf32, #tpu.memory_space<vmem>>, %arg6: memref<1x1x8x128xf32, #tpu.memory_space<vmem>>, %arg7: memref<1x1x8x128xf32, #tpu.memory_space<vmem>>, %arg8: memref<9x128x128xf32, #tpu.memory_space<vmem>>, %arg9: memref<9x128x128xf32, #tpu.memory_space<vmem>>, %arg10: memref<1x4x8x128xf32, #tpu.memory_space<vmem>>, %arg11: memref<1x1x2x128xf32, #tpu.memory_space<vmem>>, %arg12: memref<6x10x128xf32, #tpu.memory_space<vmem>>, %arg13: memref<6x10x128xf32, #tpu.memory_space<vmem>>) attributes {dimension_semantics = [#tpu.dimension_semantics<parallel>, #tpu.dimension_semantics<parallel>], iteration_bounds = array<i64: 2, 2>, scalar_prefetch = 0 : i64, scratch_operands = 2 : i64, tpu.core_type = #tpu.core_type<tc>, window_params = [{transform_indices = @transform_0, window_bounds = array<i64: 1, 4, 8, 128>}, {transform_indices = @transform_1, window_bounds = array<i64: 1, 1, 8, 128>}, {transform_indices = @transform_2, window_bounds = array<i64: 1, 1, 8, 128>}, {transform_indices = @transform_3, window_bounds = array<i64: 1, 4, 8, 128>}, {transform_indices = @transform_4, window_bounds = array<i64: 1, 1, 8, 128>}, {transform_indices = @transform_5, window_bounds = array<i64: 1, 1, 8, 128>}, {pipeline_mode = #tpu.pipeline_mode<synchronous>, transform_indices = @transform_6, window_bounds = array<i64: 9, 128, 128>}, {pipeline_mode = #tpu.pipeline_mode<synchronous>, transform_indices = @transform_7, window_bounds = array<i64: 9, 128, 128>}, {transform_indices = @transform_8, window_bounds = array<i64: 1, 4, 8, 128>}, {transform_indices = @transform_9, window_bounds = array<i64: 1, 1, 2, 128>}]} {
    %cst = arith.constant 0.000000e+00 : f32
    %0 = vector.broadcast %cst : f32 to vector<6x1x128xf32>
    %c0 = arith.constant 0 : index
    %c0_0 = arith.constant 0 : index
    %c0_1 = arith.constant 0 : index
    %1 = vector.load %arg12[%c0, %c0_0, %c0_1] : memref<6x10x128xf32, #tpu.memory_space<vmem>>, vector<6x1x128xf32>
    tpu.vector_store %arg12[%c0, %c0_0, %c0_1], %0 {strides = array<i32>} : memref<6x10x128xf32, #tpu.memory_space<vmem>>, vector<6x1x128xf32>,
    %cst_2 = arith.constant 0.000000e+00 : f32
    %2 = vector.broadcast %cst_2 : f32 to vector<6x1x128xf32>
    %c0_3 = arith.constant 0 : index
    %c9 = arith.constant 9 : index
    %c0_4 = arith.constant 0 : index
    %3 = vector.load %arg12[%c0_3, %c9, %c0_4] : memref<6x10x128xf32, #tpu.memory_space<vmem>>, vector<6x1x128xf32>
    tpu.vector_store %arg12[%c0_3, %c9, %c0_4], %2 {strides = array<i32>} : memref<6x10x128xf32, #tpu.memory_space<vmem>>, vector<6x1x128xf32>,
    %c0_5 = arith.constant 0 : index
    %c0_6 = arith.constant 0 : index
    %c0_7 = arith.constant 0 : index
    %c0_8 = arith.constant 0 : index
    %4 = vector.load %arg2[%c0_5, %c0_6, %c0_7, %c0_8] : memref<1x4x8x128xf32, #tpu.memory_space<vmem>>, vector<1x4x8x128xf32>
    %5 = vector.shape_cast %4 : vector<1x4x8x128xf32> to vector<4x8x128xf32>
    %c1 = arith.constant 1 : index
    %c1_9 = arith.constant 1 : index
    %c0_10 = arith.constant 0 : index
    %6 = vector.load %arg12[%c1, %c1_9, %c0_10] : memref<6x10x128xf32, #tpu.memory_space<vmem>>, vector<4x8x128xf32>
    tpu.vector_store %arg12[%c1, %c1_9, %c0_10], %5 {strides = array<i32>} : memref<6x10x128xf32, #tpu.memory_space<vmem>>, vector<4x8x128xf32>,
    %c0_i32 = arith.constant 0 : i32
    %7 = arith.cmpi sgt, %arg1, %c0_i32 : i32
    %8 = arith.extui %7 : i1 to i32
    %c0_i32_11 = arith.constant 0 : i32
    %9 = arith.cmpi ne, %8, %c0_i32_11 : i32
    scf.if %9 {
      %c0_170 = arith.constant 0 : index
      %c0_171 = arith.constant 0 : index
      %c0_172 = arith.constant 0 : index
      %c0_173 = arith.constant 0 : index
      %157 = vector.load %arg3[%c0_170, %c0_171, %c0_172, %c0_173] : memref<1x1x8x128xf32, #tpu.memory_space<vmem>>, vector<1x1x8x128xf32>
      %158 = vector.shape_cast %157 : vector<1x1x8x128xf32> to vector<1x8x128xf32>
      %c0_174 = arith.constant 0 : index
      %c1_175 = arith.constant 1 : index
      %c0_176 = arith.constant 0 : index
      %159 = vector.load %arg12[%c0_174, %c1_175, %c0_176] : memref<6x10x128xf32, #tpu.memory_space<vmem>>, vector<1x8x128xf32>
      tpu.vector_store %arg12[%c0_174, %c1_175, %c0_176], %158 {strides = array<i32>} : memref<6x10x128xf32, #tpu.memory_space<vmem>>, vector<1x8x128xf32>,
    } else {
    }
    %c0_i32_12 = arith.constant 0 : i32
    %10 = arith.cmpi eq, %arg1, %c0_i32_12 : i32
    %11 = arith.extui %10 : i1 to i32
    %c0_i32_13 = arith.constant 0 : i32
    %12 = arith.cmpi ne, %11, %c0_i32_13 : i32
    scf.if %12 {
      %cst_170 = arith.constant 0.000000e+00 : f32
      %157 = vector.broadcast %cst_170 : f32 to vector<1x8x128xf32>
      %c0_171 = arith.constant 0 : index
      %c1_172 = arith.constant 1 : index
      %c0_173 = arith.constant 0 : index
      %158 = vector.load %arg12[%c0_171, %c1_172, %c0_173] : memref<6x10x128xf32, #tpu.memory_space<vmem>>, vector<1x8x128xf32>
      tpu.vector_store %arg12[%c0_171, %c1_172, %c0_173], %157 {strides = array<i32>} : memref<6x10x128xf32, #tpu.memory_space<vmem>>, vector<1x8x128xf32>,
    } else {
    }
    %c1_i32 = arith.constant 1 : i32
    %13 = arith.cmpi slt, %arg1, %c1_i32 : i32
    %14 = arith.extui %13 : i1 to i32
    %c0_i32_14 = arith.constant 0 : i32
    %15 = arith.cmpi ne, %14, %c0_i32_14 : i32
    scf.if %15 {
      %c0_170 = arith.constant 0 : index
      %c0_171 = arith.constant 0 : index
      %c0_172 = arith.constant 0 : index
      %c0_173 = arith.constant 0 : index
      %157 = vector.load %arg4[%c0_170, %c0_171, %c0_172, %c0_173] : memref<1x1x8x128xf32, #tpu.memory_space<vmem>>, vector<1x1x8x128xf32>
      %158 = vector.shape_cast %157 : vector<1x1x8x128xf32> to vector<1x8x128xf32>
      %c5_174 = arith.constant 5 : index
      %c1_175 = arith.constant 1 : index
      %c0_176 = arith.constant 0 : index
      %159 = vector.load %arg12[%c5_174, %c1_175, %c0_176] : memref<6x10x128xf32, #tpu.memory_space<vmem>>, vector<1x8x128xf32>
      tpu.vector_store %arg12[%c5_174, %c1_175, %c0_176], %158 {strides = array<i32>} : memref<6x10x128xf32, #tpu.memory_space<vmem>>, vector<1x8x128xf32>,
    } else {
    }
    %c1_i32_15 = arith.constant 1 : i32
    %16 = arith.cmpi eq, %arg1, %c1_i32_15 : i32
    %17 = arith.extui %16 : i1 to i32
    %c0_i32_16 = arith.constant 0 : i32
    %18 = arith.cmpi ne, %17, %c0_i32_16 : i32
    scf.if %18 {
      %cst_170 = arith.constant 0.000000e+00 : f32
      %157 = vector.broadcast %cst_170 : f32 to vector<1x8x128xf32>
      %c5_171 = arith.constant 5 : index
      %c1_172 = arith.constant 1 : index
      %c0_173 = arith.constant 0 : index
      %158 = vector.load %arg12[%c5_171, %c1_172, %c0_173] : memref<6x10x128xf32, #tpu.memory_space<vmem>>, vector<1x8x128xf32>
      tpu.vector_store %arg12[%c5_171, %c1_172, %c0_173], %157 {strides = array<i32>} : memref<6x10x128xf32, #tpu.memory_space<vmem>>, vector<1x8x128xf32>,
    } else {
    }
    %cst_17 = arith.constant 0.000000e+00 : f32
    %19 = vector.broadcast %cst_17 : f32 to vector<6x1x128xf32>
    %c0_18 = arith.constant 0 : index
    %c0_19 = arith.constant 0 : index
    %c0_20 = arith.constant 0 : index
    %20 = vector.load %arg13[%c0_18, %c0_19, %c0_20] : memref<6x10x128xf32, #tpu.memory_space<vmem>>, vector<6x1x128xf32>
    tpu.vector_store %arg13[%c0_18, %c0_19, %c0_20], %19 {strides = array<i32>} : memref<6x10x128xf32, #tpu.memory_space<vmem>>, vector<6x1x128xf32>,
    %cst_21 = arith.constant 0.000000e+00 : f32
    %21 = vector.broadcast %cst_21 : f32 to vector<6x1x128xf32>
    %c0_22 = arith.constant 0 : index
    %c9_23 = arith.constant 9 : index
    %c0_24 = arith.constant 0 : index
    %22 = vector.load %arg13[%c0_22, %c9_23, %c0_24] : memref<6x10x128xf32, #tpu.memory_space<vmem>>, vector<6x1x128xf32>
    tpu.vector_store %arg13[%c0_22, %c9_23, %c0_24], %21 {strides = array<i32>} : memref<6x10x128xf32, #tpu.memory_space<vmem>>, vector<6x1x128xf32>,
    %c0_25 = arith.constant 0 : index
    %c0_26 = arith.constant 0 : index
    %c0_27 = arith.constant 0 : index
    %c0_28 = arith.constant 0 : index
    %23 = vector.load %arg5[%c0_25, %c0_26, %c0_27, %c0_28] : memref<1x4x8x128xf32, #tpu.memory_space<vmem>>, vector<1x4x8x128xf32>
    %24 = vector.shape_cast %23 : vector<1x4x8x128xf32> to vector<4x8x128xf32>
    %c1_29 = arith.constant 1 : index
    %c1_30 = arith.constant 1 : index
    %c0_31 = arith.constant 0 : index
    %25 = vector.load %arg13[%c1_29, %c1_30, %c0_31] : memref<6x10x128xf32, #tpu.memory_space<vmem>>, vector<4x8x128xf32>
    tpu.vector_store %arg13[%c1_29, %c1_30, %c0_31], %24 {strides = array<i32>} : memref<6x10x128xf32, #tpu.memory_space<vmem>>, vector<4x8x128xf32>,
    %c0_i32_32 = arith.constant 0 : i32
    %26 = arith.cmpi sgt, %arg1, %c0_i32_32 : i32
    %27 = arith.extui %26 : i1 to i32
    %c0_i32_33 = arith.constant 0 : i32
    %28 = arith.cmpi ne, %27, %c0_i32_33 : i32
    scf.if %28 {
      %c0_170 = arith.constant 0 : index
      %c0_171 = arith.constant 0 : index
      %c0_172 = arith.constant 0 : index
      %c0_173 = arith.constant 0 : index
      %157 = vector.load %arg6[%c0_170, %c0_171, %c0_172, %c0_173] : memref<1x1x8x128xf32, #tpu.memory_space<vmem>>, vector<1x1x8x128xf32>
      %158 = vector.shape_cast %157 : vector<1x1x8x128xf32> to vector<1x8x128xf32>
      %c0_174 = arith.constant 0 : index
      %c1_175 = arith.constant 1 : index
      %c0_176 = arith.constant 0 : index
      %159 = vector.load %arg13[%c0_174, %c1_175, %c0_176] : memref<6x10x128xf32, #tpu.memory_space<vmem>>, vector<1x8x128xf32>
      tpu.vector_store %arg13[%c0_174, %c1_175, %c0_176], %158 {strides = array<i32>} : memref<6x10x128xf32, #tpu.memory_space<vmem>>, vector<1x8x128xf32>,
    } else {
    }
    %c0_i32_34 = arith.constant 0 : i32
    %29 = arith.cmpi eq, %arg1, %c0_i32_34 : i32
    %30 = arith.extui %29 : i1 to i32
    %c0_i32_35 = arith.constant 0 : i32
    %31 = arith.cmpi ne, %30, %c0_i32_35 : i32
    scf.if %31 {
      %cst_170 = arith.constant 0.000000e+00 : f32
      %157 = vector.broadcast %cst_170 : f32 to vector<1x8x128xf32>
      %c0_171 = arith.constant 0 : index
      %c1_172 = arith.constant 1 : index
      %c0_173 = arith.constant 0 : index
      %158 = vector.load %arg13[%c0_171, %c1_172, %c0_173] : memref<6x10x128xf32, #tpu.memory_space<vmem>>, vector<1x8x128xf32>
      tpu.vector_store %arg13[%c0_171, %c1_172, %c0_173], %157 {strides = array<i32>} : memref<6x10x128xf32, #tpu.memory_space<vmem>>, vector<1x8x128xf32>,
    } else {
    }
    %c1_i32_36 = arith.constant 1 : i32
    %32 = arith.cmpi slt, %arg1, %c1_i32_36 : i32
    %33 = arith.extui %32 : i1 to i32
    %c0_i32_37 = arith.constant 0 : i32
    %34 = arith.cmpi ne, %33, %c0_i32_37 : i32
    scf.if %34 {
      %c0_170 = arith.constant 0 : index
      %c0_171 = arith.constant 0 : index
      %c0_172 = arith.constant 0 : index
      %c0_173 = arith.constant 0 : index
      %157 = vector.load %arg7[%c0_170, %c0_171, %c0_172, %c0_173] : memref<1x1x8x128xf32, #tpu.memory_space<vmem>>, vector<1x1x8x128xf32>
      %158 = vector.shape_cast %157 : vector<1x1x8x128xf32> to vector<1x8x128xf32>
      %c5_174 = arith.constant 5 : index
      %c1_175 = arith.constant 1 : index
      %c0_176 = arith.constant 0 : index
      %159 = vector.load %arg13[%c5_174, %c1_175, %c0_176] : memref<6x10x128xf32, #tpu.memory_space<vmem>>, vector<1x8x128xf32>
      tpu.vector_store %arg13[%c5_174, %c1_175, %c0_176], %158 {strides = array<i32>} : memref<6x10x128xf32, #tpu.memory_space<vmem>>, vector<1x8x128xf32>,
    } else {
    }
    %c1_i32_38 = arith.constant 1 : i32
    %35 = arith.cmpi eq, %arg1, %c1_i32_38 : i32
    %36 = arith.extui %35 : i1 to i32
    %c0_i32_39 = arith.constant 0 : i32
    %37 = arith.cmpi ne, %36, %c0_i32_39 : i32
    scf.if %37 {
      %cst_170 = arith.constant 0.000000e+00 : f32
      %157 = vector.broadcast %cst_170 : f32 to vector<1x8x128xf32>
      %c5_171 = arith.constant 5 : index
      %c1_172 = arith.constant 1 : index
      %c0_173 = arith.constant 0 : index
      %158 = vector.load %arg13[%c5_171, %c1_172, %c0_173] : memref<6x10x128xf32, #tpu.memory_space<vmem>>, vector<1x8x128xf32>
      tpu.vector_store %arg13[%c5_171, %c1_172, %c0_173], %157 {strides = array<i32>} : memref<6x10x128xf32, #tpu.memory_space<vmem>>, vector<1x8x128xf32>,
    } else {
    }
    %cst_40 = arith.constant 0.000000e+00 : f32
    %38 = vector.broadcast %cst_40 : f32 to vector<32x128xf32>
    %c0_41 = arith.constant 0 : index
    %c0_42 = arith.constant 0 : index
    %c0_43 = arith.constant 0 : index
    %39 = vector.load %arg12[%c0_41, %c0_42, %c0_43] : memref<6x10x128xf32, #tpu.memory_space<vmem>>, vector<4x8x128xf32>
    %40 = vector.shape_cast %39 : vector<4x8x128xf32> to vector<32x128xf32>
    %c0_44 = arith.constant 0 : index
    %c0_45 = arith.constant 0 : index
    %c0_46 = arith.constant 0 : index
    %41 = vector.load %arg8[%c0_44, %c0_45, %c0_46] : memref<9x128x128xf32, #tpu.memory_space<vmem>>, vector<1x128x128xf32>
    %42 = vector.shape_cast %41 : vector<1x128x128xf32> to vector<128x128xf32>
    %cst_47 = arith.constant dense<0.000000e+00> : vector<32x128xf32>
    %43 = tpu.matmul %40, %42, %cst_47 {dimension_numbers = #tpu.dot_dimension_numbers<[1], [0], [0], [1], [0, 0, 1, 1], [], []>} : vector<32x128xf32>, vector<128x128xf32>, vector<32x128xf32> -> vector<32x128xf32>
    %44 = arith.addf %38, %43 : vector<32x128xf32>
    %c0_48 = arith.constant 0 : index
    %c1_49 = arith.constant 1 : index
    %c0_50 = arith.constant 0 : index
    %45 = vector.load %arg12[%c0_48, %c1_49, %c0_50] : memref<6x10x128xf32, #tpu.memory_space<vmem>>, vector<4x8x128xf32>
    %46 = vector.shape_cast %45 : vector<4x8x128xf32> to vector<32x128xf32>
    %c1_51 = arith.constant 1 : index
    %c0_52 = arith.constant 0 : index
    %c0_53 = arith.constant 0 : index
    %47 = vector.load %arg8[%c1_51, %c0_52, %c0_53] : memref<9x128x128xf32, #tpu.memory_space<vmem>>, vector<1x128x128xf32>
    %48 = vector.shape_cast %47 : vector<1x128x128xf32> to vector<128x128xf32>
    %cst_54 = arith.constant dense<0.000000e+00> : vector<32x128xf32>
    %49 = tpu.matmul %46, %48, %cst_54 {dimension_numbers = #tpu.dot_dimension_numbers<[1], [0], [0], [1], [0, 0, 1, 1], [], []>} : vector<32x128xf32>, vector<128x128xf32>, vector<32x128xf32> -> vector<32x128xf32>
    %50 = arith.addf %44, %49 : vector<32x128xf32>
    %c0_55 = arith.constant 0 : index
    %c2 = arith.constant 2 : index
    %c0_56 = arith.constant 0 : index
    %51 = vector.load %arg12[%c0_55, %c2, %c0_56] : memref<6x10x128xf32, #tpu.memory_space<vmem>>, vector<4x8x128xf32>
    %52 = vector.shape_cast %51 : vector<4x8x128xf32> to vector<32x128xf32>
    %c2_57 = arith.constant 2 : index
    %c0_58 = arith.constant 0 : index
    %c0_59 = arith.constant 0 : index
    %53 = vector.load %arg8[%c2_57, %c0_58, %c0_59] : memref<9x128x128xf32, #tpu.memory_space<vmem>>, vector<1x128x128xf32>
    %54 = vector.shape_cast %53 : vector<1x128x128xf32> to vector<128x128xf32>
    %cst_60 = arith.constant dense<0.000000e+00> : vector<32x128xf32>
    %55 = tpu.matmul %52, %54, %cst_60 {dimension_numbers = #tpu.dot_dimension_numbers<[1], [0], [0], [1], [0, 0, 1, 1], [], []>} : vector<32x128xf32>, vector<128x128xf32>, vector<32x128xf32> -> vector<32x128xf32>
    %56 = arith.addf %50, %55 : vector<32x128xf32>
    %c1_61 = arith.constant 1 : index
    %c0_62 = arith.constant 0 : index
    %c0_63 = arith.constant 0 : index
    %57 = vector.load %arg12[%c1_61, %c0_62, %c0_63] : memref<6x10x128xf32, #tpu.memory_space<vmem>>, vector<4x8x128xf32>
    %58 = vector.shape_cast %57 : vector<4x8x128xf32> to vector<32x128xf32>
    %c3 = arith.constant 3 : index
    %c0_64 = arith.constant 0 : index
    %c0_65 = arith.constant 0 : index
    %59 = vector.load %arg8[%c3, %c0_64, %c0_65] : memref<9x128x128xf32, #tpu.memory_space<vmem>>, vector<1x128x128xf32>
    %60 = vector.shape_cast %59 : vector<1x128x128xf32> to vector<128x128xf32>
    %cst_66 = arith.constant dense<0.000000e+00> : vector<32x128xf32>
    %61 = tpu.matmul %58, %60, %cst_66 {dimension_numbers = #tpu.dot_dimension_numbers<[1], [0], [0], [1], [0, 0, 1, 1], [], []>} : vector<32x128xf32>, vector<128x128xf32>, vector<32x128xf32> -> vector<32x128xf32>
    %62 = arith.addf %56, %61 : vector<32x128xf32>
    %c1_67 = arith.constant 1 : index
    %c1_68 = arith.constant 1 : index
    %c0_69 = arith.constant 0 : index
    %63 = vector.load %arg12[%c1_67, %c1_68, %c0_69] : memref<6x10x128xf32, #tpu.memory_space<vmem>>, vector<4x8x128xf32>
    %64 = vector.shape_cast %63 : vector<4x8x128xf32> to vector<32x128xf32>
    %c4 = arith.constant 4 : index
    %c0_70 = arith.constant 0 : index
    %c0_71 = arith.constant 0 : index
    %65 = vector.load %arg8[%c4, %c0_70, %c0_71] : memref<9x128x128xf32, #tpu.memory_space<vmem>>, vector<1x128x128xf32>
    %66 = vector.shape_cast %65 : vector<1x128x128xf32> to vector<128x128xf32>
    %cst_72 = arith.constant dense<0.000000e+00> : vector<32x128xf32>
    %67 = tpu.matmul %64, %66, %cst_72 {dimension_numbers = #tpu.dot_dimension_numbers<[1], [0], [0], [1], [0, 0, 1, 1], [], []>} : vector<32x128xf32>, vector<128x128xf32>, vector<32x128xf32> -> vector<32x128xf32>
    %68 = arith.addf %62, %67 : vector<32x128xf32>
    %c1_73 = arith.constant 1 : index
    %c2_74 = arith.constant 2 : index
    %c0_75 = arith.constant 0 : index
    %69 = vector.load %arg12[%c1_73, %c2_74, %c0_75] : memref<6x10x128xf32, #tpu.memory_space<vmem>>, vector<4x8x128xf32>
    %70 = vector.shape_cast %69 : vector<4x8x128xf32> to vector<32x128xf32>
    %c5 = arith.constant 5 : index
    %c0_76 = arith.constant 0 : index
    %c0_77 = arith.constant 0 : index
    %71 = vector.load %arg8[%c5, %c0_76, %c0_77] : memref<9x128x128xf32, #tpu.memory_space<vmem>>, vector<1x128x128xf32>
    %72 = vector.shape_cast %71 : vector<1x128x128xf32> to vector<128x128xf32>
    %cst_78 = arith.constant dense<0.000000e+00> : vector<32x128xf32>
    %73 = tpu.matmul %70, %72, %cst_78 {dimension_numbers = #tpu.dot_dimension_numbers<[1], [0], [0], [1], [0, 0, 1, 1], [], []>} : vector<32x128xf32>, vector<128x128xf32>, vector<32x128xf32> -> vector<32x128xf32>
    %74 = arith.addf %68, %73 : vector<32x128xf32>
    %c2_79 = arith.constant 2 : index
    %c0_80 = arith.constant 0 : index
    %c0_81 = arith.constant 0 : index
    %75 = vector.load %arg12[%c2_79, %c0_80, %c0_81] : memref<6x10x128xf32, #tpu.memory_space<vmem>>, vector<4x8x128xf32>
    %76 = vector.shape_cast %75 : vector<4x8x128xf32> to vector<32x128xf32>
    %c6 = arith.constant 6 : index
    %c0_82 = arith.constant 0 : index
    %c0_83 = arith.constant 0 : index
    %77 = vector.load %arg8[%c6, %c0_82, %c0_83] : memref<9x128x128xf32, #tpu.memory_space<vmem>>, vector<1x128x128xf32>
    %78 = vector.shape_cast %77 : vector<1x128x128xf32> to vector<128x128xf32>
    %cst_84 = arith.constant dense<0.000000e+00> : vector<32x128xf32>
    %79 = tpu.matmul %76, %78, %cst_84 {dimension_numbers = #tpu.dot_dimension_numbers<[1], [0], [0], [1], [0, 0, 1, 1], [], []>} : vector<32x128xf32>, vector<128x128xf32>, vector<32x128xf32> -> vector<32x128xf32>
    %80 = arith.addf %74, %79 : vector<32x128xf32>
    %c2_85 = arith.constant 2 : index
    %c1_86 = arith.constant 1 : index
    %c0_87 = arith.constant 0 : index
    %81 = vector.load %arg12[%c2_85, %c1_86, %c0_87] : memref<6x10x128xf32, #tpu.memory_space<vmem>>, vector<4x8x128xf32>
    %82 = vector.shape_cast %81 : vector<4x8x128xf32> to vector<32x128xf32>
    %c7 = arith.constant 7 : index
    %c0_88 = arith.constant 0 : index
    %c0_89 = arith.constant 0 : index
    %83 = vector.load %arg8[%c7, %c0_88, %c0_89] : memref<9x128x128xf32, #tpu.memory_space<vmem>>, vector<1x128x128xf32>
    %84 = vector.shape_cast %83 : vector<1x128x128xf32> to vector<128x128xf32>
    %cst_90 = arith.constant dense<0.000000e+00> : vector<32x128xf32>
    %85 = tpu.matmul %82, %84, %cst_90 {dimension_numbers = #tpu.dot_dimension_numbers<[1], [0], [0], [1], [0, 0, 1, 1], [], []>} : vector<32x128xf32>, vector<128x128xf32>, vector<32x128xf32> -> vector<32x128xf32>
    %86 = arith.addf %80, %85 : vector<32x128xf32>
    %c2_91 = arith.constant 2 : index
    %c2_92 = arith.constant 2 : index
    %c0_93 = arith.constant 0 : index
    %87 = vector.load %arg12[%c2_91, %c2_92, %c0_93] : memref<6x10x128xf32, #tpu.memory_space<vmem>>, vector<4x8x128xf32>
    %88 = vector.shape_cast %87 : vector<4x8x128xf32> to vector<32x128xf32>
    %c8 = arith.constant 8 : index
    %c0_94 = arith.constant 0 : index
    %c0_95 = arith.constant 0 : index
    %89 = vector.load %arg8[%c8, %c0_94, %c0_95] : memref<9x128x128xf32, #tpu.memory_space<vmem>>, vector<1x128x128xf32>
    %90 = vector.shape_cast %89 : vector<1x128x128xf32> to vector<128x128xf32>
    %cst_96 = arith.constant dense<0.000000e+00> : vector<32x128xf32>
    %91 = tpu.matmul %88, %90, %cst_96 {dimension_numbers = #tpu.dot_dimension_numbers<[1], [0], [0], [1], [0, 0, 1, 1], [], []>} : vector<32x128xf32>, vector<128x128xf32>, vector<32x128xf32> -> vector<32x128xf32>
    %92 = arith.addf %86, %91 : vector<32x128xf32>
    %c0_97 = arith.constant 0 : index
    %c0_98 = arith.constant 0 : index
    %c0_99 = arith.constant 0 : index
    %93 = vector.load %arg13[%c0_97, %c0_98, %c0_99] : memref<6x10x128xf32, #tpu.memory_space<vmem>>, vector<4x8x128xf32>
    %94 = vector.shape_cast %93 : vector<4x8x128xf32> to vector<32x128xf32>
    %c0_100 = arith.constant 0 : index
    %c0_101 = arith.constant 0 : index
    %c0_102 = arith.constant 0 : index
    %95 = vector.load %arg9[%c0_100, %c0_101, %c0_102] : memref<9x128x128xf32, #tpu.memory_space<vmem>>, vector<1x128x128xf32>
    %96 = vector.shape_cast %95 : vector<1x128x128xf32> to vector<128x128xf32>
    %cst_103 = arith.constant dense<0.000000e+00> : vector<32x128xf32>
    %97 = tpu.matmul %94, %96, %cst_103 {dimension_numbers = #tpu.dot_dimension_numbers<[1], [0], [0], [1], [0, 0, 1, 1], [], []>} : vector<32x128xf32>, vector<128x128xf32>, vector<32x128xf32> -> vector<32x128xf32>
    %98 = arith.addf %92, %97 : vector<32x128xf32>
    %c0_104 = arith.constant 0 : index
    %c1_105 = arith.constant 1 : index
    %c0_106 = arith.constant 0 : index
    %99 = vector.load %arg13[%c0_104, %c1_105, %c0_106] : memref<6x10x128xf32, #tpu.memory_space<vmem>>, vector<4x8x128xf32>
    %100 = vector.shape_cast %99 : vector<4x8x128xf32> to vector<32x128xf32>
    %c1_107 = arith.constant 1 : index
    %c0_108 = arith.constant 0 : index
    %c0_109 = arith.constant 0 : index
    %101 = vector.load %arg9[%c1_107, %c0_108, %c0_109] : memref<9x128x128xf32, #tpu.memory_space<vmem>>, vector<1x128x128xf32>
    %102 = vector.shape_cast %101 : vector<1x128x128xf32> to vector<128x128xf32>
    %cst_110 = arith.constant dense<0.000000e+00> : vector<32x128xf32>
    %103 = tpu.matmul %100, %102, %cst_110 {dimension_numbers = #tpu.dot_dimension_numbers<[1], [0], [0], [1], [0, 0, 1, 1], [], []>} : vector<32x128xf32>, vector<128x128xf32>, vector<32x128xf32> -> vector<32x128xf32>
    %104 = arith.addf %98, %103 : vector<32x128xf32>
    %c0_111 = arith.constant 0 : index
    %c2_112 = arith.constant 2 : index
    %c0_113 = arith.constant 0 : index
    %105 = vector.load %arg13[%c0_111, %c2_112, %c0_113] : memref<6x10x128xf32, #tpu.memory_space<vmem>>, vector<4x8x128xf32>
    %106 = vector.shape_cast %105 : vector<4x8x128xf32> to vector<32x128xf32>
    %c2_114 = arith.constant 2 : index
    %c0_115 = arith.constant 0 : index
    %c0_116 = arith.constant 0 : index
    %107 = vector.load %arg9[%c2_114, %c0_115, %c0_116] : memref<9x128x128xf32, #tpu.memory_space<vmem>>, vector<1x128x128xf32>
    %108 = vector.shape_cast %107 : vector<1x128x128xf32> to vector<128x128xf32>
    %cst_117 = arith.constant dense<0.000000e+00> : vector<32x128xf32>
    %109 = tpu.matmul %106, %108, %cst_117 {dimension_numbers = #tpu.dot_dimension_numbers<[1], [0], [0], [1], [0, 0, 1, 1], [], []>} : vector<32x128xf32>, vector<128x128xf32>, vector<32x128xf32> -> vector<32x128xf32>
    %110 = arith.addf %104, %109 : vector<32x128xf32>
    %c1_118 = arith.constant 1 : index
    %c0_119 = arith.constant 0 : index
    %c0_120 = arith.constant 0 : index
    %111 = vector.load %arg13[%c1_118, %c0_119, %c0_120] : memref<6x10x128xf32, #tpu.memory_space<vmem>>, vector<4x8x128xf32>
    %112 = vector.shape_cast %111 : vector<4x8x128xf32> to vector<32x128xf32>
    %c3_121 = arith.constant 3 : index
    %c0_122 = arith.constant 0 : index
    %c0_123 = arith.constant 0 : index
    %113 = vector.load %arg9[%c3_121, %c0_122, %c0_123] : memref<9x128x128xf32, #tpu.memory_space<vmem>>, vector<1x128x128xf32>
    %114 = vector.shape_cast %113 : vector<1x128x128xf32> to vector<128x128xf32>
    %cst_124 = arith.constant dense<0.000000e+00> : vector<32x128xf32>
    %115 = tpu.matmul %112, %114, %cst_124 {dimension_numbers = #tpu.dot_dimension_numbers<[1], [0], [0], [1], [0, 0, 1, 1], [], []>} : vector<32x128xf32>, vector<128x128xf32>, vector<32x128xf32> -> vector<32x128xf32>
    %116 = arith.addf %110, %115 : vector<32x128xf32>
    %c1_125 = arith.constant 1 : index
    %c1_126 = arith.constant 1 : index
    %c0_127 = arith.constant 0 : index
    %117 = vector.load %arg13[%c1_125, %c1_126, %c0_127] : memref<6x10x128xf32, #tpu.memory_space<vmem>>, vector<4x8x128xf32>
    %118 = vector.shape_cast %117 : vector<4x8x128xf32> to vector<32x128xf32>
    %c4_128 = arith.constant 4 : index
    %c0_129 = arith.constant 0 : index
    %c0_130 = arith.constant 0 : index
    %119 = vector.load %arg9[%c4_128, %c0_129, %c0_130] : memref<9x128x128xf32, #tpu.memory_space<vmem>>, vector<1x128x128xf32>
    %120 = vector.shape_cast %119 : vector<1x128x128xf32> to vector<128x128xf32>
    %cst_131 = arith.constant dense<0.000000e+00> : vector<32x128xf32>
    %121 = tpu.matmul %118, %120, %cst_131 {dimension_numbers = #tpu.dot_dimension_numbers<[1], [0], [0], [1], [0, 0, 1, 1], [], []>} : vector<32x128xf32>, vector<128x128xf32>, vector<32x128xf32> -> vector<32x128xf32>
    %122 = arith.addf %116, %121 : vector<32x128xf32>
    %c1_132 = arith.constant 1 : index
    %c2_133 = arith.constant 2 : index
    %c0_134 = arith.constant 0 : index
    %123 = vector.load %arg13[%c1_132, %c2_133, %c0_134] : memref<6x10x128xf32, #tpu.memory_space<vmem>>, vector<4x8x128xf32>
    %124 = vector.shape_cast %123 : vector<4x8x128xf32> to vector<32x128xf32>
    %c5_135 = arith.constant 5 : index
    %c0_136 = arith.constant 0 : index
    %c0_137 = arith.constant 0 : index
    %125 = vector.load %arg9[%c5_135, %c0_136, %c0_137] : memref<9x128x128xf32, #tpu.memory_space<vmem>>, vector<1x128x128xf32>
    %126 = vector.shape_cast %125 : vector<1x128x128xf32> to vector<128x128xf32>
    %cst_138 = arith.constant dense<0.000000e+00> : vector<32x128xf32>
    %127 = tpu.matmul %124, %126, %cst_138 {dimension_numbers = #tpu.dot_dimension_numbers<[1], [0], [0], [1], [0, 0, 1, 1], [], []>} : vector<32x128xf32>, vector<128x128xf32>, vector<32x128xf32> -> vector<32x128xf32>
    %128 = arith.addf %122, %127 : vector<32x128xf32>
    %c2_139 = arith.constant 2 : index
    %c0_140 = arith.constant 0 : index
    %c0_141 = arith.constant 0 : index
    %129 = vector.load %arg13[%c2_139, %c0_140, %c0_141] : memref<6x10x128xf32, #tpu.memory_space<vmem>>, vector<4x8x128xf32>
    %130 = vector.shape_cast %129 : vector<4x8x128xf32> to vector<32x128xf32>
    %c6_142 = arith.constant 6 : index
    %c0_143 = arith.constant 0 : index
    %c0_144 = arith.constant 0 : index
    %131 = vector.load %arg9[%c6_142, %c0_143, %c0_144] : memref<9x128x128xf32, #tpu.memory_space<vmem>>, vector<1x128x128xf32>
    %132 = vector.shape_cast %131 : vector<1x128x128xf32> to vector<128x128xf32>
    %cst_145 = arith.constant dense<0.000000e+00> : vector<32x128xf32>
    %133 = tpu.matmul %130, %132, %cst_145 {dimension_numbers = #tpu.dot_dimension_numbers<[1], [0], [0], [1], [0, 0, 1, 1], [], []>} : vector<32x128xf32>, vector<128x128xf32>, vector<32x128xf32> -> vector<32x128xf32>
    %134 = arith.addf %128, %133 : vector<32x128xf32>
    %c2_146 = arith.constant 2 : index
    %c1_147 = arith.constant 1 : index
    %c0_148 = arith.constant 0 : index
    %135 = vector.load %arg13[%c2_146, %c1_147, %c0_148] : memref<6x10x128xf32, #tpu.memory_space<vmem>>, vector<4x8x128xf32>
    %136 = vector.shape_cast %135 : vector<4x8x128xf32> to vector<32x128xf32>
    %c7_149 = arith.constant 7 : index
    %c0_150 = arith.constant 0 : index
    %c0_151 = arith.constant 0 : index
    %137 = vector.load %arg9[%c7_149, %c0_150, %c0_151] : memref<9x128x128xf32, #tpu.memory_space<vmem>>, vector<1x128x128xf32>
    %138 = vector.shape_cast %137 : vector<1x128x128xf32> to vector<128x128xf32>
    %cst_152 = arith.constant dense<0.000000e+00> : vector<32x128xf32>
    %139 = tpu.matmul %136, %138, %cst_152 {dimension_numbers = #tpu.dot_dimension_numbers<[1], [0], [0], [1], [0, 0, 1, 1], [], []>} : vector<32x128xf32>, vector<128x128xf32>, vector<32x128xf32> -> vector<32x128xf32>
    %140 = arith.addf %134, %139 : vector<32x128xf32>
    %c2_153 = arith.constant 2 : index
    %c2_154 = arith.constant 2 : index
    %c0_155 = arith.constant 0 : index
    %141 = vector.load %arg13[%c2_153, %c2_154, %c0_155] : memref<6x10x128xf32, #tpu.memory_space<vmem>>, vector<4x8x128xf32>
    %142 = vector.shape_cast %141 : vector<4x8x128xf32> to vector<32x128xf32>
    %c8_156 = arith.constant 8 : index
    %c0_157 = arith.constant 0 : index
    %c0_158 = arith.constant 0 : index
    %143 = vector.load %arg9[%c8_156, %c0_157, %c0_158] : memref<9x128x128xf32, #tpu.memory_space<vmem>>, vector<1x128x128xf32>
    %144 = vector.shape_cast %143 : vector<1x128x128xf32> to vector<128x128xf32>
    %cst_159 = arith.constant dense<0.000000e+00> : vector<32x128xf32>
    %145 = tpu.matmul %142, %144, %cst_159 {dimension_numbers = #tpu.dot_dimension_numbers<[1], [0], [0], [1], [0, 0, 1, 1], [], []>} : vector<32x128xf32>, vector<128x128xf32>, vector<32x128xf32> -> vector<32x128xf32>
    %146 = arith.addf %140, %145 : vector<32x128xf32>
    %147 = vector.shape_cast %146 : vector<32x128xf32> to vector<1x4x8x128xf32>
    %c0_160 = arith.constant 0 : index
    %c0_161 = arith.constant 0 : index
    %c0_162 = arith.constant 0 : index
    %c0_163 = arith.constant 0 : index
    %148 = vector.load %arg10[%c0_160, %c0_161, %c0_162, %c0_163] : memref<1x4x8x128xf32, #tpu.memory_space<vmem>>, vector<1x4x8x128xf32>
    tpu.vector_store %arg10[%c0_160, %c0_161, %c0_162, %c0_163], %147 {strides = array<i32>} : memref<1x4x8x128xf32, #tpu.memory_space<vmem>>, vector<1x4x8x128xf32>,
    %cst_164 = arith.constant dense<0.000000e+00> : vector<128xf32>
    %149 = vector.multi_reduction <add>, %146, %cst_164 [0] : vector<32x128xf32> to vector<128xf32>
    %150 = vector.shape_cast %149 : vector<128xf32> to vector<1x128xf32>
    %151 = arith.mulf %146, %146 : vector<32x128xf32>
    %cst_165 = arith.constant dense<0.000000e+00> : vector<128xf32>
    %152 = vector.multi_reduction <add>, %151, %cst_165 [0] : vector<32x128xf32> to vector<128xf32>
    %153 = vector.shape_cast %152 : vector<128xf32> to vector<1x128xf32>
    %154 = tpu.concatenate %150, %153 in 0 : vector<1x128xf32>, vector<1x128xf32> -> vector<2x128xf32>
    %155 = vector.shape_cast %154 : vector<2x128xf32> to vector<1x1x2x128xf32>
    %c0_166 = arith.constant 0 : index
    %c0_167 = arith.constant 0 : index
    %c0_168 = arith.constant 0 : index
    %c0_169 = arith.constant 0 : index
    %156 = vector.load %arg11[%c0_166, %c0_167, %c0_168, %c0_169] : memref<1x1x2x128xf32, #tpu.memory_space<vmem>>, vector<1x1x2x128xf32>
    tpu.vector_store %arg11[%c0_166, %c0_167, %c0_168, %c0_169], %155 {strides = array<i32>} : memref<1x1x2x128xf32, #tpu.memory_space<vmem>>, vector<1x1x2x128xf32>,
    return
  }
  func.func @transform_0(%arg0: i32, %arg1: i32) -> (i32, i32, i32, i32) {
    %c0_i32 = arith.constant 0 : i32
    %c0_i32_0 = arith.constant 0 : i32
    %c0_i32_1 = arith.constant 0 : i32
    return %arg0, %arg1, %c0_i32, %c0_i32_0 : i32, i32, i32, i32
  }
  func.func @transform_1(%arg0: i32, %arg1: i32) -> (i32, i32, i32, i32) {
    %c4_i32 = arith.constant 4 : i32
    %0 = arith.muli %arg1, %c4_i32 : i32
    %c1_i32 = arith.constant 1 : i32
    %1 = arith.subi %0, %c1_i32 : i32
    %c0_i32 = arith.constant 0 : i32
    %2 = arith.maxsi %1, %c0_i32 : i32
    %c0_i32_0 = arith.constant 0 : i32
    %c0_i32_1 = arith.constant 0 : i32
    %c0_i32_2 = arith.constant 0 : i32
    return %arg0, %2, %c0_i32_0, %c0_i32_1 : i32, i32, i32, i32
  }
  func.func @transform_2(%arg0: i32, %arg1: i32) -> (i32, i32, i32, i32) {
    %c4_i32 = arith.constant 4 : i32
    %0 = arith.muli %arg1, %c4_i32 : i32
    %c4_i32_0 = arith.constant 4 : i32
    %1 = arith.addi %0, %c4_i32_0 : i32
    %c7_i32 = arith.constant 7 : i32
    %2 = arith.minsi %1, %c7_i32 : i32
    %c0_i32 = arith.constant 0 : i32
    %c0_i32_1 = arith.constant 0 : i32
    %c0_i32_2 = arith.constant 0 : i32
    return %arg0, %2, %c0_i32, %c0_i32_1 : i32, i32, i32, i32
  }
  func.func @transform_3(%arg0: i32, %arg1: i32) -> (i32, i32, i32, i32) {
    %c0_i32 = arith.constant 0 : i32
    %c0_i32_0 = arith.constant 0 : i32
    %c0_i32_1 = arith.constant 0 : i32
    return %arg0, %arg1, %c0_i32, %c0_i32_0 : i32, i32, i32, i32
  }
  func.func @transform_4(%arg0: i32, %arg1: i32) -> (i32, i32, i32, i32) {
    %c4_i32 = arith.constant 4 : i32
    %0 = arith.muli %arg1, %c4_i32 : i32
    %c1_i32 = arith.constant 1 : i32
    %1 = arith.subi %0, %c1_i32 : i32
    %c0_i32 = arith.constant 0 : i32
    %2 = arith.maxsi %1, %c0_i32 : i32
    %c0_i32_0 = arith.constant 0 : i32
    %c0_i32_1 = arith.constant 0 : i32
    %c0_i32_2 = arith.constant 0 : i32
    return %arg0, %2, %c0_i32_0, %c0_i32_1 : i32, i32, i32, i32
  }
  func.func @transform_5(%arg0: i32, %arg1: i32) -> (i32, i32, i32, i32) {
    %c4_i32 = arith.constant 4 : i32
    %0 = arith.muli %arg1, %c4_i32 : i32
    %c4_i32_0 = arith.constant 4 : i32
    %1 = arith.addi %0, %c4_i32_0 : i32
    %c7_i32 = arith.constant 7 : i32
    %2 = arith.minsi %1, %c7_i32 : i32
    %c0_i32 = arith.constant 0 : i32
    %c0_i32_1 = arith.constant 0 : i32
    %c0_i32_2 = arith.constant 0 : i32
    return %arg0, %2, %c0_i32, %c0_i32_1 : i32, i32, i32, i32
  }
  func.func @transform_6(%arg0: i32, %arg1: i32) -> (i32, i32, i32) {
    %c0_i32 = arith.constant 0 : i32
    %c0_i32_0 = arith.constant 0 : i32
    %c0_i32_1 = arith.constant 0 : i32
    %c0_i32_2 = arith.constant 0 : i32
    return %c0_i32, %c0_i32_0, %c0_i32_1 : i32, i32, i32
  }
  func.func @transform_7(%arg0: i32, %arg1: i32) -> (i32, i32, i32) {
    %c0_i32 = arith.constant 0 : i32
    %c0_i32_0 = arith.constant 0 : i32
    %c0_i32_1 = arith.constant 0 : i32
    %c0_i32_2 = arith.constant 0 : i32
    return %c0_i32, %c0_i32_0, %c0_i32_1 : i32, i32, i32
  }
  func.func @transform_8(%arg0: i32, %arg1: i32) -> (i32, i32, i32, i32) {
    %c0_i32 = arith.constant 0 : i32
    %c0_i32_0 = arith.constant 0 : i32
    %c0_i32_1 = arith.constant 0 : i32
    return %arg0, %arg1, %c0_i32, %c0_i32_0 : i32, i32, i32, i32
  }
  func.func @transform_9(%arg0: i32, %arg1: i32) -> (i32, i32, i32, i32) {
    %c0_i32 = arith.constant 0 : i32
    %c0_i32_0 = arith.constant 0 : i32
    %c0_i32_1 = arith.constant 0 : i32
    return %arg0, %arg1, %c0_i32, %c0_i32_0 : i32, i32, i32, i32
  }
}

</mosaic_0001>

<llo_original>
// kernel: tpu_custom_call.1
$region0: #{tpu_custom_call.1}
  #allocation0 [shape = 'u32[]', space=smem, size = 0x4, offset = 0x4, fixed_abs, tag = 'smem constant byte address 0x4 - core index']
  #allocation1 [shape = 'u32[144,128]{1,0:T(1,128)}', space=vmem, size = 0x12000, scoped, tag = 'internal scratch']
  #allocation2 [shape = 'f32[6,10,128]{2,1,0:T(8,128)}', space=vmem, size = 0xc000, scoped, tag = 'scratch operand']
  #allocation3 [shape = 'f32[6,10,128]{2,1,0:T(8,128)}', space=vmem, size = 0xc000, scoped, tag = 'scratch operand']
  %s0 = inlined_call_operand.hbm [shape: f32[2,8,8,128], index: 0, kind: input, shape index: {}]
  %s1 = inlined_call_operand.hbm [shape: f32[2,8,8,128], index: 1, kind: input, shape index: {}]
  %s2 = inlined_call_operand.hbm [shape: f32[2,8,8,128], index: 2, kind: input, shape index: {}]
  %s3 = inlined_call_operand.hbm [shape: f32[2,8,8,128], index: 3, kind: input, shape index: {}]
  %s4 = inlined_call_operand.hbm [shape: f32[2,8,8,128], index: 4, kind: input, shape index: {}]
  %s5 = inlined_call_operand.hbm [shape: f32[2,8,8,128], index: 5, kind: input, shape index: {}]
  %s6 = inlined_call_operand.hbm [shape: f32[9,128,128], index: 6, kind: input, shape index: {}]
  %s7 = inlined_call_operand.hbm [shape: f32[9,128,128], index: 7, kind: input, shape index: {}]
  %s8 = inlined_call_operand.hbm [shape: f32[2,8,8,128], index: 8, kind: output, shape index: {0}]
  %s9 = inlined_call_operand.hbm [shape: f32[2,2,2,128], index: 9, kind: output, shape index: {1}]
  %10 = xla_tuple %s8, %s9
  %s11 = sld [smem:[#allocation0]]
  $region137: #{tpu_custom_call.1} parent=0
    _
  %s13 = ssub.s32 1, %s11
  %s14 = scalar_select 0, %s13, %s11
  $region1: #{tpu_custom_call.1} parent=0
    #allocation4 [shape = 'u8[32768]{0}', space=vmem, size = 0x8000, scoped, tag = 'input window, operand 0']
    #allocation5 [shape = 's32[2]{0}', space=sflag, size = 0x8, scoped, tag = 'scoped memory for tpu_custom_call.1']
    #allocation6 [shape = 's32[2]{0}', space=sflag, size = 0x8, scoped, tag = 'scoped memory for tpu_custom_call.1']
    #allocation7 [shape = 'u8[8192]{0}', space=vmem, size = 0x2000, scoped, tag = 'input window, operand 1']
    #allocation8 [shape = 's32[2]{0}', space=sflag, size = 0x8, scoped, tag = 'scoped memory for tpu_custom_call.1']
    #allocation9 [shape = 'u8[8192]{0}', space=vmem, size = 0x2000, scoped, tag = 'input window, operand 2']
    #allocation10 [shape = 'u8[32768]{0}', space=vmem, size = 0x8000, scoped, tag = 'input window, operand 3']
    #allocation11 [shape = 's32[2]{0}', space=sflag, size = 0x8, scoped, tag = 'scoped memory for tpu_custom_call.1']
    #allocation12 [shape = 'u8[8192]{0}', space=vmem, size = 0x2000, scoped, tag = 'input window, operand 4']
    #allocation13 [shape = 'u8[8192]{0}', space=vmem, size = 0x2000, scoped, tag = 'input window, operand 5']
    #allocation14 [shape = 's32[2]{0}', space=sflag, size = 0x8, scoped, tag = 'scoped memory for tpu_custom_call.1']
    #allocation15 [shape = 'u8[589824]{0}', space=vmem, size = 0x90000, scoped, tag = 'input window, operand 6, single buffered']
    #allocation16 [shape = 'u8[589824]{0}', space=vmem, size = 0x90000, scoped, tag = 'input window, operand 7, single buffered']
    #allocation17 [shape = 's32[1]{0}', space=sflag, size = 0x4, scoped, tag = 'scoped memory for tpu_custom_call.1']
    #allocation18 [shape = 'u8[32768]{0}', space=vmem, size = 0x8000, scoped, tag = 'output window, operand 0']
    #allocation19 [shape = 'u8[2048]{0}', space=vmem, size = 0x800, scoped, tag = 'output window, operand 1']
    #allocation20 [shape = 's32[2]{0}', space=sflag, size = 0x8, scoped, tag = 'scoped memory for tpu_custom_call.1']
    %15 = vsyncpa [#allocation5], 0
    %s16 = scalar_lea.sflag [#allocation5], 1
    %17 = vsyncpa %s16, 0
    %18 = vsyncpa [#allocation8], 0
    %s19 = scalar_lea.sflag [#allocation8], 1
    %20 = vsyncpa %s19, 0
    %21 = vsyncpa [#allocation11], 0
    %s22 = scalar_lea.sflag [#allocation11], 1
    %23 = vsyncpa %s22, 0
    %24 = vsyncpa [#allocation14], 0
    %s25 = scalar_lea.sflag [#allocation14], 1
    %26 = vsyncpa %s25, 0
    %27 = vsyncpa [#allocation17], 0
    %28 = vsyncpa [#allocation6], 0
    %s29 = scalar_lea.sflag [#allocation6], 1
    %30 = vsyncpa %s29, 0
    %31 = vsyncpa [#allocation20], 0
    %s32 = scalar_lea.sflag [#allocation20], 1
    %33 = vsyncpa %s32, 0
    loop: start=0, step=1, limit=6
    $region2: #{tpu_custom_call.1} parent=1 // loop_pre_header
      _
    $region3: #{tpu_custom_call.1} parent=1 // loop_header
      %s35 = sphi 0, %s39
      %p36 = scmp.ge.s32.totalorder %s35, 6
      %s42 = sphi 0, %s54
      %s43 = sphi 0, %s50
      %s44 = sphi 0, %s42
      %s45 = sphi 0, %s43
      %s46 = sphi 0, %s44
      %s47 = sphi 0, %s45
      %s59 = sphi 0, %s61
      %s62 = sphi 0, %s59
      %s63 = sphi 0, %s62
      %s79 = sphi 0, %s63
      %s95 = sphi 0, %s97
      %s98 = sphi 0, %s95
      %s99 = sphi 0, %s98
      %s115 = sphi 0, %s99
      %s131 = sphi 0, %s133
      %s134 = sphi 0, %s131
      %s135 = sphi 0, %s134
      %s151 = sphi 0, %s135
      %s159 = sphi 0, %s161
      %s162 = sphi 0, %s159
      %s163 = sphi 0, %s162
      %s179 = sphi 0, %s163
      %s195 = sphi 0, %s197
      %s198 = sphi 0, %s195
      %s199 = sphi 0, %s198
      %s215 = sphi 0, %s199
      %s231 = sphi 0, %s233
      %s234 = sphi 0, %s231
      %s235 = sphi 0, %s234
      %s251 = sphi 0, %s235
      %s255 = sphi 0, %s255
      %s257 = sphi 0, %s255
      %s258 = sphi 0, %s257
      %s272 = sphi 0, %s258
      %s276 = sphi 0, %s276
      %s278 = sphi 0, %s276
      %s279 = sphi 0, %s278
      %s293 = sphi 0, %s279
      %s301 = sphi 0, %s303
      %s304 = sphi 0, %s301
      %s305 = sphi 0, %s304
      %s321 = sphi 0, %s305
      %s329 = sphi 0, %s331
      %s332 = sphi 0, %s329
      %s333 = sphi 0, %s332
      %s349 = sphi 0, %s333
    $region4: #{tpu_custom_call.1} parent=1 // loop_header_branch
      %38 = sbr.rel (%p36) target = $region8
    $region5: #{tpu_custom_call.1} parent=1 // loop_body
      %s40 = ssub.s32 %s35, 1
      %s41 = ssub.s32 %s35, 2
      %s48 = sadd.s32 1, %s43
      %p49 = scmp.ge.s32.totalorder %s48, 2
      %s50 = scalar_select %p49, 0, %s48
      %s51 = sadd.s32 1, %s42
      %s52 = scalar_select %p49, %s51, %s42
      %p53 = scmp.ge.s32.totalorder %s52, 2
      %s54 = scalar_select %p53, 0, %s52
      %s55 = ssub.s32 %s42, %s54
      %s56 = ssub.s32 %s43, %s50
      %s57 = sor.u32 %s55, %s56
      %p58 = scmp.eq.s32.totalorder %s57, 0
      %s60 = sadd.s32 %s59, 1
      %s61 = scalar_select %p58, %s59, %s60
      %p64 = pneg %p58
      %p65 = scmp.eq.s32.totalorder %s35, 3
      %p66 = por %p64, %p65
      %p67 = scmp.ne.s32.totalorder %s59, %s62
      %p68 = scmp.eq.s32.totalorder %s35, 0
      %p69 = por %p67, %p68
      %p70 = scmp.ne.s32.totalorder %s59, %s62
      %p71 = scmp.eq.s32.totalorder %s40, 3
      %p72 = por %p70, %p71
      %p73 = scmp.ne.s32.totalorder %s62, %s63
      %p74 = scmp.eq.s32.totalorder %s40, 0
      %p75 = por %p73, %p74
      %p76 = scmp.ne.s32.totalorder %s62, %s63
      %p77 = scmp.eq.s32.totalorder %s41, 3
      %p78 = por %p76, %p77
      %p80 = scmp.ne.s32.totalorder %s63, %s79
      %p81 = scmp.eq.s32.totalorder %s41, 0
      %p82 = por %p80, %p81
      %s83 = smul.u32 %s43, 4
      %s84 = ssub.s32 %s83, 1
      %p85 = scmp.gt.s32.totalorder %s84, 0
      %s86 = scalar_select %p85, %s84, 0
      %s87 = smul.u32 %s50, 4
      %s88 = ssub.s32 %s87, 1
      %p89 = scmp.gt.s32.totalorder %s88, 0
      %s90 = scalar_select %p89, %s88, 0
      %s91 = ssub.s32 %s42, %s54
      %s92 = ssub.s32 %s86, %s90
      %s93 = sor.u32 %s91, %s92
      %p94 = scmp.eq.s32.totalorder %s93, 0
      %s96 = sadd.s32 %s95, 1
      %s97 = scalar_select %p94, %s95, %s96
      %p100 = pneg %p94
      %p101 = scmp.eq.s32.totalorder %s35, 3
      %p102 = por %p100, %p101
      %p103 = scmp.ne.s32.totalorder %s95, %s98
      %p104 = scmp.eq.s32.totalorder %s35, 0
      %p105 = por %p103, %p104
      %p106 = scmp.ne.s32.totalorder %s95, %s98
      %p107 = scmp.eq.s32.totalorder %s40, 3
      %p108 = por %p106, %p107
      %p109 = scmp.ne.s32.totalorder %s98, %s99
      %p110 = scmp.eq.s32.totalorder %s40, 0
      %p111 = por %p109, %p110
      %p112 = scmp.ne.s32.totalorder %s98, %s99
      %p113 = scmp.eq.s32.totalorder %s41, 3
      %p114 = por %p112, %p113
      %p116 = scmp.ne.s32.totalorder %s99, %s115
      %p117 = scmp.eq.s32.totalorder %s41, 0
      %p118 = por %p116, %p117
      %s119 = smul.u32 %s43, 4
      %s120 = sadd.s32 %s119, 4
      %p121 = scmp.lt.s32.totalorder %s120, 7
      %s122 = scalar_select %p121, %s120, 7
      %s123 = smul.u32 %s50, 4
      %s124 = sadd.s32 %s123, 4
      %p125 = scmp.lt.s32.totalorder %s124, 7
      %s126 = scalar_select %p125, %s124, 7
      %s127 = ssub.s32 %s42, %s54
      %s128 = ssub.s32 %s122, %s126
      %s129 = sor.u32 %s127, %s128
      %p130 = scmp.eq.s32.totalorder %s129, 0
      %s132 = sadd.s32 %s131, 1
      %s133 = scalar_select %p130, %s131, %s132
      %p136 = pneg %p130
      %p137 = scmp.eq.s32.totalorder %s35, 3
      %p138 = por %p136, %p137
      %p139 = scmp.ne.s32.totalorder %s131, %s134
      %p140 = scmp.eq.s32.totalorder %s35, 0
      %p141 = por %p139, %p140
      %p142 = scmp.ne.s32.totalorder %s131, %s134
      %p143 = scmp.eq.s32.totalorder %s40, 3
      %p144 = por %p142, %p143
      %p145 = scmp.ne.s32.totalorder %s134, %s135
      %p146 = scmp.eq.s32.totalorder %s40, 0
      %p147 = por %p145, %p146
      %p148 = scmp.ne.s32.totalorder %s134, %s135
      %p149 = scmp.eq.s32.totalorder %s41, 3
      %p150 = por %p148, %p149
      %p152 = scmp.ne.s32.totalorder %s135, %s151
      %p153 = scmp.eq.s32.totalorder %s41, 0
      %p154 = por %p152, %p153
      %s155 = ssub.s32 %s42, %s54
      %s156 = ssub.s32 %s43, %s50
      %s157 = sor.u32 %s155, %s156
      %p158 = scmp.eq.s32.totalorder %s157, 0
      %s160 = sadd.s32 %s159, 1
      %s161 = scalar_select %p158, %s159, %s160
      %p164 = pneg %p158
      %p165 = scmp.eq.s32.totalorder %s35, 3
      %p166 = por %p164, %p165
      %p167 = scmp.ne.s32.totalorder %s159, %s162
      %p168 = scmp.eq.s32.totalorder %s35, 0
      %p169 = por %p167, %p168
      %p170 = scmp.ne.s32.totalorder %s159, %s162
      %p171 = scmp.eq.s32.totalorder %s40, 3
      %p172 = por %p170, %p171
      %p173 = scmp.ne.s32.totalorder %s162, %s163
      %p174 = scmp.eq.s32.totalorder %s40, 0
      %p175 = por %p173, %p174
      %p176 = scmp.ne.s32.totalorder %s162, %s163
      %p177 = scmp.eq.s32.totalorder %s41, 3
      %p178 = por %p176, %p177
      %p180 = scmp.ne.s32.totalorder %s163, %s179
      %p181 = scmp.eq.s32.totalorder %s41, 0
      %p182 = por %p180, %p181
      %s183 = smul.u32 %s43, 4
      %s184 = ssub.s32 %s183, 1
      %p185 = scmp.gt.s32.totalorder %s184, 0
      %s186 = scalar_select %p185, %s184, 0
      %s187 = smul.u32 %s50, 4
      %s188 = ssub.s32 %s187, 1
      %p189 = scmp.gt.s32.totalorder %s188, 0
      %s190 = scalar_select %p189, %s188, 0
      %s191 = ssub.s32 %s42, %s54
      %s192 = ssub.s32 %s186, %s190
      %s193 = sor.u32 %s191, %s192
      %p194 = scmp.eq.s32.totalorder %s193, 0
      %s196 = sadd.s32 %s195, 1
      %s197 = scalar_select %p194, %s195, %s196
      %p200 = pneg %p194
      %p201 = scmp.eq.s32.totalorder %s35, 3
      %p202 = por %p200, %p201
      %p203 = scmp.ne.s32.totalorder %s195, %s198
      %p204 = scmp.eq.s32.totalorder %s35, 0
      %p205 = por %p203, %p204
      %p206 = scmp.ne.s32.totalorder %s195, %s198
      %p207 = scmp.eq.s32.totalorder %s40, 3
      %p208 = por %p206, %p207
      %p209 = scmp.ne.s32.totalorder %s198, %s199
      %p210 = scmp.eq.s32.totalorder %s40, 0
      %p211 = por %p209, %p210
      %p212 = scmp.ne.s32.totalorder %s198, %s199
      %p213 = scmp.eq.s32.totalorder %s41, 3
      %p214 = por %p212, %p213
      %p216 = scmp.ne.s32.totalorder %s199, %s215
      %p217 = scmp.eq.s32.totalorder %s41, 0
      %p218 = por %p216, %p217
      %s219 = smul.u32 %s43, 4
      %s220 = sadd.s32 %s219, 4
      %p221 = scmp.lt.s32.totalorder %s220, 7
      %s222 = scalar_select %p221, %s220, 7
      %s223 = smul.u32 %s50, 4
      %s224 = sadd.s32 %s223, 4
      %p225 = scmp.lt.s32.totalorder %s224, 7
      %s226 = scalar_select %p225, %s224, 7
      %s227 = ssub.s32 %s42, %s54
      %s228 = ssub.s32 %s222, %s226
      %s229 = sor.u32 %s227, %s228
      %p230 = scmp.eq.s32.totalorder %s229, 0
      %s232 = sadd.s32 %s231, 1
      %s233 = scalar_select %p230, %s231, %s232
      %p236 = pneg %p230
      %p237 = scmp.eq.s32.totalorder %s35, 3
      %p238 = por %p236, %p237
      %p239 = scmp.ne.s32.totalorder %s231, %s234
      %p240 = scmp.eq.s32.totalorder %s35, 0
      %p241 = por %p239, %p240
      %p242 = scmp.ne.s32.totalorder %s231, %s234
      %p243 = scmp.eq.s32.totalorder %s40, 3
      %p244 = por %p242, %p243
      %p245 = scmp.ne.s32.totalorder %s234, %s235
      %p246 = scmp.eq.s32.totalorder %s40, 0
      %p247 = por %p245, %p246
      %p248 = scmp.ne.s32.totalorder %s234, %s235
      %p249 = scmp.eq.s32.totalorder %s41, 3
      %p250 = por %p248, %p249
      %p252 = scmp.ne.s32.totalorder %s235, %s251
      %p253 = scmp.eq.s32.totalorder %s41, 0
      %p254 = por %p252, %p253
      %s256 = sadd.s32 %s255, 1
      %p259 = scmp.eq.s32.totalorder %s35, 3
      %p260 = scmp.ne.s32.totalorder %s255, %s257
      %p261 = scmp.eq.s32.totalorder %s35, 0
      %p262 = por %p260, %p261
      %p263 = scmp.ne.s32.totalorder %s255, %s257
      %p264 = scmp.eq.s32.totalorder %s40, 3
      %p265 = por %p263, %p264
      %p266 = scmp.ne.s32.totalorder %s257, %s258
      %p267 = scmp.eq.s32.totalorder %s40, 0
      %p268 = por %p266, %p267
      %p269 = scmp.ne.s32.totalorder %s257, %s258
      %p270 = scmp.eq.s32.totalorder %s41, 3
      %p271 = por %p269, %p270
      %p273 = scmp.ne.s32.totalorder %s258, %s272
      %p274 = scmp.eq.s32.totalorder %s41, 0
      %p275 = por %p273, %p274
      %s277 = sadd.s32 %s276, 1
      %p280 = scmp.eq.s32.totalorder %s35, 3
      %p281 = scmp.ne.s32.totalorder %s276, %s278
      %p282 = scmp.eq.s32.totalorder %s35, 0
      %p283 = por %p281, %p282
      %p284 = scmp.ne.s32.totalorder %s276, %s278
      %p285 = scmp.eq.s32.totalorder %s40, 3
      %p286 = por %p284, %p285
      %p287 = scmp.ne.s32.totalorder %s278, %s279
      %p288 = scmp.eq.s32.totalorder %s40, 0
      %p289 = por %p287, %p288
      %p290 = scmp.ne.s32.totalorder %s278, %s279
      %p291 = scmp.eq.s32.totalorder %s41, 3
      %p292 = por %p290, %p291
      %p294 = scmp.ne.s32.totalorder %s279, %s293
      %p295 = scmp.eq.s32.totalorder %s41, 0
      %p296 = por %p294, %p295
      %s297 = ssub.s32 %s42, %s54
      %s298 = ssub.s32 %s43, %s50
      %s299 = sor.u32 %s297, %s298
      %p300 = scmp.eq.s32.totalorder %s299, 0
      %s302 = sadd.s32 %s301, 1
      %s303 = scalar_select %p300, %s301, %s302
      %p306 = pneg %p300
      %p307 = scmp.eq.s32.totalorder %s35, 3
      %p308 = por %p306, %p307
      %p309 = scmp.ne.s32.totalorder %s301, %s304
      %p310 = scmp.eq.s32.totalorder %s35, 0
      %p311 = por %p309, %p310
      %p312 = scmp.ne.s32.totalorder %s301, %s304
      %p313 = scmp.eq.s32.totalorder %s40, 3
      %p314 = por %p312, %p313
      %p315 = scmp.ne.s32.totalorder %s304, %s305
      %p316 = scmp.eq.s32.totalorder %s40, 0
      %p317 = por %p315, %p316
      %p318 = scmp.ne.s32.totalorder %s304, %s305
      %p319 = scmp.eq.s32.totalorder %s41, 3
      %p320 = por %p318, %p319
      %p322 = scmp.ne.s32.totalorder %s305, %s321
      %p323 = scmp.eq.s32.totalorder %s41, 0
      %p324 = por %p322, %p323
      %s325 = ssub.s32 %s42, %s54
      %s326 = ssub.s32 %s43, %s50
      %s327 = sor.u32 %s325, %s326
      %p328 = scmp.eq.s32.totalorder %s327, 0
      %s330 = sadd.s32 %s329, 1
      %s331 = scalar_select %p328, %s329, %s330
      %p334 = pneg %p328
      %p335 = scmp.eq.s32.totalorder %s35, 3
      %p336 = por %p334, %p335
      %p337 = scmp.ne.s32.totalorder %s329, %s332
      %p338 = scmp.eq.s32.totalorder %s35, 0
      %p339 = por %p337, %p338
      %p340 = scmp.ne.s32.totalorder %s329, %s332
      %p341 = scmp.eq.s32.totalorder %s40, 3
      %p342 = por %p340, %p341
      %p343 = scmp.ne.s32.totalorder %s332, %s333
      %p344 = scmp.eq.s32.totalorder %s40, 0
      %p345 = por %p343, %p344
      %p346 = scmp.ne.s32.totalorder %s332, %s333
      %p347 = scmp.eq.s32.totalorder %s41, 3
      %p348 = por %p346, %p347
      %p350 = scmp.ne.s32.totalorder %s333, %s349
      %p351 = scmp.eq.s32.totalorder %s41, 0
      %p352 = por %p350, %p351
      %p353 = scmp.le.s32.totalorder 1, %s35
      %p354 = scmp.lt.s32.totalorder %s35, 5
      %p355 = pnand %p353, %p354
      %p356 = pneg %p355
      // Predicated region
      $region9: #{tpu_custom_call.1} parent=5 // pred_check
        _
      $region10: #{tpu_custom_call.1} parent=5 // pred_check_branch
        %358 = sbr.rel (%p355) target = $region12
      $region11: #{tpu_custom_call.1} parent=5 // pred_region
        %s359 = ssub.s32 %s35, 1
        // Predicated region
        $region13: #{tpu_custom_call.1} parent=11 // pred_check
          %p360 = pneg %p268
        $region14: #{tpu_custom_call.1} parent=11 // pred_check_branch
          %362 = sbr.rel (%p360) target = $region16
        $region15: #{tpu_custom_call.1} parent=11 // pred_region
          %s364 = ssub.s32 18432, 18432
          %365 = vsyncadd [#allocation14], %s364
          %s366 = sshll.u32 [#allocation15], 4
          %s367 = int_to_ptr.vmem [resolvable:$true] %s366
          %372 = dma.hbm_to_vmem [thread:$0]  %s6, 18432, %s367, [#allocation14], 128, 128, 8
        $region16: #{tpu_custom_call.1} parent=11 // pred_fallthru
          _
        // Predicated region
        $region17: #{tpu_custom_call.1} parent=11 // pred_check
          %p373 = pneg %p289
        $region18: #{tpu_custom_call.1} parent=11 // pred_check_branch
          %375 = sbr.rel (%p373) target = $region20
        $region19: #{tpu_custom_call.1} parent=11 // pred_region
          %s377 = ssub.s32 18432, 18432
          %378 = vsyncadd [#allocation17], %s377
          %s379 = sshll.u32 [#allocation16], 4
          %s380 = int_to_ptr.vmem [resolvable:$true] %s379
          %385 = dma.hbm_to_vmem [thread:$0]  %s7, 18432, %s380, [#allocation17], 128, 128, 8
        $region20: #{tpu_custom_call.1} parent=11 // pred_fallthru
          _
      $region12: #{tpu_custom_call.1} parent=5 // pred_fallthru
        _
      %p386 = scmp.lt.s32.totalorder %s35, 4
      // Predicated region
      $region21: #{tpu_custom_call.1} parent=5 // pred_check
        %p387 = pneg %p386
      $region22: #{tpu_custom_call.1} parent=5 // pred_check_branch
        %389 = sbr.rel (%p387) target = $region24
      $region23: #{tpu_custom_call.1} parent=5 // pred_region
        // Predicated region
        $region25: #{tpu_custom_call.1} parent=23 // pred_check
          %p390 = pneg %p69
        $region26: #{tpu_custom_call.1} parent=23 // pred_check_branch
          %392 = sbr.rel (%p390) target = $region28
        $region27: #{tpu_custom_call.1} parent=23 // pred_region
          %s393 = sand.u32 %s59, 1
          %s394 = scalar_lea.sflag [#allocation5], %s393
          %s395 = sand.u32 %s59, 1
          %s396 = smul.addr %s395, 32
          %s397 = scalar_lea.vmem [#allocation4], %s396
          %s398 = smul.u32 4, %s43
          %s400 = ssub.s32 512, 512
          %401 = vsyncadd %s394, %s400
          %s402 = smul.addr %s42, 8
          %s403 = sadd.s32 %s398, %s402
          %s404 = smul.addr %s403, 128
          %s405 = scalar_lea.hbm %s0, %s404
          %s406 = sshll.u32 %s397, 4
          %s407 = int_to_ptr.vmem [resolvable:$true] %s406
          %412 = dma.hbm_to_vmem [thread:$0]  %s405, 512, %s407, %s394, 128, 128, 8
        $region28: #{tpu_custom_call.1} parent=23 // pred_fallthru
          _
        // Predicated region
        $region29: #{tpu_custom_call.1} parent=23 // pred_check
          %p413 = pneg %p105
        $region30: #{tpu_custom_call.1} parent=23 // pred_check_branch
          %415 = sbr.rel (%p413) target = $region32
        $region31: #{tpu_custom_call.1} parent=23 // pred_region
          %s416 = sand.u32 %s35, 1
          %s417 = scalar_lea.sflag [#allocation8], %s416
          %s418 = sand.u32 %s95, 1
          %s419 = smul.addr %s418, 8
          %s420 = scalar_lea.vmem [#allocation7], %s419
          %s421 = smul.u32 %s43, 4
          %s422 = ssub.s32 %s421, 1
          %p423 = scmp.gt.s32.totalorder %s422, 0
          %s424 = scalar_select %p423, %s422, 0
          %s426 = ssub.s32 128, 128
          %427 = vsyncadd %s417, %s426
          %s428 = smul.addr %s42, 8
          %s429 = sadd.s32 %s424, %s428
          %s430 = smul.addr %s429, 128
          %s431 = scalar_lea.hbm %s1, %s430
          %s433 = sshll.u32 %s420, 4
          %s434 = int_to_ptr.vmem [resolvable:$true] %s433
          %436 = dma.hbm_to_vmem [thread:$0]  %s431, 128, %s434, %s417
        $region32: #{tpu_custom_call.1} parent=23 // pred_fallthru
          _
        // Predicated region
        $region33: #{tpu_custom_call.1} parent=23 // pred_check
          %p437 = pneg %p141
        $region34: #{tpu_custom_call.1} parent=23 // pred_check_branch
          %439 = sbr.rel (%p437) target = $region36
        $region35: #{tpu_custom_call.1} parent=23 // pred_region
          %s440 = sand.u32 %s35, 1
          %s441 = scalar_lea.sflag [#allocation8], %s440
          %s442 = sand.u32 %s131, 1
          %s443 = smul.addr %s442, 8
          %s444 = scalar_lea.vmem [#allocation9], %s443
          %s445 = smul.u32 %s43, 4
          %s446 = sadd.s32 %s445, 4
          %p447 = scmp.lt.s32.totalorder %s446, 7
          %s448 = scalar_select %p447, %s446, 7
          %s450 = ssub.s32 128, 128
          %451 = vsyncadd %s441, %s450
          %s452 = smul.addr %s42, 8
          %s453 = sadd.s32 %s448, %s452
          %s454 = smul.addr %s453, 128
          %s455 = scalar_lea.hbm %s2, %s454
          %s457 = sshll.u32 %s444, 4
          %s458 = int_to_ptr.vmem [resolvable:$true] %s457
          %460 = dma.hbm_to_vmem [thread:$0]  %s455, 128, %s458, %s441
        $region36: #{tpu_custom_call.1} parent=23 // pred_fallthru
          _
        // Predicated region
        $region37: #{tpu_custom_call.1} parent=23 // pred_check
          %p461 = pneg %p169
        $region38: #{tpu_custom_call.1} parent=23 // pred_check_branch
          %463 = sbr.rel (%p461) target = $region40
        $region39: #{tpu_custom_call.1} parent=23 // pred_region
          %s464 = sand.u32 %s35, 1
          %s465 = scalar_lea.sflag [#allocation11], %s464
          %s466 = sand.u32 %s159, 1
          %s467 = smul.addr %s466, 32
          %s468 = scalar_lea.vmem [#allocation10], %s467
          %s469 = smul.u32 4, %s43
          %s471 = ssub.s32 512, 512
          %472 = vsyncadd %s465, %s471
          %s473 = smul.addr %s42, 8
          %s474 = sadd.s32 %s469, %s473
          %s475 = smul.addr %s474, 128
          %s476 = scalar_lea.hbm %s3, %s475
          %s477 = sshll.u32 %s468, 4
          %s478 = int_to_ptr.vmem [resolvable:$true] %s477
          %483 = dma.hbm_to_vmem [thread:$0]  %s476, 512, %s478, %s465, 128, 128, 8
        $region40: #{tpu_custom_call.1} parent=23 // pred_fallthru
          _
        // Predicated region
        $region41: #{tpu_custom_call.1} parent=23 // pred_check
          %p484 = pneg %p205
        $region42: #{tpu_custom_call.1} parent=23 // pred_check_branch
          %486 = sbr.rel (%p484) target = $region44
        $region43: #{tpu_custom_call.1} parent=23 // pred_region
          %s487 = sand.u32 %s35, 1
          %s488 = scalar_lea.sflag [#allocation11], %s487
          %s489 = sand.u32 %s195, 1
          %s490 = smul.addr %s489, 8
          %s491 = scalar_lea.vmem [#allocation12], %s490
          %s492 = smul.u32 %s43, 4
          %s493 = ssub.s32 %s492, 1
          %p494 = scmp.gt.s32.totalorder %s493, 0
          %s495 = scalar_select %p494, %s493, 0
          %s497 = ssub.s32 128, 128
          %498 = vsyncadd %s488, %s497
          %s499 = smul.addr %s42, 8
          %s500 = sadd.s32 %s495, %s499
          %s501 = smul.addr %s500, 128
          %s502 = scalar_lea.hbm %s4, %s501
          %s504 = sshll.u32 %s491, 4
          %s505 = int_to_ptr.vmem [resolvable:$true] %s504
          %507 = dma.hbm_to_vmem [thread:$0]  %s502, 128, %s505, %s488
        $region44: #{tpu_custom_call.1} parent=23 // pred_fallthru
          _
        // Predicated region
        $region45: #{tpu_custom_call.1} parent=23 // pred_check
          %p508 = pneg %p241
        $region46: #{tpu_custom_call.1} parent=23 // pred_check_branch
          %510 = sbr.rel (%p508) target = $region48
        $region47: #{tpu_custom_call.1} parent=23 // pred_region
          %s511 = sand.u32 %s35, 1
          %s512 = scalar_lea.sflag [#allocation14], %s511
          %s513 = sand.u32 %s231, 1
          %s514 = smul.addr %s513, 8
          %s515 = scalar_lea.vmem [#allocation13], %s514
          %s516 = smul.u32 %s43, 4
          %s517 = sadd.s32 %s516, 4
          %p518 = scmp.lt.s32.totalorder %s517, 7
          %s519 = scalar_select %p518, %s517, 7
          %s521 = ssub.s32 128, 128
          %522 = vsyncadd %s512, %s521
          %s523 = smul.addr %s42, 8
          %s524 = sadd.s32 %s519, %s523
          %s525 = smul.addr %s524, 128
          %s526 = scalar_lea.hbm %s5, %s525
          %s528 = sshll.u32 %s515, 4
          %s529 = int_to_ptr.vmem [resolvable:$true] %s528
          %531 = dma.hbm_to_vmem [thread:$0]  %s526, 128, %s529, %s512
        $region48: #{tpu_custom_call.1} parent=23 // pred_fallthru
          _
      $region24: #{tpu_custom_call.1} parent=5 // pred_fallthru
        _
      %p532 = scmp.le.s32.totalorder 1, %s35
      %p533 = scmp.lt.s32.totalorder %s35, 5
      %p534 = pnand %p532, %p533
      %p535 = pneg %p534
      // Predicated region
      $region49: #{tpu_custom_call.1} parent=5 // pred_check
        _
      $region50: #{tpu_custom_call.1} parent=5 // pred_check_branch
        %537 = sbr.rel (%p534) target = $region52
      $region51: #{tpu_custom_call.1} parent=5 // pred_region
        %s538 = ssub.s32 %s35, 1
        %s539 = sand.u32 %s62, 1
        %s540 = scalar_lea.sflag [#allocation5], %s539
        %s541 = sand.u32 %s62, 1
        %s542 = smul.addr %s541, 32
        %s543 = scalar_lea.vmem [#allocation4], %s542
        // Predicated region
        $region53: #{tpu_custom_call.1} parent=51 // pred_check
          %p544 = pneg %p75
        $region54: #{tpu_custom_call.1} parent=51 // pred_check_branch
          %546 = sbr.rel (%p544) target = $region56
        $region55: #{tpu_custom_call.1} parent=51 // pred_region
          %547 = dma.done %s540, 512
        $region56: #{tpu_custom_call.1} parent=51 // pred_fallthru
          _
        %s548 = sand.u32 %s40, 1
        %s549 = scalar_lea.sflag [#allocation8], %s548
        %s550 = sand.u32 %s98, 1
        %s551 = smul.addr %s550, 8
        %s552 = scalar_lea.vmem [#allocation7], %s551
        // Predicated region
        $region57: #{tpu_custom_call.1} parent=51 // pred_check
          %p553 = pneg %p111
        $region58: #{tpu_custom_call.1} parent=51 // pred_check_branch
          %555 = sbr.rel (%p553) target = $region60
        $region59: #{tpu_custom_call.1} parent=51 // pred_region
          %556 = dma.done %s549, 128
        $region60: #{tpu_custom_call.1} parent=51 // pred_fallthru
          _
        %s557 = sand.u32 %s40, 1
        %s558 = scalar_lea.sflag [#allocation8], %s557
        %s559 = sand.u32 %s134, 1
        %s560 = smul.addr %s559, 8
        %s561 = scalar_lea.vmem [#allocation9], %s560
        // Predicated region
        $region61: #{tpu_custom_call.1} parent=51 // pred_check
          %p562 = pneg %p147
        $region62: #{tpu_custom_call.1} parent=51 // pred_check_branch
          %564 = sbr.rel (%p562) target = $region64
        $region63: #{tpu_custom_call.1} parent=51 // pred_region
          %565 = dma.done %s558, 128
        $region64: #{tpu_custom_call.1} parent=51 // pred_fallthru
          _
        %s566 = sand.u32 %s40, 1
        %s567 = scalar_lea.sflag [#allocation11], %s566
        %s568 = sand.u32 %s162, 1
        %s569 = smul.addr %s568, 32
        %s570 = scalar_lea.vmem [#allocation10], %s569
        // Predicated region
        $region65: #{tpu_custom_call.1} parent=51 // pred_check
          %p571 = pneg %p175
        $region66: #{tpu_custom_call.1} parent=51 // pred_check_branch
          %573 = sbr.rel (%p571) target = $region68
        $region67: #{tpu_custom_call.1} parent=51 // pred_region
          %574 = dma.done %s567, 512
        $region68: #{tpu_custom_call.1} parent=51 // pred_fallthru
          _
        %s575 = sand.u32 %s40, 1
        %s576 = scalar_lea.sflag [#allocation11], %s575
        %s577 = sand.u32 %s198, 1
        %s578 = smul.addr %s577, 8
        %s579 = scalar_lea.vmem [#allocation12], %s578
        // Predicated region
        $region69: #{tpu_custom_call.1} parent=51 // pred_check
          %p580 = pneg %p211
        $region70: #{tpu_custom_call.1} parent=51 // pred_check_branch
          %582 = sbr.rel (%p580) target = $region72
        $region71: #{tpu_custom_call.1} parent=51 // pred_region
          %583 = dma.done %s576, 128
        $region72: #{tpu_custom_call.1} parent=51 // pred_fallthru
          _
        %s584 = sand.u32 %s40, 1
        %s585 = scalar_lea.sflag [#allocation14], %s584
        %s586 = sand.u32 %s234, 1
        %s587 = smul.addr %s586, 8
        %s588 = scalar_lea.vmem [#allocation13], %s587
        // Predicated region
        $region73: #{tpu_custom_call.1} parent=51 // pred_check
          %p589 = pneg %p247
        $region74: #{tpu_custom_call.1} parent=51 // pred_check_branch
          %591 = sbr.rel (%p589) target = $region76
        $region75: #{tpu_custom_call.1} parent=51 // pred_region
          %592 = dma.done %s585, 128
        $region76: #{tpu_custom_call.1} parent=51 // pred_fallthru
          _
        // Predicated region
        $region77: #{tpu_custom_call.1} parent=51 // pred_check
          %p593 = pneg %p268
        $region78: #{tpu_custom_call.1} parent=51 // pred_check_branch
          %595 = sbr.rel (%p593) target = $region80
        $region79: #{tpu_custom_call.1} parent=51 // pred_region
          %596 = dma.done [#allocation14], 18432
        $region80: #{tpu_custom_call.1} parent=51 // pred_fallthru
          _
        // Predicated region
        $region81: #{tpu_custom_call.1} parent=51 // pred_check
          %p597 = pneg %p289
        $region82: #{tpu_custom_call.1} parent=51 // pred_check_branch
          %599 = sbr.rel (%p597) target = $region84
        $region83: #{tpu_custom_call.1} parent=51 // pred_region
          %600 = dma.done [#allocation17], 18432
        $region84: #{tpu_custom_call.1} parent=51 // pred_fallthru
          _
        %s601 = sand.u32 %s62, 1
        %s602 = scalar_lea.sflag [#allocation5], %s601
        %s603 = sand.u32 %s62, 1
        %s604 = smul.addr %s603, 32
        %s605 = scalar_lea.vmem [#allocation4], %s604
        %p606 = pneg %p75
        %p607 = pneg %p72
        %s608 = sand.u32 %s40, 1
        %s609 = scalar_lea.sflag [#allocation8], %s608
        %s610 = sand.u32 %s98, 1
        %s611 = smul.addr %s610, 8
        %s612 = scalar_lea.vmem [#allocation7], %s611
        %p613 = pneg %p111
        %p614 = pneg %p108
        %s615 = sand.u32 %s40, 1
        %s616 = scalar_lea.sflag [#allocation8], %s615
        %s617 = sand.u32 %s134, 1
        %s618 = smul.addr %s617, 8
        %s619 = scalar_lea.vmem [#allocation9], %s618
        %p620 = pneg %p147
        %p621 = pneg %p144
        %s622 = sand.u32 %s40, 1
        %s623 = scalar_lea.sflag [#allocation11], %s622
        %s624 = sand.u32 %s162, 1
        %s625 = smul.addr %s624, 32
        %s626 = scalar_lea.vmem [#allocation10], %s625
        %p627 = pneg %p175
        %p628 = pneg %p172
        %s629 = sand.u32 %s40, 1
        %s630 = scalar_lea.sflag [#allocation11], %s629
        %s631 = sand.u32 %s198, 1
        %s632 = smul.addr %s631, 8
        %s633 = scalar_lea.vmem [#allocation12], %s632
        %p634 = pneg %p211
        %p635 = pneg %p208
        %s636 = sand.u32 %s40, 1
        %s637 = scalar_lea.sflag [#allocation14], %s636
        %s638 = sand.u32 %s234, 1
        %s639 = smul.addr %s638, 8
        %s640 = scalar_lea.vmem [#allocation13], %s639
        %p641 = pneg %p247
        %p642 = pneg %p244
        %p643 = pneg %p268
        %p644 = pneg %p265
        %p645 = pneg %p289
        %p646 = pneg %p286
        %p647 = pneg %p317
        %p648 = pneg %p314
        %s649 = sand.u32 %s304, 1
        %s650 = scalar_lea.sflag [#allocation6], %s649
        %s651 = sand.u32 %s304, 1
        %s652 = smul.addr %s651, 32
        %s653 = scalar_lea.vmem [#allocation18], %s652
        %p654 = pneg %p345
        %p655 = pneg %p342
        %s656 = sand.u32 %s332, 1
        %s657 = scalar_lea.sflag [#allocation20], %s656
        %s658 = sand.u32 %s332, 1
        %s659 = smul.addr %s658, 2
        %s660 = scalar_lea.vmem [#allocation19], %s659
        %s661 = smul.u32 4, %s45
        %s662 = smul.u32 %s45, 4
        %s663 = ssub.s32 %s662, 1
        %p664 = scmp.gt.s32.totalorder %s663, 0
        %s665 = scalar_select %p664, %s663, 0
        %s666 = smul.u32 %s45, 4
        %s667 = sadd.s32 %s666, 4
        %p668 = scmp.lt.s32.totalorder %s667, 7
        %s669 = scalar_select %p668, %s667, 7
        %s670 = smul.u32 4, %s45
        %s671 = smul.u32 %s45, 4
        %s672 = ssub.s32 %s671, 1
        %p673 = scmp.gt.s32.totalorder %s672, 0
        %s674 = scalar_select %p673, %s672, 0
        %s675 = smul.u32 %s45, 4
        %s676 = sadd.s32 %s675, 4
        %p677 = scmp.lt.s32.totalorder %s676, 7
        %s678 = scalar_select %p677, %s676, 7
        %s679 = smul.u32 4, %s45
        %680 = vst [vmem:[#allocation2] sm:$0x1] 0.0
        %681 = vst [vmem:[#allocation2 + $0x10] sm:$0x1] 0.0
        %682 = vst [vmem:[#allocation2 + $0x20] sm:$0x1] 0.0
        %683 = vst [vmem:[#allocation2 + $0x30] sm:$0x1] 0.0
        %684 = vst [vmem:[#allocation2 + $0x40] sm:$0x1] 0.0
        %685 = vst [vmem:[#allocation2 + $0x50] sm:$0x1] 0.0
        %686 = vst [vmem:[#allocation2 + $0x9] sm:$0x1] 0.0
        %687 = vst [vmem:[#allocation2 + $0x19] sm:$0x1] 0.0
        %688 = vst [vmem:[#allocation2 + $0x29] sm:$0x1] 0.0
        %689 = vst [vmem:[#allocation2 + $0x39] sm:$0x1] 0.0
        %690 = vst [vmem:[#allocation2 + $0x49] sm:$0x1] 0.0
        %691 = vst [vmem:[#allocation2 + $0x59] sm:$0x1] 0.0
        %v692 = vld [vmem:[%s543] sm:$0xff]
        %v693 = vld [vmem:[%s543 + $0x8] sm:$0xff]
        %v694 = vld [vmem:[%s543 + $0x10] sm:$0xff]
        %v695 = vld [vmem:[%s543 + $0x18] sm:$0xff]
        %s696 = scalar_lea.vmem [#allocation2], 16
        %697 = vst [vmem:[%s696 + $0x1] sm:$0xff] %v692
        %698 = vst [vmem:[%s696 + $0x11] sm:$0xff] %v693
        %699 = vst [vmem:[%s696 + $0x21] sm:$0xff] %v694
        %700 = vst [vmem:[%s696 + $0x31] sm:$0xff] %v695
        %p701 = scmp.gt.s32.totalorder %s45, 0
        // Predicated region
        $region85: #{tpu_custom_call.1} parent=51 // pred_check
          %p702 = pneg %p701
        $region86: #{tpu_custom_call.1} parent=51 // pred_check_branch
          %704 = sbr.rel (%p702) target = $region88
        $region87: #{tpu_custom_call.1} parent=51 // pred_region
          %v705 = vld [vmem:[%s552] sm:$0xff]
          %706 = vst [vmem:[#allocation2 + $0x1] sm:$0xff] %v705
        $region88: #{tpu_custom_call.1} parent=51 // pred_fallthru
          _
        %p707 = scmp.eq.s32.totalorder %s45, 0
        // Predicated region
        $region89: #{tpu_custom_call.1} parent=51 // pred_check
          %p708 = pneg %p707
        $region90: #{tpu_custom_call.1} parent=51 // pred_check_branch
          %710 = sbr.rel (%p708) target = $region92
        $region91: #{tpu_custom_call.1} parent=51 // pred_region
          %711 = vst [vmem:[#allocation2 + $0x1] sm:$0xff] 0.0
        $region92: #{tpu_custom_call.1} parent=51 // pred_fallthru
          _
        %p712 = scmp.lt.s32.totalorder %s45, 1
        // Predicated region
        $region93: #{tpu_custom_call.1} parent=51 // pred_check
          %p713 = pneg %p712
        $region94: #{tpu_custom_call.1} parent=51 // pred_check_branch
          %715 = sbr.rel (%p713) target = $region96
        $region95: #{tpu_custom_call.1} parent=51 // pred_region
          %v716 = vld [vmem:[%s561] sm:$0xff]
          %s717 = scalar_lea.vmem [#allocation2], 80
          %718 = vst [vmem:[%s717 + $0x1] sm:$0xff] %v716
        $region96: #{tpu_custom_call.1} parent=51 // pred_fallthru
          _
        %p719 = scmp.eq.s32.totalorder %s45, 1
        // Predicated region
        $region97: #{tpu_custom_call.1} parent=51 // pred_check
          %p720 = pneg %p719
        $region98: #{tpu_custom_call.1} parent=51 // pred_check_branch
          %722 = sbr.rel (%p720) target = $region100
        $region99: #{tpu_custom_call.1} parent=51 // pred_region
          %s723 = scalar_lea.vmem [#allocation2], 80
          %724 = vst [vmem:[%s723 + $0x1] sm:$0xff] 0.0
        $region100: #{tpu_custom_call.1} parent=51 // pred_fallthru
          _
        %725 = vst [vmem:[#allocation3] sm:$0x1] 0.0
        %726 = vst [vmem:[#allocation3 + $0x10] sm:$0x1] 0.0
        %727 = vst [vmem:[#allocation3 + $0x20] sm:$0x1] 0.0
        %728 = vst [vmem:[#allocation3 + $0x30] sm:$0x1] 0.0
        %729 = vst [vmem:[#allocation3 + $0x40] sm:$0x1] 0.0
        %730 = vst [vmem:[#allocation3 + $0x50] sm:$0x1] 0.0
        %731 = vst [vmem:[#allocation3 + $0x9] sm:$0x1] 0.0
        %732 = vst [vmem:[#allocation3 + $0x19] sm:$0x1] 0.0
        %733 = vst [vmem:[#allocation3 + $0x29] sm:$0x1] 0.0
        %734 = vst [vmem:[#allocation3 + $0x39] sm:$0x1] 0.0
        %735 = vst [vmem:[#allocation3 + $0x49] sm:$0x1] 0.0
        %736 = vst [vmem:[#allocation3 + $0x59] sm:$0x1] 0.0
        %v737 = vld [vmem:[%s570] sm:$0xff]
        %v738 = vld [vmem:[%s570 + $0x8] sm:$0xff]
        %v739 = vld [vmem:[%s570 + $0x10] sm:$0xff]
        %v740 = vld [vmem:[%s570 + $0x18] sm:$0xff]
        %s741 = scalar_lea.vmem [#allocation3], 16
        %742 = vst [vmem:[%s741 + $0x1] sm:$0xff] %v737
        %743 = vst [vmem:[%s741 + $0x11] sm:$0xff] %v738
        %744 = vst [vmem:[%s741 + $0x21] sm:$0xff] %v739
        %745 = vst [vmem:[%s741 + $0x31] sm:$0xff] %v740
        // Predicated region
        $region101: #{tpu_custom_call.1} parent=51 // pred_check
          %p746 = pneg %p701
        $region102: #{tpu_custom_call.1} parent=51 // pred_check_branch
          %748 = sbr.rel (%p746) target = $region104
        $region103: #{tpu_custom_call.1} parent=51 // pred_region
          %v749 = vld [vmem:[%s579] sm:$0xff]
          %750 = vst [vmem:[#allocation3 + $0x1] sm:$0xff] %v749
        $region104: #{tpu_custom_call.1} parent=51 // pred_fallthru
          _
        // Predicated region
        $region105: #{tpu_custom_call.1} parent=51 // pred_check
          %p751 = pneg %p707
        $region106: #{tpu_custom_call.1} parent=51 // pred_check_branch
          %753 = sbr.rel (%p751) target = $region108
        $region107: #{tpu_custom_call.1} parent=51 // pred_region
          %754 = vst [vmem:[#allocation3 + $0x1] sm:$0xff] 0.0
        $region108: #{tpu_custom_call.1} parent=51 // pred_fallthru
          _
        // Predicated region
        $region109: #{tpu_custom_call.1} parent=51 // pred_check
          %p755 = pneg %p712
        $region110: #{tpu_custom_call.1} parent=51 // pred_check_branch
          %757 = sbr.rel (%p755) target = $region112
        $region111: #{tpu_custom_call.1} parent=51 // pred_region
          %v758 = vld [vmem:[%s588] sm:$0xff]
          %s759 = scalar_lea.vmem [#allocation3], 80
          %760 = vst [vmem:[%s759 + $0x1] sm:$0xff] %v758
        $region112: #{tpu_custom_call.1} parent=51 // pred_fallthru
          _
        // Predicated region
        $region113: #{tpu_custom_call.1} parent=51 // pred_check
          %p761 = pneg %p719
        $region114: #{tpu_custom_call.1} parent=51 // pred_check_branch
          %763 = sbr.rel (%p761) target = $region116
        $region115: #{tpu_custom_call.1} parent=51 // pred_region
          %s764 = scalar_lea.vmem [#allocation3], 80
          %765 = vst [vmem:[%s764 + $0x1] sm:$0xff] 0.0
        $region116: #{tpu_custom_call.1} parent=51 // pred_fallthru
          _
        %v766 = vld [vmem:[#allocation2] sm:$0xff]
        %v767 = vld [vmem:[#allocation2 + $0x10] sm:$0xff]
        %v768 = vld [vmem:[#allocation2 + $0x20] sm:$0xff]
        %v769 = vld [vmem:[#allocation2 + $0x30] sm:$0xff]
        %v770 = vld [vmem:[#allocation15] sm:$0xff]
        %v771 = vld [vmem:[#allocation15 + $0x8] sm:$0xff]
        %v772 = vld [vmem:[#allocation15 + $0x10] sm:$0xff]
        %v773 = vld [vmem:[#allocation15 + $0x18] sm:$0xff]
        %v774 = vld [vmem:[#allocation15 + $0x20] sm:$0xff]
        %v775 = vld [vmem:[#allocation15 + $0x28] sm:$0xff]
        %v776 = vld [vmem:[#allocation15 + $0x30] sm:$0xff]
        %v777 = vld [vmem:[#allocation15 + $0x38] sm:$0xff]
        %v778 = vld [vmem:[#allocation15 + $0x40] sm:$0xff]
        %v779 = vld [vmem:[#allocation15 + $0x48] sm:$0xff]
        %v780 = vld [vmem:[#allocation15 + $0x50] sm:$0xff]
        %v781 = vld [vmem:[#allocation15 + $0x58] sm:$0xff]
        %v782 = vld [vmem:[#allocation15 + $0x60] sm:$0xff]
        %v783 = vld [vmem:[#allocation15 + $0x68] sm:$0xff]
        %v784 = vld [vmem:[#allocation15 + $0x70] sm:$0xff]
        %v785 = vld [vmem:[#allocation15 + $0x78] sm:$0xff]
        %v786 = vld [vmem:[#allocation2 + $0x1] sm:$0xff]
        %v787 = vld [vmem:[#allocation2 + $0x11] sm:$0xff]
        %v788 = vld [vmem:[#allocation2 + $0x21] sm:$0xff]
        %v789 = vld [vmem:[#allocation2 + $0x31] sm:$0xff]
        %s790 = scalar_lea.vmem [#allocation15], 128
        %v791 = vld [vmem:[%s790] sm:$0xff]
        %v792 = vld [vmem:[%s790 + $0x8] sm:$0xff]
        %v793 = vld [vmem:[%s790 + $0x10] sm:$0xff]
        %v794 = vld [vmem:[%s790 + $0x18] sm:$0xff]
        %v795 = vld [vmem:[%s790 + $0x20] sm:$0xff]
        %v796 = vld [vmem:[%s790 + $0x28] sm:$0xff]
        %v797 = vld [vmem:[%s790 + $0x30] sm:$0xff]
        %v798 = vld [vmem:[%s790 + $0x38] sm:$0xff]
        %v799 = vld [vmem:[%s790 + $0x40] sm:$0xff]
        %v800 = vld [vmem:[%s790 + $0x48] sm:$0xff]
        %v801 = vld [vmem:[%s790 + $0x50] sm:$0xff]
        %v802 = vld [vmem:[%s790 + $0x58] sm:$0xff]
        %v803 = vld [vmem:[%s790 + $0x60] sm:$0xff]
        %v804 = vld [vmem:[%s790 + $0x68] sm:$0xff]
        %v805 = vld [vmem:[%s790 + $0x70] sm:$0xff]
        %v806 = vld [vmem:[%s790 + $0x78] sm:$0xff]
        %807 = vmatprep.subr.mxu0 0.0
        %808 = vmatpush1.msra.mxu0 %v791
        %809 = vmatprep.subr.mxu0 0.0
        %810 = vmatpush1.msra.mxu0 %v792
        %811 = vmatprep.subr.mxu0 0.0
        %812 = vmatpush1.msra.mxu0 %v793
        %813 = vmatprep.subr.mxu0 0.0
        %814 = vmatpush1.msra.mxu0 %v794
        %815 = vmatprep.subr.mxu0 0.0
        %816 = vmatpush1.msra.mxu0 %v795
        %817 = vmatprep.subr.mxu0 0.0
        %818 = vmatpush1.msra.mxu0 %v796
        %819 = vmatprep.subr.mxu0 0.0
        %820 = vmatpush1.msra.mxu0 %v797
        %821 = vmatprep.subr.mxu0 0.0
        %822 = vmatpush1.msra.mxu0 %v798
        %823 = vmatprep.subr.mxu0 0.0
        %824 = vmatpush1.msra.mxu0 %v799
        %825 = vmatprep.subr.mxu0 0.0
        %826 = vmatpush1.msra.mxu0 %v800
        %827 = vmatprep.subr.mxu0 0.0
        %828 = vmatpush1.msra.mxu0 %v801
        %829 = vmatprep.subr.mxu0 0.0
        %830 = vmatpush1.msra.mxu0 %v802
        %831 = vmatprep.subr.mxu0 0.0
        %832 = vmatpush1.msra.mxu0 %v803
        %833 = vmatprep.subr.mxu0 0.0
        %834 = vmatpush1.msra.mxu0 %v804
        %835 = vmatprep.subr.mxu0 0.0
        %836 = vmatpush1.msra.mxu0 %v805
        %837 = vmatprep.subr.mxu0 0.0
        %838 = vmatpush1.msra.mxu0 %v806
        %839 = vmatprep.subr.mxu0 0.0
        %840 = vmatpush1.msra.mxu0 0.0
        %841 = vmatprep.subr.mxu0 0.0
        %842 = vmatpush1.msra.mxu0 0.0
        %843 = vmatprep.subr.mxu0 0.0
        %844 = vmatpush1.msra.mxu0 0.0
        %845 = vmatprep.subr.mxu0 0.0
        %846 = vmatpush1.msra.mxu0 0.0
        %847 = vmatprep.subr.mxu0 0.0
        %848 = vmatpush1.msra.mxu0 0.0
        %849 = vmatprep.subr.mxu0 0.0
        %850 = vmatpush1.msra.mxu0 0.0
        %851 = vmatprep.subr.mxu0 0.0
        %852 = vmatpush1.msra.mxu0 0.0
        %853 = vmatprep.subr.mxu0 0.0
        %854 = vmatpush1.msra.mxu0 0.0
        %855 = vmatprep.subr.mxu0 0.0
        %856 = vmatpush1.msra.mxu0 0.0
        %857 = vmatprep.subr.mxu0 0.0
        %858 = vmatpush1.msra.mxu0 0.0
        %859 = vmatprep.subr.mxu0 0.0
        %860 = vmatpush1.msra.mxu0 0.0
        %861 = vmatprep.subr.mxu0 0.0
        %862 = vmatpush1.msra.mxu0 0.0
        %863 = vmatprep.subr.mxu0 0.0
        %864 = vmatpush1.msra.mxu0 0.0
        %865 = vmatprep.subr.mxu0 0.0
        %866 = vmatpush1.msra.mxu0 0.0
        %867 = vmatprep.subr.mxu0 0.0
        %868 = vmatpush1.msra.mxu0 0.0
        %869 = vmatprep.subr.mxu0 0.0
        %870 = vmatpush1.msra.mxu0 0.0
        %871 = vmatprep.mubr.f32.mxu0 0.0
        %872 = vmatmul.mubr.f32.gmra.mrb[0].mxu0 %v786
        %v873 = vpop.f32.mrb[0].mxu0
        %v874 = vadd.f32 0.0, %v873
        %v875 = vpop.f32.mrb[0].mxu0
        %876 = vmatprep.mubr.f32.mxu0 0.0
        %877 = vmatmul.mubr.f32.gmra.mrb[0].mxu0 %v787
        %v878 = vpop.f32.mrb[0].mxu0
        %v879 = vadd.f32 0.0, %v878
        %v880 = vpop.f32.mrb[0].mxu0
        %881 = vmatprep.mubr.f32.mxu0 0.0
        %882 = vmatmul.mubr.f32.gmra.mrb[0].mxu0 %v788
        %v883 = vpop.f32.mrb[0].mxu0
        %v884 = vadd.f32 0.0, %v883
        %v885 = vpop.f32.mrb[0].mxu0
        %886 = vmatprep.mubr.f32.mxu0 0.0
        %887 = vmatmul.mubr.f32.gmra.mrb[0].mxu0 %v789
        %v888 = vpop.f32.mrb[0].mxu0
        %v889 = vadd.f32 0.0, %v888
        %v890 = vpop.f32.mrb[0].mxu0
        %891 = vdwg.mxu0
        %892 = vmatprep.subr.mxu0 0.0
        %893 = vmatpush1.msra.mxu0 %v770
        %894 = vmatprep.subr.mxu0 0.0
        %895 = vmatpush1.msra.mxu0 %v771
        %896 = vmatprep.subr.mxu0 0.0
        %897 = vmatpush1.msra.mxu0 %v772
        %898 = vmatprep.subr.mxu0 0.0
        %899 = vmatpush1.msra.mxu0 %v773
        %900 = vmatprep.subr.mxu0 0.0
        %901 = vmatpush1.msra.mxu0 %v774
        %902 = vmatprep.subr.mxu0 0.0
        %903 = vmatpush1.msra.mxu0 %v775
        %904 = vmatprep.subr.mxu0 0.0
        %905 = vmatpush1.msra.mxu0 %v776
        %906 = vmatprep.subr.mxu0 0.0
        %907 = vmatpush1.msra.mxu0 %v777
        %908 = vmatprep.subr.mxu0 0.0
        %909 = vmatpush1.msra.mxu0 %v778
        %910 = vmatprep.subr.mxu0 0.0
        %911 = vmatpush1.msra.mxu0 %v779
        %912 = vmatprep.subr.mxu0 0.0
        %913 = vmatpush1.msra.mxu0 %v780
        %914 = vmatprep.subr.mxu0 0.0
        %915 = vmatpush1.msra.mxu0 %v781
        %916 = vmatprep.subr.mxu0 0.0
        %917 = vmatpush1.msra.mxu0 %v782
        %918 = vmatprep.subr.mxu0 0.0
        %919 = vmatpush1.msra.mxu0 %v783
        %920 = vmatprep.subr.mxu0 0.0
        %921 = vmatpush1.msra.mxu0 %v784
        %922 = vmatprep.subr.mxu0 0.0
        %923 = vmatpush1.msra.mxu0 %v785
        %924 = vmatprep.subr.mxu0 0.0
        %925 = vmatpush1.msra.mxu0 0.0
        %926 = vmatprep.subr.mxu0 0.0
        %927 = vmatpush1.msra.mxu0 0.0
        %928 = vmatprep.subr.mxu0 0.0
        %929 = vmatpush1.msra.mxu0 0.0
        %930 = vmatprep.subr.mxu0 0.0
        %931 = vmatpush1.msra.mxu0 0.0
        %932 = vmatprep.subr.mxu0 0.0
        %933 = vmatpush1.msra.mxu0 0.0
        %934 = vmatprep.subr.mxu0 0.0
        %935 = vmatpush1.msra.mxu0 0.0
        %936 = vmatprep.subr.mxu0 0.0
        %937 = vmatpush1.msra.mxu0 0.0
        %938 = vmatprep.subr.mxu0 0.0
        %939 = vmatpush1.msra.mxu0 0.0
        %940 = vmatprep.subr.mxu0 0.0
        %941 = vmatpush1.msra.mxu0 0.0
        %942 = vmatprep.subr.mxu0 0.0
        %943 = vmatpush1.msra.mxu0 0.0
        %944 = vmatprep.subr.mxu0 0.0
        %945 = vmatpush1.msra.mxu0 0.0
        %946 = vmatprep.subr.mxu0 0.0
        %947 = vmatpush1.msra.mxu0 0.0
        %948 = vmatprep.subr.mxu0 0.0
        %949 = vmatpush1.msra.mxu0 0.0
        %950 = vmatprep.subr.mxu0 0.0
        %951 = vmatpush1.msra.mxu0 0.0
        %952 = vmatprep.subr.mxu0 0.0
        %953 = vmatpush1.msra.mxu0 0.0
        %954 = vmatprep.subr.mxu0 0.0
        %955 = vmatpush1.msra.mxu0 0.0
        %956 = vmatprep.mubr.f32.mxu0 0.0
        %957 = vmatmul.mubr.f32.gmra.mrb[0].mxu0 %v766
        %v958 = vpop.f32.mrb[0].mxu0
        %v959 = vadd.f32 %v874, %v958
        %v960 = vpop.f32.mrb[0].mxu0
        %961 = vmatprep.mubr.f32.mxu0 0.0
        %962 = vmatmul.mubr.f32.gmra.mrb[0].mxu0 %v767
        %v963 = vpop.f32.mrb[0].mxu0
        %v964 = vadd.f32 %v879, %v963
        %v965 = vpop.f32.mrb[0].mxu0
        %966 = vmatprep.mubr.f32.mxu0 0.0
        %967 = vmatmul.mubr.f32.gmra.mrb[0].mxu0 %v768
        %v968 = vpop.f32.mrb[0].mxu0
        %v969 = vadd.f32 %v884, %v968
        %v970 = vpop.f32.mrb[0].mxu0
        %971 = vmatprep.mubr.f32.mxu0 0.0
        %972 = vmatmul.mubr.f32.gmra.mrb[0].mxu0 %v769
        %v973 = vpop.f32.mrb[0].mxu0
        %v974 = vadd.f32 %v889, %v973
        %v975 = vpop.f32.mrb[0].mxu0
        %976 = vdwg.mxu0
        %v977 = vld [vmem:[#allocation2 + $0x2] sm:$0xff]
        %v978 = vld [vmem:[#allocation2 + $0x12] sm:$0xff]
        %v979 = vld [vmem:[#allocation2 + $0x22] sm:$0xff]
        %v980 = vld [vmem:[#allocation2 + $0x32] sm:$0xff]
        %s981 = scalar_lea.vmem [#allocation15], 256
        %v982 = vld [vmem:[%s981] sm:$0xff]
        %v983 = vld [vmem:[%s981 + $0x8] sm:$0xff]
        %v984 = vld [vmem:[%s981 + $0x10] sm:$0xff]
        %v985 = vld [vmem:[%s981 + $0x18] sm:$0xff]
        %v986 = vld [vmem:[%s981 + $0x20] sm:$0xff]
        %v987 = vld [vmem:[%s981 + $0x28] sm:$0xff]
        %v988 = vld [vmem:[%s981 + $0x30] sm:$0xff]
        %v989 = vld [vmem:[%s981 + $0x38] sm:$0xff]
        %v990 = vld [vmem:[%s981 + $0x40] sm:$0xff]
        %v991 = vld [vmem:[%s981 + $0x48] sm:$0xff]
        %v992 = vld [vmem:[%s981 + $0x50] sm:$0xff]
        %v993 = vld [vmem:[%s981 + $0x58] sm:$0xff]
        %v994 = vld [vmem:[%s981 + $0x60] sm:$0xff]
        %v995 = vld [vmem:[%s981 + $0x68] sm:$0xff]
        %v996 = vld [vmem:[%s981 + $0x70] sm:$0xff]
        %v997 = vld [vmem:[%s981 + $0x78] sm:$0xff]
        %998 = vmatprep.subr.mxu0 0.0
        %999 = vmatpush1.msra.mxu0 %v982
        %1000 = vmatprep.subr.mxu0 0.0
        %1001 = vmatpush1.msra.mxu0 %v983
        %1002 = vmatprep.subr.mxu0 0.0
        %1003 = vmatpush1.msra.mxu0 %v984
        %1004 = vmatprep.subr.mxu0 0.0
        %1005 = vmatpush1.msra.mxu0 %v985
        %1006 = vmatprep.subr.mxu0 0.0
        %1007 = vmatpush1.msra.mxu0 %v986
        %1008 = vmatprep.subr.mxu0 0.0
        %1009 = vmatpush1.msra.mxu0 %v987
        %1010 = vmatprep.subr.mxu0 0.0
        %1011 = vmatpush1.msra.mxu0 %v988
        %1012 = vmatprep.subr.mxu0 0.0
        %1013 = vmatpush1.msra.mxu0 %v989
        %1014 = vmatprep.subr.mxu0 0.0
        %1015 = vmatpush1.msra.mxu0 %v990
        %1016 = vmatprep.subr.mxu0 0.0
        %1017 = vmatpush1.msra.mxu0 %v991
        %1018 = vmatprep.subr.mxu0 0.0
        %1019 = vmatpush1.msra.mxu0 %v992
        %1020 = vmatprep.subr.mxu0 0.0
        %1021 = vmatpush1.msra.mxu0 %v993
        %1022 = vmatprep.subr.mxu0 0.0
        %1023 = vmatpush1.msra.mxu0 %v994
        %1024 = vmatprep.subr.mxu0 0.0
        %1025 = vmatpush1.msra.mxu0 %v995
        %1026 = vmatprep.subr.mxu0 0.0
        %1027 = vmatpush1.msra.mxu0 %v996
        %1028 = vmatprep.subr.mxu0 0.0
        %1029 = vmatpush1.msra.mxu0 %v997
        %1030 = vmatprep.subr.mxu0 0.0
        %1031 = vmatpush1.msra.mxu0 0.0
        %1032 = vmatprep.subr.mxu0 0.0
        %1033 = vmatpush1.msra.mxu0 0.0
        %1034 = vmatprep.subr.mxu0 0.0
        %1035 = vmatpush1.msra.mxu0 0.0
        %1036 = vmatprep.subr.mxu0 0.0
        %1037 = vmatpush1.msra.mxu0 0.0
        %1038 = vmatprep.subr.mxu0 0.0
        %1039 = vmatpush1.msra.mxu0 0.0
        %1040 = vmatprep.subr.mxu0 0.0
        %1041 = vmatpush1.msra.mxu0 0.0
        %1042 = vmatprep.subr.mxu0 0.0
        %1043 = vmatpush1.msra.mxu0 0.0
        %1044 = vmatprep.subr.mxu0 0.0
        %1045 = vmatpush1.msra.mxu0 0.0
        %1046 = vmatprep.subr.mxu0 0.0
        %1047 = vmatpush1.msra.mxu0 0.0
        %1048 = vmatprep.subr.mxu0 0.0
        %1049 = vmatpush1.msra.mxu0 0.0
        %1050 = vmatprep.subr.mxu0 0.0
        %1051 = vmatpush1.msra.mxu0 0.0
        %1052 = vmatprep.subr.mxu0 0.0
        %1053 = vmatpush1.msra.mxu0 0.0
        %1054 = vmatprep.subr.mxu0 0.0
        %1055 = vmatpush1.msra.mxu0 0.0
        %1056 = vmatprep.subr.mxu0 0.0
        %1057 = vmatpush1.msra.mxu0 0.0
        %1058 = vmatprep.subr.mxu0 0.0
        %1059 = vmatpush1.msra.mxu0 0.0
        %1060 = vmatprep.subr.mxu0 0.0
        %1061 = vmatpush1.msra.mxu0 0.0
        %1062 = vmatprep.mubr.f32.mxu0 0.0
        %1063 = vmatmul.mubr.f32.gmra.mrb[0].mxu0 %v977
        %v1064 = vpop.f32.mrb[0].mxu0
        %v1065 = vadd.f32 0.0, %v1064
        %v1066 = vpop.f32.mrb[0].mxu0
        %1067 = vmatprep.mubr.f32.mxu0 0.0
        %1068 = vmatmul.mubr.f32.gmra.mrb[0].mxu0 %v978
        %v1069 = vpop.f32.mrb[0].mxu0
        %v1070 = vadd.f32 0.0, %v1069
        %v1071 = vpop.f32.mrb[0].mxu0
        %1072 = vmatprep.mubr.f32.mxu0 0.0
        %1073 = vmatmul.mubr.f32.gmra.mrb[0].mxu0 %v979
        %v1074 = vpop.f32.mrb[0].mxu0
        %v1075 = vadd.f32 0.0, %v1074
        %v1076 = vpop.f32.mrb[0].mxu0
        %1077 = vmatprep.mubr.f32.mxu0 0.0
        %1078 = vmatmul.mubr.f32.gmra.mrb[0].mxu0 %v980
        %v1079 = vpop.f32.mrb[0].mxu0
        %v1080 = vadd.f32 0.0, %v1079
        %v1081 = vpop.f32.mrb[0].mxu0
        %1082 = vdwg.mxu0
        %v1083 = vadd.f32 %v959, %v1065
        %v1084 = vadd.f32 %v964, %v1070
        %v1085 = vadd.f32 %v969, %v1075
        %v1086 = vadd.f32 %v974, %v1080
        %v1087 = vld [vmem:[%s696] sm:$0xff]
        %v1088 = vld [vmem:[%s696 + $0x10] sm:$0xff]
        %v1089 = vld [vmem:[%s696 + $0x20] sm:$0xff]
        %v1090 = vld [vmem:[%s696 + $0x30] sm:$0xff]
        %s1091 = scalar_lea.vmem [#allocation15], 384
        %v1092 = vld [vmem:[%s1091] sm:$0xff]
        %v1093 = vld [vmem:[%s1091 + $0x8] sm:$0xff]
        %v1094 = vld [vmem:[%s1091 + $0x10] sm:$0xff]
        %v1095 = vld [vmem:[%s1091 + $0x18] sm:$0xff]
        %v1096 = vld [vmem:[%s1091 + $0x20] sm:$0xff]
        %v1097 = vld [vmem:[%s1091 + $0x28] sm:$0xff]
        %v1098 = vld [vmem:[%s1091 + $0x30] sm:$0xff]
        %v1099 = vld [vmem:[%s1091 + $0x38] sm:$0xff]
        %v1100 = vld [vmem:[%s1091 + $0x40] sm:$0xff]
        %v1101 = vld [vmem:[%s1091 + $0x48] sm:$0xff]
        %v1102 = vld [vmem:[%s1091 + $0x50] sm:$0xff]
        %v1103 = vld [vmem:[%s1091 + $0x58] sm:$0xff]
        %v1104 = vld [vmem:[%s1091 + $0x60] sm:$0xff]
        %v1105 = vld [vmem:[%s1091 + $0x68] sm:$0xff]
        %v1106 = vld [vmem:[%s1091 + $0x70] sm:$0xff]
        %v1107 = vld [vmem:[%s1091 + $0x78] sm:$0xff]
        %1108 = vmatprep.subr.mxu0 0.0
        %1109 = vmatpush1.msra.mxu0 %v1092
        %1110 = vmatprep.subr.mxu0 0.0
        %1111 = vmatpush1.msra.mxu0 %v1093
        %1112 = vmatprep.subr.mxu0 0.0
        %1113 = vmatpush1.msra.mxu0 %v1094
        %1114 = vmatprep.subr.mxu0 0.0
        %1115 = vmatpush1.msra.mxu0 %v1095
        %1116 = vmatprep.subr.mxu0 0.0
        %1117 = vmatpush1.msra.mxu0 %v1096
        %1118 = vmatprep.subr.mxu0 0.0
        %1119 = vmatpush1.msra.mxu0 %v1097
        %1120 = vmatprep.subr.mxu0 0.0
        %1121 = vmatpush1.msra.mxu0 %v1098
        %1122 = vmatprep.subr.mxu0 0.0
        %1123 = vmatpush1.msra.mxu0 %v1099
        %1124 = vmatprep.subr.mxu0 0.0
        %1125 = vmatpush1.msra.mxu0 %v1100
        %1126 = vmatprep.subr.mxu0 0.0
        %1127 = vmatpush1.msra.mxu0 %v1101
        %1128 = vmatprep.subr.mxu0 0.0
        %1129 = vmatpush1.msra.mxu0 %v1102
        %1130 = vmatprep.subr.mxu0 0.0
        %1131 = vmatpush1.msra.mxu0 %v1103
        %1132 = vmatprep.subr.mxu0 0.0
        %1133 = vmatpush1.msra.mxu0 %v1104
        %1134 = vmatprep.subr.mxu0 0.0
        %1135 = vmatpush1.msra.mxu0 %v1105
        %1136 = vmatprep.subr.mxu0 0.0
        %1137 = vmatpush1.msra.mxu0 %v1106
        %1138 = vmatprep.subr.mxu0 0.0
        %1139 = vmatpush1.msra.mxu0 %v1107
        %1140 = vmatprep.subr.mxu0 0.0
        %1141 = vmatpush1.msra.mxu0 0.0
        %1142 = vmatprep.subr.mxu0 0.0
        %1143 = vmatpush1.msra.mxu0 0.0
        %1144 = vmatprep.subr.mxu0 0.0
        %1145 = vmatpush1.msra.mxu0 0.0
        %1146 = vmatprep.subr.mxu0 0.0
        %1147 = vmatpush1.msra.mxu0 0.0
        %1148 = vmatprep.subr.mxu0 0.0
        %1149 = vmatpush1.msra.mxu0 0.0
        %1150 = vmatprep.subr.mxu0 0.0
        %1151 = vmatpush1.msra.mxu0 0.0
        %1152 = vmatprep.subr.mxu0 0.0
        %1153 = vmatpush1.msra.mxu0 0.0
        %1154 = vmatprep.subr.mxu0 0.0
        %1155 = vmatpush1.msra.mxu0 0.0
        %1156 = vmatprep.subr.mxu0 0.0
        %1157 = vmatpush1.msra.mxu0 0.0
        %1158 = vmatprep.subr.mxu0 0.0
        %1159 = vmatpush1.msra.mxu0 0.0
        %1160 = vmatprep.subr.mxu0 0.0
        %1161 = vmatpush1.msra.mxu0 0.0
        %1162 = vmatprep.subr.mxu0 0.0
        %1163 = vmatpush1.msra.mxu0 0.0
        %1164 = vmatprep.subr.mxu0 0.0
        %1165 = vmatpush1.msra.mxu0 0.0
        %1166 = vmatprep.subr.mxu0 0.0
        %1167 = vmatpush1.msra.mxu0 0.0
        %1168 = vmatprep.subr.mxu0 0.0
        %1169 = vmatpush1.msra.mxu0 0.0
        %1170 = vmatprep.subr.mxu0 0.0
        %1171 = vmatpush1.msra.mxu0 0.0
        %1172 = vmatprep.mubr.f32.mxu0 0.0
        %1173 = vmatmul.mubr.f32.gmra.mrb[0].mxu0 %v1087
        %v1174 = vpop.f32.mrb[0].mxu0
        %v1175 = vadd.f32 0.0, %v1174
        %v1176 = vpop.f32.mrb[0].mxu0
        %1177 = vmatprep.mubr.f32.mxu0 0.0
        %1178 = vmatmul.mubr.f32.gmra.mrb[0].mxu0 %v1088
        %v1179 = vpop.f32.mrb[0].mxu0
        %v1180 = vadd.f32 0.0, %v1179
        %v1181 = vpop.f32.mrb[0].mxu0
        %1182 = vmatprep.mubr.f32.mxu0 0.0
        %1183 = vmatmul.mubr.f32.gmra.mrb[0].mxu0 %v1089
        %v1184 = vpop.f32.mrb[0].mxu0
        %v1185 = vadd.f32 0.0, %v1184
        %v1186 = vpop.f32.mrb[0].mxu0
        %1187 = vmatprep.mubr.f32.mxu0 0.0
        %1188 = vmatmul.mubr.f32.gmra.mrb[0].mxu0 %v1090
        %v1189 = vpop.f32.mrb[0].mxu0
        %v1190 = vadd.f32 0.0, %v1189
        %v1191 = vpop.f32.mrb[0].mxu0
        %1192 = vdwg.mxu0
        %v1193 = vadd.f32 %v1083, %v1175
        %v1194 = vadd.f32 %v1084, %v1180
        %v1195 = vadd.f32 %v1085, %v1185
        %v1196 = vadd.f32 %v1086, %v1190
        %v1197 = vld [vmem:[%s696 + $0x1] sm:$0xff]
        %v1198 = vld [vmem:[%s696 + $0x11] sm:$0xff]
        %v1199 = vld [vmem:[%s696 + $0x21] sm:$0xff]
        %v1200 = vld [vmem:[%s696 + $0x31] sm:$0xff]
        %s1201 = scalar_lea.vmem [#allocation15], 512
        %v1202 = vld [vmem:[%s1201] sm:$0xff]
        %v1203 = vld [vmem:[%s1201 + $0x8] sm:$0xff]
        %v1204 = vld [vmem:[%s1201 + $0x10] sm:$0xff]
        %v1205 = vld [vmem:[%s1201 + $0x18] sm:$0xff]
        %v1206 = vld [vmem:[%s1201 + $0x20] sm:$0xff]
        %v1207 = vld [vmem:[%s1201 + $0x28] sm:$0xff]
        %v1208 = vld [vmem:[%s1201 + $0x30] sm:$0xff]
        %v1209 = vld [vmem:[%s1201 + $0x38] sm:$0xff]
        %v1210 = vld [vmem:[%s1201 + $0x40] sm:$0xff]
        %v1211 = vld [vmem:[%s1201 + $0x48] sm:$0xff]
        %v1212 = vld [vmem:[%s1201 + $0x50] sm:$0xff]
        %v1213 = vld [vmem:[%s1201 + $0x58] sm:$0xff]
        %v1214 = vld [vmem:[%s1201 + $0x60] sm:$0xff]
        %v1215 = vld [vmem:[%s1201 + $0x68] sm:$0xff]
        %v1216 = vld [vmem:[%s1201 + $0x70] sm:$0xff]
        %v1217 = vld [vmem:[%s1201 + $0x78] sm:$0xff]
        %1218 = vmatprep.subr.mxu0 0.0
        %1219 = vmatpush1.msra.mxu0 %v1202
        %1220 = vmatprep.subr.mxu0 0.0
        %1221 = vmatpush1.msra.mxu0 %v1203
        %1222 = vmatprep.subr.mxu0 0.0
        %1223 = vmatpush1.msra.mxu0 %v1204
        %1224 = vmatprep.subr.mxu0 0.0
        %1225 = vmatpush1.msra.mxu0 %v1205
        %1226 = vmatprep.subr.mxu0 0.0
        %1227 = vmatpush1.msra.mxu0 %v1206
        %1228 = vmatprep.subr.mxu0 0.0
        %1229 = vmatpush1.msra.mxu0 %v1207
        %1230 = vmatprep.subr.mxu0 0.0
        %1231 = vmatpush1.msra.mxu0 %v1208
        %1232 = vmatprep.subr.mxu0 0.0
        %1233 = vmatpush1.msra.mxu0 %v1209
        %1234 = vmatprep.subr.mxu0 0.0
        %1235 = vmatpush1.msra.mxu0 %v1210
        %1236 = vmatprep.subr.mxu0 0.0
        %1237 = vmatpush1.msra.mxu0 %v1211
        %1238 = vmatprep.subr.mxu0 0.0
        %1239 = vmatpush1.msra.mxu0 %v1212
        %1240 = vmatprep.subr.mxu0 0.0
        %1241 = vmatpush1.msra.mxu0 %v1213
        %1242 = vmatprep.subr.mxu0 0.0
        %1243 = vmatpush1.msra.mxu0 %v1214
        %1244 = vmatprep.subr.mxu0 0.0
        %1245 = vmatpush1.msra.mxu0 %v1215
        %1246 = vmatprep.subr.mxu0 0.0
        %1247 = vmatpush1.msra.mxu0 %v1216
        %1248 = vmatprep.subr.mxu0 0.0
        %1249 = vmatpush1.msra.mxu0 %v1217
        %1250 = vmatprep.subr.mxu0 0.0
        %1251 = vmatpush1.msra.mxu0 0.0
        %1252 = vmatprep.subr.mxu0 0.0
        %1253 = vmatpush1.msra.mxu0 0.0
        %1254 = vmatprep.subr.mxu0 0.0
        %1255 = vmatpush1.msra.mxu0 0.0
        %1256 = vmatprep.subr.mxu0 0.0
        %1257 = vmatpush1.msra.mxu0 0.0
        %1258 = vmatprep.subr.mxu0 0.0
        %1259 = vmatpush1.msra.mxu0 0.0
        %1260 = vmatprep.subr.mxu0 0.0
        %1261 = vmatpush1.msra.mxu0 0.0
        %1262 = vmatprep.subr.mxu0 0.0
        %1263 = vmatpush1.msra.mxu0 0.0
        %1264 = vmatprep.subr.mxu0 0.0
        %1265 = vmatpush1.msra.mxu0 0.0
        %1266 = vmatprep.subr.mxu0 0.0
        %1267 = vmatpush1.msra.mxu0 0.0
        %1268 = vmatprep.subr.mxu0 0.0
        %1269 = vmatpush1.msra.mxu0 0.0
        %1270 = vmatprep.subr.mxu0 0.0
        %1271 = vmatpush1.msra.mxu0 0.0
        %1272 = vmatprep.subr.mxu0 0.0
        %1273 = vmatpush1.msra.mxu0 0.0
        %1274 = vmatprep.subr.mxu0 0.0
        %1275 = vmatpush1.msra.mxu0 0.0
        %1276 = vmatprep.subr.mxu0 0.0
        %1277 = vmatpush1.msra.mxu0 0.0
        %1278 = vmatprep.subr.mxu0 0.0
        %1279 = vmatpush1.msra.mxu0 0.0
        %1280 = vmatprep.subr.mxu0 0.0
        %1281 = vmatpush1.msra.mxu0 0.0
        %1282 = vmatprep.mubr.f32.mxu0 0.0
        %1283 = vmatmul.mubr.f32.gmra.mrb[0].mxu0 %v1197
        %v1284 = vpop.f32.mrb[0].mxu0
        %v1285 = vadd.f32 0.0, %v1284
        %v1286 = vpop.f32.mrb[0].mxu0
        %1287 = vmatprep.mubr.f32.mxu0 0.0
        %1288 = vmatmul.mubr.f32.gmra.mrb[0].mxu0 %v1198
        %v1289 = vpop.f32.mrb[0].mxu0
        %v1290 = vadd.f32 0.0, %v1289
        %v1291 = vpop.f32.mrb[0].mxu0
        %1292 = vmatprep.mubr.f32.mxu0 0.0
        %1293 = vmatmul.mubr.f32.gmra.mrb[0].mxu0 %v1199
        %v1294 = vpop.f32.mrb[0].mxu0
        %v1295 = vadd.f32 0.0, %v1294
        %v1296 = vpop.f32.mrb[0].mxu0
        %1297 = vmatprep.mubr.f32.mxu0 0.0
        %1298 = vmatmul.mubr.f32.gmra.mrb[0].mxu0 %v1200
        %v1299 = vpop.f32.mrb[0].mxu0
        %v1300 = vadd.f32 0.0, %v1299
        %v1301 = vpop.f32.mrb[0].mxu0
        %1302 = vdwg.mxu0
        %v1303 = vadd.f32 %v1193, %v1285
        %v1304 = vadd.f32 %v1194, %v1290
        %v1305 = vadd.f32 %v1195, %v1295
        %v1306 = vadd.f32 %v1196, %v1300
        %v1307 = vld [vmem:[%s696 + $0x2] sm:$0xff]
        %v1308 = vld [vmem:[%s696 + $0x12] sm:$0xff]
        %v1309 = vld [vmem:[%s696 + $0x22] sm:$0xff]
        %v1310 = vld [vmem:[%s696 + $0x32] sm:$0xff]
        %s1311 = scalar_lea.vmem [#allocation15], 640
        %v1312 = vld [vmem:[%s1311] sm:$0xff]
        %v1313 = vld [vmem:[%s1311 + $0x8] sm:$0xff]
        %v1314 = vld [vmem:[%s1311 + $0x10] sm:$0xff]
        %v1315 = vld [vmem:[%s1311 + $0x18] sm:$0xff]
        %v1316 = vld [vmem:[%s1311 + $0x20] sm:$0xff]
        %v1317 = vld [vmem:[%s1311 + $0x28] sm:$0xff]
        %v1318 = vld [vmem:[%s1311 + $0x30] sm:$0xff]
        %v1319 = vld [vmem:[%s1311 + $0x38] sm:$0xff]
        %v1320 = vld [vmem:[%s1311 + $0x40] sm:$0xff]
        %v1321 = vld [vmem:[%s1311 + $0x48] sm:$0xff]
        %v1322 = vld [vmem:[%s1311 + $0x50] sm:$0xff]
        %v1323 = vld [vmem:[%s1311 + $0x58] sm:$0xff]
        %v1324 = vld [vmem:[%s1311 + $0x60] sm:$0xff]
        %v1325 = vld [vmem:[%s1311 + $0x68] sm:$0xff]
        %v1326 = vld [vmem:[%s1311 + $0x70] sm:$0xff]
        %v1327 = vld [vmem:[%s1311 + $0x78] sm:$0xff]
        %1328 = vmatprep.subr.mxu0 0.0
        %1329 = vmatpush1.msra.mxu0 %v1312
        %1330 = vmatprep.subr.mxu0 0.0
        %1331 = vmatpush1.msra.mxu0 %v1313
        %1332 = vmatprep.subr.mxu0 0.0
        %1333 = vmatpush1.msra.mxu0 %v1314
        %1334 = vmatprep.subr.mxu0 0.0
        %1335 = vmatpush1.msra.mxu0 %v1315
        %1336 = vmatprep.subr.mxu0 0.0
        %1337 = vmatpush1.msra.mxu0 %v1316
        %1338 = vmatprep.subr.mxu0 0.0
        %1339 = vmatpush1.msra.mxu0 %v1317
        %1340 = vmatprep.subr.mxu0 0.0
        %1341 = vmatpush1.msra.mxu0 %v1318
        %1342 = vmatprep.subr.mxu0 0.0
        %1343 = vmatpush1.msra.mxu0 %v1319
        %1344 = vmatprep.subr.mxu0 0.0
        %1345 = vmatpush1.msra.mxu0 %v1320
        %1346 = vmatprep.subr.mxu0 0.0
        %1347 = vmatpush1.msra.mxu0 %v1321
        %1348 = vmatprep.subr.mxu0 0.0
        %1349 = vmatpush1.msra.mxu0 %v1322
        %1350 = vmatprep.subr.mxu0 0.0
        %1351 = vmatpush1.msra.mxu0 %v1323
        %1352 = vmatprep.subr.mxu0 0.0
        %1353 = vmatpush1.msra.mxu0 %v1324
        %1354 = vmatprep.subr.mxu0 0.0
        %1355 = vmatpush1.msra.mxu0 %v1325
        %1356 = vmatprep.subr.mxu0 0.0
        %1357 = vmatpush1.msra.mxu0 %v1326
        %1358 = vmatprep.subr.mxu0 0.0
        %1359 = vmatpush1.msra.mxu0 %v1327
        %1360 = vmatprep.subr.mxu0 0.0
        %1361 = vmatpush1.msra.mxu0 0.0
        %1362 = vmatprep.subr.mxu0 0.0
        %1363 = vmatpush1.msra.mxu0 0.0
        %1364 = vmatprep.subr.mxu0 0.0
        %1365 = vmatpush1.msra.mxu0 0.0
        %1366 = vmatprep.subr.mxu0 0.0
        %1367 = vmatpush1.msra.mxu0 0.0
        %1368 = vmatprep.subr.mxu0 0.0
        %1369 = vmatpush1.msra.mxu0 0.0
        %1370 = vmatprep.subr.mxu0 0.0
        %1371 = vmatpush1.msra.mxu0 0.0
        %1372 = vmatprep.subr.mxu0 0.0
        %1373 = vmatpush1.msra.mxu0 0.0
        %1374 = vmatprep.subr.mxu0 0.0
        %1375 = vmatpush1.msra.mxu0 0.0
        %1376 = vmatprep.subr.mxu0 0.0
        %1377 = vmatpush1.msra.mxu0 0.0
        %1378 = vmatprep.subr.mxu0 0.0
        %1379 = vmatpush1.msra.mxu0 0.0
        %1380 = vmatprep.subr.mxu0 0.0
        %1381 = vmatpush1.msra.mxu0 0.0
        %1382 = vmatprep.subr.mxu0 0.0
        %1383 = vmatpush1.msra.mxu0 0.0
        %1384 = vmatprep.subr.mxu0 0.0
        %1385 = vmatpush1.msra.mxu0 0.0
        %1386 = vmatprep.subr.mxu0 0.0
        %1387 = vmatpush1.msra.mxu0 0.0
        %1388 = vmatprep.subr.mxu0 0.0
        %1389 = vmatpush1.msra.mxu0 0.0
        %1390 = vmatprep.subr.mxu0 0.0
        %1391 = vmatpush1.msra.mxu0 0.0
        %1392 = vmatprep.mubr.f32.mxu0 0.0
        %1393 = vmatmul.mubr.f32.gmra.mrb[0].mxu0 %v1307
        %v1394 = vpop.f32.mrb[0].mxu0
        %v1395 = vadd.f32 0.0, %v1394
        %v1396 = vpop.f32.mrb[0].mxu0
        %1397 = vmatprep.mubr.f32.mxu0 0.0
        %1398 = vmatmul.mubr.f32.gmra.mrb[0].mxu0 %v1308
        %v1399 = vpop.f32.mrb[0].mxu0
        %v1400 = vadd.f32 0.0, %v1399
        %v1401 = vpop.f32.mrb[0].mxu0
        %1402 = vmatprep.mubr.f32.mxu0 0.0
        %1403 = vmatmul.mubr.f32.gmra.mrb[0].mxu0 %v1309
        %v1404 = vpop.f32.mrb[0].mxu0
        %v1405 = vadd.f32 0.0, %v1404
        %v1406 = vpop.f32.mrb[0].mxu0
        %1407 = vmatprep.mubr.f32.mxu0 0.0
        %1408 = vmatmul.mubr.f32.gmra.mrb[0].mxu0 %v1310
        %v1409 = vpop.f32.mrb[0].mxu0
        %v1410 = vadd.f32 0.0, %v1409
        %v1411 = vpop.f32.mrb[0].mxu0
        %1412 = vdwg.mxu0
        %v1413 = vadd.f32 %v1303, %v1395
        %v1414 = vadd.f32 %v1304, %v1400
        %v1415 = vadd.f32 %v1305, %v1405
        %v1416 = vadd.f32 %v1306, %v1410
        %s1417 = scalar_lea.vmem [#allocation2], 32
        %v1418 = vld [vmem:[%s1417] sm:$0xff]
        %v1419 = vld [vmem:[%s1417 + $0x10] sm:$0xff]
        %v1420 = vld [vmem:[%s1417 + $0x20] sm:$0xff]
        %v1421 = vld [vmem:[%s1417 + $0x30] sm:$0xff]
        %s1422 = scalar_lea.vmem [#allocation15], 768
        %v1423 = vld [vmem:[%s1422] sm:$0xff]
        %v1424 = vld [vmem:[%s1422 + $0x8] sm:$0xff]
        %v1425 = vld [vmem:[%s1422 + $0x10] sm:$0xff]
        %v1426 = vld [vmem:[%s1422 + $0x18] sm:$0xff]
        %v1427 = vld [vmem:[%s1422 + $0x20] sm:$0xff]
        %v1428 = vld [vmem:[%s1422 + $0x28] sm:$0xff]
        %v1429 = vld [vmem:[%s1422 + $0x30] sm:$0xff]
        %v1430 = vld [vmem:[%s1422 + $0x38] sm:$0xff]
        %v1431 = vld [vmem:[%s1422 + $0x40] sm:$0xff]
        %v1432 = vld [vmem:[%s1422 + $0x48] sm:$0xff]
        %v1433 = vld [vmem:[%s1422 + $0x50] sm:$0xff]
        %v1434 = vld [vmem:[%s1422 + $0x58] sm:$0xff]
        %v1435 = vld [vmem:[%s1422 + $0x60] sm:$0xff]
        %v1436 = vld [vmem:[%s1422 + $0x68] sm:$0xff]
        %v1437 = vld [vmem:[%s1422 + $0x70] sm:$0xff]
        %v1438 = vld [vmem:[%s1422 + $0x78] sm:$0xff]
        %1439 = vmatprep.subr.mxu0 0.0
        %1440 = vmatpush1.msra.mxu0 %v1423
        %1441 = vmatprep.subr.mxu0 0.0
        %1442 = vmatpush1.msra.mxu0 %v1424
        %1443 = vmatprep.subr.mxu0 0.0
        %1444 = vmatpush1.msra.mxu0 %v1425
        %1445 = vmatprep.subr.mxu0 0.0
        %1446 = vmatpush1.msra.mxu0 %v1426
        %1447 = vmatprep.subr.mxu0 0.0
        %1448 = vmatpush1.msra.mxu0 %v1427
        %1449 = vmatprep.subr.mxu0 0.0
        %1450 = vmatpush1.msra.mxu0 %v1428
        %1451 = vmatprep.subr.mxu0 0.0
        %1452 = vmatpush1.msra.mxu0 %v1429
        %1453 = vmatprep.subr.mxu0 0.0
        %1454 = vmatpush1.msra.mxu0 %v1430
        %1455 = vmatprep.subr.mxu0 0.0
        %1456 = vmatpush1.msra.mxu0 %v1431
        %1457 = vmatprep.subr.mxu0 0.0
        %1458 = vmatpush1.msra.mxu0 %v1432
        %1459 = vmatprep.subr.mxu0 0.0
        %1460 = vmatpush1.msra.mxu0 %v1433
        %1461 = vmatprep.subr.mxu0 0.0
        %1462 = vmatpush1.msra.mxu0 %v1434
        %1463 = vmatprep.subr.mxu0 0.0
        %1464 = vmatpush1.msra.mxu0 %v1435
        %1465 = vmatprep.subr.mxu0 0.0
        %1466 = vmatpush1.msra.mxu0 %v1436
        %1467 = vmatprep.subr.mxu0 0.0
        %1468 = vmatpush1.msra.mxu0 %v1437
        %1469 = vmatprep.subr.mxu0 0.0
        %1470 = vmatpush1.msra.mxu0 %v1438
        %1471 = vmatprep.subr.mxu0 0.0
        %1472 = vmatpush1.msra.mxu0 0.0
        %1473 = vmatprep.subr.mxu0 0.0
        %1474 = vmatpush1.msra.mxu0 0.0
        %1475 = vmatprep.subr.mxu0 0.0
        %1476 = vmatpush1.msra.mxu0 0.0
        %1477 = vmatprep.subr.mxu0 0.0
        %1478 = vmatpush1.msra.mxu0 0.0
        %1479 = vmatprep.subr.mxu0 0.0
        %1480 = vmatpush1.msra.mxu0 0.0
        %1481 = vmatprep.subr.mxu0 0.0
        %1482 = vmatpush1.msra.mxu0 0.0
        %1483 = vmatprep.subr.mxu0 0.0
        %1484 = vmatpush1.msra.mxu0 0.0
        %1485 = vmatprep.subr.mxu0 0.0
        %1486 = vmatpush1.msra.mxu0 0.0
        %1487 = vmatprep.subr.mxu0 0.0
        %1488 = vmatpush1.msra.mxu0 0.0
        %1489 = vmatprep.subr.mxu0 0.0
        %1490 = vmatpush1.msra.mxu0 0.0
        %1491 = vmatprep.subr.mxu0 0.0
        %1492 = vmatpush1.msra.mxu0 0.0
        %1493 = vmatprep.subr.mxu0 0.0
        %1494 = vmatpush1.msra.mxu0 0.0
        %1495 = vmatprep.subr.mxu0 0.0
        %1496 = vmatpush1.msra.mxu0 0.0
        %1497 = vmatprep.subr.mxu0 0.0
        %1498 = vmatpush1.msra.mxu0 0.0
        %1499 = vmatprep.subr.mxu0 0.0
        %1500 = vmatpush1.msra.mxu0 0.0
        %1501 = vmatprep.subr.mxu0 0.0
        %1502 = vmatpush1.msra.mxu0 0.0
        %1503 = vmatprep.mubr.f32.mxu0 0.0
        %1504 = vmatmul.mubr.f32.gmra.mrb[0].mxu0 %v1418
        %v1505 = vpop.f32.mrb[0].mxu0
        %v1506 = vadd.f32 0.0, %v1505
        %v1507 = vpop.f32.mrb[0].mxu0
        %1508 = vmatprep.mubr.f32.mxu0 0.0
        %1509 = vmatmul.mubr.f32.gmra.mrb[0].mxu0 %v1419
        %v1510 = vpop.f32.mrb[0].mxu0
        %v1511 = vadd.f32 0.0, %v1510
        %v1512 = vpop.f32.mrb[0].mxu0
        %1513 = vmatprep.mubr.f32.mxu0 0.0
        %1514 = vmatmul.mubr.f32.gmra.mrb[0].mxu0 %v1420
        %v1515 = vpop.f32.mrb[0].mxu0
        %v1516 = vadd.f32 0.0, %v1515
        %v1517 = vpop.f32.mrb[0].mxu0
        %1518 = vmatprep.mubr.f32.mxu0 0.0
        %1519 = vmatmul.mubr.f32.gmra.mrb[0].mxu0 %v1421
        %v1520 = vpop.f32.mrb[0].mxu0
        %v1521 = vadd.f32 0.0, %v1520
        %v1522 = vpop.f32.mrb[0].mxu0
        %1523 = vdwg.mxu0
        %v1524 = vadd.f32 %v1413, %v1506
        %v1525 = vadd.f32 %v1414, %v1511
        %v1526 = vadd.f32 %v1415, %v1516
        %v1527 = vadd.f32 %v1416, %v1521
        %v1528 = vld [vmem:[%s1417 + $0x1] sm:$0xff]
        %v1529 = vld [vmem:[%s1417 + $0x11] sm:$0xff]
        %v1530 = vld [vmem:[%s1417 + $0x21] sm:$0xff]
        %v1531 = vld [vmem:[%s1417 + $0x31] sm:$0xff]
        %s1532 = scalar_lea.vmem [#allocation15], 896
        %v1533 = vld [vmem:[%s1532] sm:$0xff]
        %v1534 = vld [vmem:[%s1532 + $0x8] sm:$0xff]
        %v1535 = vld [vmem:[%s1532 + $0x10] sm:$0xff]
        %v1536 = vld [vmem:[%s1532 + $0x18] sm:$0xff]
        %v1537 = vld [vmem:[%s1532 + $0x20] sm:$0xff]
        %v1538 = vld [vmem:[%s1532 + $0x28] sm:$0xff]
        %v1539 = vld [vmem:[%s1532 + $0x30] sm:$0xff]
        %v1540 = vld [vmem:[%s1532 + $0x38] sm:$0xff]
        %v1541 = vld [vmem:[%s1532 + $0x40] sm:$0xff]
        %v1542 = vld [vmem:[%s1532 + $0x48] sm:$0xff]
        %v1543 = vld [vmem:[%s1532 + $0x50] sm:$0xff]
        %v1544 = vld [vmem:[%s1532 + $0x58] sm:$0xff]
        %v1545 = vld [vmem:[%s1532 + $0x60] sm:$0xff]
        %v1546 = vld [vmem:[%s1532 + $0x68] sm:$0xff]
        %v1547 = vld [vmem:[%s1532 + $0x70] sm:$0xff]
        %v1548 = vld [vmem:[%s1532 + $0x78] sm:$0xff]
        %1549 = vmatprep.subr.mxu0 0.0
        %1550 = vmatpush1.msra.mxu0 %v1533
        %1551 = vmatprep.subr.mxu0 0.0
        %1552 = vmatpush1.msra.mxu0 %v1534
        %1553 = vmatprep.subr.mxu0 0.0
        %1554 = vmatpush1.msra.mxu0 %v1535
        %1555 = vmatprep.subr.mxu0 0.0
        %1556 = vmatpush1.msra.mxu0 %v1536
        %1557 = vmatprep.subr.mxu0 0.0
        %1558 = vmatpush1.msra.mxu0 %v1537
        %1559 = vmatprep.subr.mxu0 0.0
        %1560 = vmatpush1.msra.mxu0 %v1538
        %1561 = vmatprep.subr.mxu0 0.0
        %1562 = vmatpush1.msra.mxu0 %v1539
        %1563 = vmatprep.subr.mxu0 0.0
        %1564 = vmatpush1.msra.mxu0 %v1540
        %1565 = vmatprep.subr.mxu0 0.0
        %1566 = vmatpush1.msra.mxu0 %v1541
        %1567 = vmatprep.subr.mxu0 0.0
        %1568 = vmatpush1.msra.mxu0 %v1542
        %1569 = vmatprep.subr.mxu0 0.0
        %1570 = vmatpush1.msra.mxu0 %v1543
        %1571 = vmatprep.subr.mxu0 0.0
        %1572 = vmatpush1.msra.mxu0 %v1544
        %1573 = vmatprep.subr.mxu0 0.0
        %1574 = vmatpush1.msra.mxu0 %v1545
        %1575 = vmatprep.subr.mxu0 0.0
        %1576 = vmatpush1.msra.mxu0 %v1546
        %1577 = vmatprep.subr.mxu0 0.0
        %1578 = vmatpush1.msra.mxu0 %v1547
        %1579 = vmatprep.subr.mxu0 0.0
        %1580 = vmatpush1.msra.mxu0 %v1548
        %1581 = vmatprep.subr.mxu0 0.0
        %1582 = vmatpush1.msra.mxu0 0.0
        %1583 = vmatprep.subr.mxu0 0.0
        %1584 = vmatpush1.msra.mxu0 0.0
        %1585 = vmatprep.subr.mxu0 0.0
        %1586 = vmatpush1.msra.mxu0 0.0
        %1587 = vmatprep.subr.mxu0 0.0
        %1588 = vmatpush1.msra.mxu0 0.0
        %1589 = vmatprep.subr.mxu0 0.0
        %1590 = vmatpush1.msra.mxu0 0.0
        %1591 = vmatprep.subr.mxu0 0.0
        %1592 = vmatpush1.msra.mxu0 0.0
        %1593 = vmatprep.subr.mxu0 0.0
        %1594 = vmatpush1.msra.mxu0 0.0
        %1595 = vmatprep.subr.mxu0 0.0
        %1596 = vmatpush1.msra.mxu0 0.0
        %1597 = vmatprep.subr.mxu0 0.0
        %1598 = vmatpush1.msra.mxu0 0.0
        %1599 = vmatprep.subr.mxu0 0.0
        %1600 = vmatpush1.msra.mxu0 0.0
        %1601 = vmatprep.subr.mxu0 0.0
        %1602 = vmatpush1.msra.mxu0 0.0
        %1603 = vmatprep.subr.mxu0 0.0
        %1604 = vmatpush1.msra.mxu0 0.0
        %1605 = vmatprep.subr.mxu0 0.0
        %1606 = vmatpush1.msra.mxu0 0.0
        %1607 = vmatprep.subr.mxu0 0.0
        %1608 = vmatpush1.msra.mxu0 0.0
        %1609 = vmatprep.subr.mxu0 0.0
        %1610 = vmatpush1.msra.mxu0 0.0
        %1611 = vmatprep.subr.mxu0 0.0
        %1612 = vmatpush1.msra.mxu0 0.0
        %1613 = vmatprep.mubr.f32.mxu0 0.0
        %1614 = vmatmul.mubr.f32.gmra.mrb[0].mxu0 %v1528
        %v1615 = vpop.f32.mrb[0].mxu0
        %v1616 = vadd.f32 0.0, %v1615
        %v1617 = vpop.f32.mrb[0].mxu0
        %1618 = vmatprep.mubr.f32.mxu0 0.0
        %1619 = vmatmul.mubr.f32.gmra.mrb[0].mxu0 %v1529
        %v1620 = vpop.f32.mrb[0].mxu0
        %v1621 = vadd.f32 0.0, %v1620
        %v1622 = vpop.f32.mrb[0].mxu0
        %1623 = vmatprep.mubr.f32.mxu0 0.0
        %1624 = vmatmul.mubr.f32.gmra.mrb[0].mxu0 %v1530
        %v1625 = vpop.f32.mrb[0].mxu0
        %v1626 = vadd.f32 0.0, %v1625
        %v1627 = vpop.f32.mrb[0].mxu0
        %1628 = vmatprep.mubr.f32.mxu0 0.0
        %1629 = vmatmul.mubr.f32.gmra.mrb[0].mxu0 %v1531
        %v1630 = vpop.f32.mrb[0].mxu0
        %v1631 = vadd.f32 0.0, %v1630
        %v1632 = vpop.f32.mrb[0].mxu0
        %1633 = vdwg.mxu0
        %v1634 = vadd.f32 %v1524, %v1616
        %v1635 = vadd.f32 %v1525, %v1621
        %v1636 = vadd.f32 %v1526, %v1626
        %v1637 = vadd.f32 %v1527, %v1631
        %v1638 = vld [vmem:[%s1417 + $0x2] sm:$0xff]
        %v1639 = vld [vmem:[%s1417 + $0x12] sm:$0xff]
        %v1640 = vld [vmem:[%s1417 + $0x22] sm:$0xff]
        %v1641 = vld [vmem:[%s1417 + $0x32] sm:$0xff]
        %s1642 = scalar_lea.vmem [#allocation15], 1024
        %v1643 = vld [vmem:[%s1642] sm:$0xff]
        %v1644 = vld [vmem:[%s1642 + $0x8] sm:$0xff]
        %v1645 = vld [vmem:[%s1642 + $0x10] sm:$0xff]
        %v1646 = vld [vmem:[%s1642 + $0x18] sm:$0xff]
        %v1647 = vld [vmem:[%s1642 + $0x20] sm:$0xff]
        %v1648 = vld [vmem:[%s1642 + $0x28] sm:$0xff]
        %v1649 = vld [vmem:[%s1642 + $0x30] sm:$0xff]
        %v1650 = vld [vmem:[%s1642 + $0x38] sm:$0xff]
        %v1651 = vld [vmem:[%s1642 + $0x40] sm:$0xff]
        %v1652 = vld [vmem:[%s1642 + $0x48] sm:$0xff]
        %v1653 = vld [vmem:[%s1642 + $0x50] sm:$0xff]
        %v1654 = vld [vmem:[%s1642 + $0x58] sm:$0xff]
        %v1655 = vld [vmem:[%s1642 + $0x60] sm:$0xff]
        %v1656 = vld [vmem:[%s1642 + $0x68] sm:$0xff]
        %v1657 = vld [vmem:[%s1642 + $0x70] sm:$0xff]
        %v1658 = vld [vmem:[%s1642 + $0x78] sm:$0xff]
        %1659 = vmatprep.subr.mxu0 0.0
        %1660 = vmatpush1.msra.mxu0 %v1643
        %1661 = vmatprep.subr.mxu0 0.0
        %1662 = vmatpush1.msra.mxu0 %v1644
        %1663 = vmatprep.subr.mxu0 0.0
        %1664 = vmatpush1.msra.mxu0 %v1645
        %1665 = vmatprep.subr.mxu0 0.0
        %1666 = vmatpush1.msra.mxu0 %v1646
        %1667 = vmatprep.subr.mxu0 0.0
        %1668 = vmatpush1.msra.mxu0 %v1647
        %1669 = vmatprep.subr.mxu0 0.0
        %1670 = vmatpush1.msra.mxu0 %v1648
        %1671 = vmatprep.subr.mxu0 0.0
        %1672 = vmatpush1.msra.mxu0 %v1649
        %1673 = vmatprep.subr.mxu0 0.0
        %1674 = vmatpush1.msra.mxu0 %v1650
        %1675 = vmatprep.subr.mxu0 0.0
        %1676 = vmatpush1.msra.mxu0 %v1651
        %1677 = vmatprep.subr.mxu0 0.0
        %1678 = vmatpush1.msra.mxu0 %v1652
        %1679 = vmatprep.subr.mxu0 0.0
        %1680 = vmatpush1.msra.mxu0 %v1653
        %1681 = vmatprep.subr.mxu0 0.0
        %1682 = vmatpush1.msra.mxu0 %v1654
        %1683 = vmatprep.subr.mxu0 0.0
        %1684 = vmatpush1.msra.mxu0 %v1655
        %1685 = vmatprep.subr.mxu0 0.0
        %1686 = vmatpush1.msra.mxu0 %v1656
        %1687 = vmatprep.subr.mxu0 0.0
        %1688 = vmatpush1.msra.mxu0 %v1657
        %1689 = vmatprep.subr.mxu0 0.0
        %1690 = vmatpush1.msra.mxu0 %v1658
        %1691 = vmatprep.subr.mxu0 0.0
        %1692 = vmatpush1.msra.mxu0 0.0
        %1693 = vmatprep.subr.mxu0 0.0
        %1694 = vmatpush1.msra.mxu0 0.0
        %1695 = vmatprep.subr.mxu0 0.0
        %1696 = vmatpush1.msra.mxu0 0.0
        %1697 = vmatprep.subr.mxu0 0.0
        %1698 = vmatpush1.msra.mxu0 0.0
        %1699 = vmatprep.subr.mxu0 0.0
        %1700 = vmatpush1.msra.mxu0 0.0
        %1701 = vmatprep.subr.mxu0 0.0
        %1702 = vmatpush1.msra.mxu0 0.0
        %1703 = vmatprep.subr.mxu0 0.0
        %1704 = vmatpush1.msra.mxu0 0.0
        %1705 = vmatprep.subr.mxu0 0.0
        %1706 = vmatpush1.msra.mxu0 0.0
        %1707 = vmatprep.subr.mxu0 0.0
        %1708 = vmatpush1.msra.mxu0 0.0
        %1709 = vmatprep.subr.mxu0 0.0
        %1710 = vmatpush1.msra.mxu0 0.0
        %1711 = vmatprep.subr.mxu0 0.0
        %1712 = vmatpush1.msra.mxu0 0.0
        %1713 = vmatprep.subr.mxu0 0.0
        %1714 = vmatpush1.msra.mxu0 0.0
        %1715 = vmatprep.subr.mxu0 0.0
        %1716 = vmatpush1.msra.mxu0 0.0
        %1717 = vmatprep.subr.mxu0 0.0
        %1718 = vmatpush1.msra.mxu0 0.0
        %1719 = vmatprep.subr.mxu0 0.0
        %1720 = vmatpush1.msra.mxu0 0.0
        %1721 = vmatprep.subr.mxu0 0.0
        %1722 = vmatpush1.msra.mxu0 0.0
        %1723 = vmatprep.mubr.f32.mxu0 0.0
        %1724 = vmatmul.mubr.f32.gmra.mrb[0].mxu0 %v1638
        %v1725 = vpop.f32.mrb[0].mxu0
        %v1726 = vadd.f32 0.0, %v1725
        %v1727 = vpop.f32.mrb[0].mxu0
        %1728 = vmatprep.mubr.f32.mxu0 0.0
        %1729 = vmatmul.mubr.f32.gmra.mrb[0].mxu0 %v1639
        %v1730 = vpop.f32.mrb[0].mxu0
        %v1731 = vadd.f32 0.0, %v1730
        %v1732 = vpop.f32.mrb[0].mxu0
        %1733 = vmatprep.mubr.f32.mxu0 0.0
        %1734 = vmatmul.mubr.f32.gmra.mrb[0].mxu0 %v1640
        %v1735 = vpop.f32.mrb[0].mxu0
        %v1736 = vadd.f32 0.0, %v1735
        %v1737 = vpop.f32.mrb[0].mxu0
        %1738 = vmatprep.mubr.f32.mxu0 0.0
        %1739 = vmatmul.mubr.f32.gmra.mrb[0].mxu0 %v1641
        %v1740 = vpop.f32.mrb[0].mxu0
        %v1741 = vadd.f32 0.0, %v1740
        %v1742 = vpop.f32.mrb[0].mxu0
        %1743 = vdwg.mxu0
        %v1744 = vadd.f32 %v1634, %v1726
        %v1745 = vadd.f32 %v1635, %v1731
        %v1746 = vadd.f32 %v1636, %v1736
        %v1747 = vadd.f32 %v1637, %v1741
        %v1748 = vld [vmem:[#allocation3] sm:$0xff]
        %v1749 = vld [vmem:[#allocation3 + $0x10] sm:$0xff]
        %v1750 = vld [vmem:[#allocation3 + $0x20] sm:$0xff]
        %v1751 = vld [vmem:[#allocation3 + $0x30] sm:$0xff]
        %v1752 = vld [vmem:[#allocation16] sm:$0xff]
        %v1753 = vld [vmem:[#allocation16 + $0x8] sm:$0xff]
        %v1754 = vld [vmem:[#allocation16 + $0x10] sm:$0xff]
        %v1755 = vld [vmem:[#allocation16 + $0x18] sm:$0xff]
        %v1756 = vld [vmem:[#allocation16 + $0x20] sm:$0xff]
        %v1757 = vld [vmem:[#allocation16 + $0x28] sm:$0xff]
        %v1758 = vld [vmem:[#allocation16 + $0x30] sm:$0xff]
        %v1759 = vld [vmem:[#allocation16 + $0x38] sm:$0xff]
        %v1760 = vld [vmem:[#allocation16 + $0x40] sm:$0xff]
        %v1761 = vld [vmem:[#allocation16 + $0x48] sm:$0xff]
        %v1762 = vld [vmem:[#allocation16 + $0x50] sm:$0xff]
        %v1763 = vld [vmem:[#allocation16 + $0x58] sm:$0xff]
        %v1764 = vld [vmem:[#allocation16 + $0x60] sm:$0xff]
        %v1765 = vld [vmem:[#allocation16 + $0x68] sm:$0xff]
        %v1766 = vld [vmem:[#allocation16 + $0x70] sm:$0xff]
        %v1767 = vld [vmem:[#allocation16 + $0x78] sm:$0xff]
        %1768 = vmatprep.subr.mxu0 0.0
        %1769 = vmatpush1.msra.mxu0 %v1752
        %1770 = vmatprep.subr.mxu0 0.0
        %1771 = vmatpush1.msra.mxu0 %v1753
        %1772 = vmatprep.subr.mxu0 0.0
        %1773 = vmatpush1.msra.mxu0 %v1754
        %1774 = vmatprep.subr.mxu0 0.0
        %1775 = vmatpush1.msra.mxu0 %v1755
        %1776 = vmatprep.subr.mxu0 0.0
        %1777 = vmatpush1.msra.mxu0 %v1756
        %1778 = vmatprep.subr.mxu0 0.0
        %1779 = vmatpush1.msra.mxu0 %v1757
        %1780 = vmatprep.subr.mxu0 0.0
        %1781 = vmatpush1.msra.mxu0 %v1758
        %1782 = vmatprep.subr.mxu0 0.0
        %1783 = vmatpush1.msra.mxu0 %v1759
        %1784 = vmatprep.subr.mxu0 0.0
        %1785 = vmatpush1.msra.mxu0 %v1760
        %1786 = vmatprep.subr.mxu0 0.0
        %1787 = vmatpush1.msra.mxu0 %v1761
        %1788 = vmatprep.subr.mxu0 0.0
        %1789 = vmatpush1.msra.mxu0 %v1762
        %1790 = vmatprep.subr.mxu0 0.0
        %1791 = vmatpush1.msra.mxu0 %v1763
        %1792 = vmatprep.subr.mxu0 0.0
        %1793 = vmatpush1.msra.mxu0 %v1764
        %1794 = vmatprep.subr.mxu0 0.0
        %1795 = vmatpush1.msra.mxu0 %v1765
        %1796 = vmatprep.subr.mxu0 0.0
        %1797 = vmatpush1.msra.mxu0 %v1766
        %1798 = vmatprep.subr.mxu0 0.0
        %1799 = vmatpush1.msra.mxu0 %v1767
        %1800 = vmatprep.subr.mxu0 0.0
        %1801 = vmatpush1.msra.mxu0 0.0
        %1802 = vmatprep.subr.mxu0 0.0
        %1803 = vmatpush1.msra.mxu0 0.0
        %1804 = vmatprep.subr.mxu0 0.0
        %1805 = vmatpush1.msra.mxu0 0.0
        %1806 = vmatprep.subr.mxu0 0.0
        %1807 = vmatpush1.msra.mxu0 0.0
        %1808 = vmatprep.subr.mxu0 0.0
        %1809 = vmatpush1.msra.mxu0 0.0
        %1810 = vmatprep.subr.mxu0 0.0
        %1811 = vmatpush1.msra.mxu0 0.0
        %1812 = vmatprep.subr.mxu0 0.0
        %1813 = vmatpush1.msra.mxu0 0.0
        %1814 = vmatprep.subr.mxu0 0.0
        %1815 = vmatpush1.msra.mxu0 0.0
        %1816 = vmatprep.subr.mxu0 0.0
        %1817 = vmatpush1.msra.mxu0 0.0
        %1818 = vmatprep.subr.mxu0 0.0
        %1819 = vmatpush1.msra.mxu0 0.0
        %1820 = vmatprep.subr.mxu0 0.0
        %1821 = vmatpush1.msra.mxu0 0.0
        %1822 = vmatprep.subr.mxu0 0.0
        %1823 = vmatpush1.msra.mxu0 0.0
        %1824 = vmatprep.subr.mxu0 0.0
        %1825 = vmatpush1.msra.mxu0 0.0
        %1826 = vmatprep.subr.mxu0 0.0
        %1827 = vmatpush1.msra.mxu0 0.0
        %1828 = vmatprep.subr.mxu0 0.0
        %1829 = vmatpush1.msra.mxu0 0.0
        %1830 = vmatprep.subr.mxu0 0.0
        %1831 = vmatpush1.msra.mxu0 0.0
        %1832 = vmatprep.mubr.f32.mxu0 0.0
        %1833 = vmatmul.mubr.f32.gmra.mrb[0].mxu0 %v1748
        %v1834 = vpop.f32.mrb[0].mxu0
        %v1835 = vadd.f32 0.0, %v1834
        %v1836 = vpop.f32.mrb[0].mxu0
        %1837 = vmatprep.mubr.f32.mxu0 0.0
        %1838 = vmatmul.mubr.f32.gmra.mrb[0].mxu0 %v1749
        %v1839 = vpop.f32.mrb[0].mxu0
        %v1840 = vadd.f32 0.0, %v1839
        %v1841 = vpop.f32.mrb[0].mxu0
        %1842 = vmatprep.mubr.f32.mxu0 0.0
        %1843 = vmatmul.mubr.f32.gmra.mrb[0].mxu0 %v1750
        %v1844 = vpop.f32.mrb[0].mxu0
        %v1845 = vadd.f32 0.0, %v1844
        %v1846 = vpop.f32.mrb[0].mxu0
        %1847 = vmatprep.mubr.f32.mxu0 0.0
        %1848 = vmatmul.mubr.f32.gmra.mrb[0].mxu0 %v1751
        %v1849 = vpop.f32.mrb[0].mxu0
        %v1850 = vadd.f32 0.0, %v1849
        %v1851 = vpop.f32.mrb[0].mxu0
        %1852 = vdwg.mxu0
        %v1853 = vadd.f32 %v1744, %v1835
        %v1854 = vadd.f32 %v1745, %v1840
        %v1855 = vadd.f32 %v1746, %v1845
        %v1856 = vadd.f32 %v1747, %v1850
        %v1857 = vld [vmem:[#allocation3 + $0x1] sm:$0xff]
        %v1858 = vld [vmem:[#allocation3 + $0x11] sm:$0xff]
        %v1859 = vld [vmem:[#allocation3 + $0x21] sm:$0xff]
        %v1860 = vld [vmem:[#allocation3 + $0x31] sm:$0xff]
        %s1861 = scalar_lea.vmem [#allocation16], 128
        %v1862 = vld [vmem:[%s1861] sm:$0xff]
        %v1863 = vld [vmem:[%s1861 + $0x8] sm:$0xff]
        %v1864 = vld [vmem:[%s1861 + $0x10] sm:$0xff]
        %v1865 = vld [vmem:[%s1861 + $0x18] sm:$0xff]
        %v1866 = vld [vmem:[%s1861 + $0x20] sm:$0xff]
        %v1867 = vld [vmem:[%s1861 + $0x28] sm:$0xff]
        %v1868 = vld [vmem:[%s1861 + $0x30] sm:$0xff]
        %v1869 = vld [vmem:[%s1861 + $0x38] sm:$0xff]
        %v1870 = vld [vmem:[%s1861 + $0x40] sm:$0xff]
        %v1871 = vld [vmem:[%s1861 + $0x48] sm:$0xff]
        %v1872 = vld [vmem:[%s1861 + $0x50] sm:$0xff]
        %v1873 = vld [vmem:[%s1861 + $0x58] sm:$0xff]
        %v1874 = vld [vmem:[%s1861 + $0x60] sm:$0xff]
        %v1875 = vld [vmem:[%s1861 + $0x68] sm:$0xff]
        %v1876 = vld [vmem:[%s1861 + $0x70] sm:$0xff]
        %v1877 = vld [vmem:[%s1861 + $0x78] sm:$0xff]
        %1878 = vmatprep.subr.mxu0 0.0
        %1879 = vmatpush1.msra.mxu0 %v1862
        %1880 = vmatprep.subr.mxu0 0.0
        %1881 = vmatpush1.msra.mxu0 %v1863
        %1882 = vmatprep.subr.mxu0 0.0
        %1883 = vmatpush1.msra.mxu0 %v1864
        %1884 = vmatprep.subr.mxu0 0.0
        %1885 = vmatpush1.msra.mxu0 %v1865
        %1886 = vmatprep.subr.mxu0 0.0
        %1887 = vmatpush1.msra.mxu0 %v1866
        %1888 = vmatprep.subr.mxu0 0.0
        %1889 = vmatpush1.msra.mxu0 %v1867
        %1890 = vmatprep.subr.mxu0 0.0
        %1891 = vmatpush1.msra.mxu0 %v1868
        %1892 = vmatprep.subr.mxu0 0.0
        %1893 = vmatpush1.msra.mxu0 %v1869
        %1894 = vmatprep.subr.mxu0 0.0
        %1895 = vmatpush1.msra.mxu0 %v1870
        %1896 = vmatprep.subr.mxu0 0.0
        %1897 = vmatpush1.msra.mxu0 %v1871
        %1898 = vmatprep.subr.mxu0 0.0
        %1899 = vmatpush1.msra.mxu0 %v1872
        %1900 = vmatprep.subr.mxu0 0.0
        %1901 = vmatpush1.msra.mxu0 %v1873
        %1902 = vmatprep.subr.mxu0 0.0
        %1903 = vmatpush1.msra.mxu0 %v1874
        %1904 = vmatprep.subr.mxu0 0.0
        %1905 = vmatpush1.msra.mxu0 %v1875
        %1906 = vmatprep.subr.mxu0 0.0
        %1907 = vmatpush1.msra.mxu0 %v1876
        %1908 = vmatprep.subr.mxu0 0.0
        %1909 = vmatpush1.msra.mxu0 %v1877
        %1910 = vmatprep.subr.mxu0 0.0
        %1911 = vmatpush1.msra.mxu0 0.0
        %1912 = vmatprep.subr.mxu0 0.0
        %1913 = vmatpush1.msra.mxu0 0.0
        %1914 = vmatprep.subr.mxu0 0.0
        %1915 = vmatpush1.msra.mxu0 0.0
        %1916 = vmatprep.subr.mxu0 0.0
        %1917 = vmatpush1.msra.mxu0 0.0
        %1918 = vmatprep.subr.mxu0 0.0
        %1919 = vmatpush1.msra.mxu0 0.0
        %1920 = vmatprep.subr.mxu0 0.0
        %1921 = vmatpush1.msra.mxu0 0.0
        %1922 = vmatprep.subr.mxu0 0.0
        %1923 = vmatpush1.msra.mxu0 0.0
        %1924 = vmatprep.subr.mxu0 0.0
        %1925 = vmatpush1.msra.mxu0 0.0
        %1926 = vmatprep.subr.mxu0 0.0
        %1927 = vmatpush1.msra.mxu0 0.0
        %1928 = vmatprep.subr.mxu0 0.0
        %1929 = vmatpush1.msra.mxu0 0.0
        %1930 = vmatprep.subr.mxu0 0.0
        %1931 = vmatpush1.msra.mxu0 0.0
        %1932 = vmatprep.subr.mxu0 0.0
        %1933 = vmatpush1.msra.mxu0 0.0
        %1934 = vmatprep.subr.mxu0 0.0
        %1935 = vmatpush1.msra.mxu0 0.0
        %1936 = vmatprep.subr.mxu0 0.0
        %1937 = vmatpush1.msra.mxu0 0.0
        %1938 = vmatprep.subr.mxu0 0.0
        %1939 = vmatpush1.msra.mxu0 0.0
        %1940 = vmatprep.subr.mxu0 0.0
        %1941 = vmatpush1.msra.mxu0 0.0
        %1942 = vmatprep.mubr.f32.mxu0 0.0
        %1943 = vmatmul.mubr.f32.gmra.mrb[0].mxu0 %v1857
        %v1944 = vpop.f32.mrb[0].mxu0
        %v1945 = vadd.f32 0.0, %v1944
        %v1946 = vpop.f32.mrb[0].mxu0
        %1947 = vmatprep.mubr.f32.mxu0 0.0
        %1948 = vmatmul.mubr.f32.gmra.mrb[0].mxu0 %v1858
        %v1949 = vpop.f32.mrb[0].mxu0
        %v1950 = vadd.f32 0.0, %v1949
        %v1951 = vpop.f32.mrb[0].mxu0
        %1952 = vmatprep.mubr.f32.mxu0 0.0
        %1953 = vmatmul.mubr.f32.gmra.mrb[0].mxu0 %v1859
        %v1954 = vpop.f32.mrb[0].mxu0
        %v1955 = vadd.f32 0.0, %v1954
        %v1956 = vpop.f32.mrb[0].mxu0
        %1957 = vmatprep.mubr.f32.mxu0 0.0
        %1958 = vmatmul.mubr.f32.gmra.mrb[0].mxu0 %v1860
        %v1959 = vpop.f32.mrb[0].mxu0
        %v1960 = vadd.f32 0.0, %v1959
        %v1961 = vpop.f32.mrb[0].mxu0
        %1962 = vdwg.mxu0
        %v1963 = vadd.f32 %v1853, %v1945
        %v1964 = vadd.f32 %v1854, %v1950
        %v1965 = vadd.f32 %v1855, %v1955
        %v1966 = vadd.f32 %v1856, %v1960
        %v1967 = vld [vmem:[#allocation3 + $0x2] sm:$0xff]
        %v1968 = vld [vmem:[#allocation3 + $0x12] sm:$0xff]
        %v1969 = vld [vmem:[#allocation3 + $0x22] sm:$0xff]
        %v1970 = vld [vmem:[#allocation3 + $0x32] sm:$0xff]
        %s1971 = scalar_lea.vmem [#allocation16], 256
        %v1972 = vld [vmem:[%s1971] sm:$0xff]
        %v1973 = vld [vmem:[%s1971 + $0x8] sm:$0xff]
        %v1974 = vld [vmem:[%s1971 + $0x10] sm:$0xff]
        %v1975 = vld [vmem:[%s1971 + $0x18] sm:$0xff]
        %v1976 = vld [vmem:[%s1971 + $0x20] sm:$0xff]
        %v1977 = vld [vmem:[%s1971 + $0x28] sm:$0xff]
        %v1978 = vld [vmem:[%s1971 + $0x30] sm:$0xff]
        %v1979 = vld [vmem:[%s1971 + $0x38] sm:$0xff]
        %v1980 = vld [vmem:[%s1971 + $0x40] sm:$0xff]
        %v1981 = vld [vmem:[%s1971 + $0x48] sm:$0xff]
        %v1982 = vld [vmem:[%s1971 + $0x50] sm:$0xff]
        %v1983 = vld [vmem:[%s1971 + $0x58] sm:$0xff]
        %v1984 = vld [vmem:[%s1971 + $0x60] sm:$0xff]
        %v1985 = vld [vmem:[%s1971 + $0x68] sm:$0xff]
        %v1986 = vld [vmem:[%s1971 + $0x70] sm:$0xff]
        %v1987 = vld [vmem:[%s1971 + $0x78] sm:$0xff]
        %1988 = vmatprep.subr.mxu0 0.0
        %1989 = vmatpush1.msra.mxu0 %v1972
        %1990 = vmatprep.subr.mxu0 0.0
        %1991 = vmatpush1.msra.mxu0 %v1973
        %1992 = vmatprep.subr.mxu0 0.0
        %1993 = vmatpush1.msra.mxu0 %v1974
        %1994 = vmatprep.subr.mxu0 0.0
        %1995 = vmatpush1.msra.mxu0 %v1975
        %1996 = vmatprep.subr.mxu0 0.0
        %1997 = vmatpush1.msra.mxu0 %v1976
        %1998 = vmatprep.subr.mxu0 0.0
        %1999 = vmatpush1.msra.mxu0 %v1977
        %2000 = vmatprep.subr.mxu0 0.0
        %2001 = vmatpush1.msra.mxu0 %v1978
        %2002 = vmatprep.subr.mxu0 0.0
        %2003 = vmatpush1.msra.mxu0 %v1979
        %2004 = vmatprep.subr.mxu0 0.0
        %2005 = vmatpush1.msra.mxu0 %v1980
        %2006 = vmatprep.subr.mxu0 0.0
        %2007 = vmatpush1.msra.mxu0 %v1981
        %2008 = vmatprep.subr.mxu0 0.0
        %2009 = vmatpush1.msra.mxu0 %v1982
        %2010 = vmatprep.subr.mxu0 0.0
        %2011 = vmatpush1.msra.mxu0 %v1983
        %2012 = vmatprep.subr.mxu0 0.0
        %2013 = vmatpush1.msra.mxu0 %v1984
        %2014 = vmatprep.subr.mxu0 0.0
        %2015 = vmatpush1.msra.mxu0 %v1985
        %2016 = vmatprep.subr.mxu0 0.0
        %2017 = vmatpush1.msra.mxu0 %v1986
        %2018 = vmatprep.subr.mxu0 0.0
        %2019 = vmatpush1.msra.mxu0 %v1987
        %2020 = vmatprep.subr.mxu0 0.0
        %2021 = vmatpush1.msra.mxu0 0.0
        %2022 = vmatprep.subr.mxu0 0.0
        %2023 = vmatpush1.msra.mxu0 0.0
        %2024 = vmatprep.subr.mxu0 0.0
        %2025 = vmatpush1.msra.mxu0 0.0
        %2026 = vmatprep.subr.mxu0 0.0
        %2027 = vmatpush1.msra.mxu0 0.0
        %2028 = vmatprep.subr.mxu0 0.0
        %2029 = vmatpush1.msra.mxu0 0.0
        %2030 = vmatprep.subr.mxu0 0.0
        %2031 = vmatpush1.msra.mxu0 0.0
        %2032 = vmatprep.subr.mxu0 0.0
        %2033 = vmatpush1.msra.mxu0 0.0
        %2034 = vmatprep.subr.mxu0 0.0
        %2035 = vmatpush1.msra.mxu0 0.0
        %2036 = vmatprep.subr.mxu0 0.0
        %2037 = vmatpush1.msra.mxu0 0.0
        %2038 = vmatprep.subr.mxu0 0.0
        %2039 = vmatpush1.msra.mxu0 0.0
        %2040 = vmatprep.subr.mxu0 0.0
        %2041 = vmatpush1.msra.mxu0 0.0
        %2042 = vmatprep.subr.mxu0 0.0
        %2043 = vmatpush1.msra.mxu0 0.0
        %2044 = vmatprep.subr.mxu0 0.0
        %2045 = vmatpush1.msra.mxu0 0.0
        %2046 = vmatprep.subr.mxu0 0.0
        %2047 = vmatpush1.msra.mxu0 0.0
        %2048 = vmatprep.subr.mxu0 0.0
        %2049 = vmatpush1.msra.mxu0 0.0
        %2050 = vmatprep.subr.mxu0 0.0
        %2051 = vmatpush1.msra.mxu0 0.0
        %2052 = vmatprep.mubr.f32.mxu0 0.0
        %2053 = vmatmul.mubr.f32.gmra.mrb[0].mxu0 %v1967
        %v2054 = vpop.f32.mrb[0].mxu0
        %v2055 = vadd.f32 0.0, %v2054
        %v2056 = vpop.f32.mrb[0].mxu0
        %2057 = vmatprep.mubr.f32.mxu0 0.0
        %2058 = vmatmul.mubr.f32.gmra.mrb[0].mxu0 %v1968
        %v2059 = vpop.f32.mrb[0].mxu0
        %v2060 = vadd.f32 0.0, %v2059
        %v2061 = vpop.f32.mrb[0].mxu0
        %2062 = vmatprep.mubr.f32.mxu0 0.0
        %2063 = vmatmul.mubr.f32.gmra.mrb[0].mxu0 %v1969
        %v2064 = vpop.f32.mrb[0].mxu0
        %v2065 = vadd.f32 0.0, %v2064
        %v2066 = vpop.f32.mrb[0].mxu0
        %2067 = vmatprep.mubr.f32.mxu0 0.0
        %2068 = vmatmul.mubr.f32.gmra.mrb[0].mxu0 %v1970
        %v2069 = vpop.f32.mrb[0].mxu0
        %v2070 = vadd.f32 0.0, %v2069
        %v2071 = vpop.f32.mrb[0].mxu0
        %2072 = vdwg.mxu0
        %v2073 = vadd.f32 %v1963, %v2055
        %v2074 = vadd.f32 %v1964, %v2060
        %v2075 = vadd.f32 %v1965, %v2065
        %v2076 = vadd.f32 %v1966, %v2070
        %v2077 = vld [vmem:[%s741] sm:$0xff]
        %v2078 = vld [vmem:[%s741 + $0x10] sm:$0xff]
        %v2079 = vld [vmem:[%s741 + $0x20] sm:$0xff]
        %v2080 = vld [vmem:[%s741 + $0x30] sm:$0xff]
        %s2081 = scalar_lea.vmem [#allocation16], 384
        %v2082 = vld [vmem:[%s2081] sm:$0xff]
        %v2083 = vld [vmem:[%s2081 + $0x8] sm:$0xff]
        %v2084 = vld [vmem:[%s2081 + $0x10] sm:$0xff]
        %v2085 = vld [vmem:[%s2081 + $0x18] sm:$0xff]
        %v2086 = vld [vmem:[%s2081 + $0x20] sm:$0xff]
        %v2087 = vld [vmem:[%s2081 + $0x28] sm:$0xff]
        %v2088 = vld [vmem:[%s2081 + $0x30] sm:$0xff]
        %v2089 = vld [vmem:[%s2081 + $0x38] sm:$0xff]
        %v2090 = vld [vmem:[%s2081 + $0x40] sm:$0xff]
        %v2091 = vld [vmem:[%s2081 + $0x48] sm:$0xff]
        %v2092 = vld [vmem:[%s2081 + $0x50] sm:$0xff]
        %v2093 = vld [vmem:[%s2081 + $0x58] sm:$0xff]
        %v2094 = vld [vmem:[%s2081 + $0x60] sm:$0xff]
        %v2095 = vld [vmem:[%s2081 + $0x68] sm:$0xff]
        %v2096 = vld [vmem:[%s2081 + $0x70] sm:$0xff]
        %v2097 = vld [vmem:[%s2081 + $0x78] sm:$0xff]
        %2098 = vmatprep.subr.mxu0 0.0
        %2099 = vmatpush1.msra.mxu0 %v2082
        %2100 = vmatprep.subr.mxu0 0.0
        %2101 = vmatpush1.msra.mxu0 %v2083
        %2102 = vmatprep.subr.mxu0 0.0
        %2103 = vmatpush1.msra.mxu0 %v2084
        %2104 = vmatprep.subr.mxu0 0.0
        %2105 = vmatpush1.msra.mxu0 %v2085
        %2106 = vmatprep.subr.mxu0 0.0
        %2107 = vmatpush1.msra.mxu0 %v2086
        %2108 = vmatprep.subr.mxu0 0.0
        %2109 = vmatpush1.msra.mxu0 %v2087
        %2110 = vmatprep.subr.mxu0 0.0
        %2111 = vmatpush1.msra.mxu0 %v2088
        %2112 = vmatprep.subr.mxu0 0.0
        %2113 = vmatpush1.msra.mxu0 %v2089
        %2114 = vmatprep.subr.mxu0 0.0
        %2115 = vmatpush1.msra.mxu0 %v2090
        %2116 = vmatprep.subr.mxu0 0.0
        %2117 = vmatpush1.msra.mxu0 %v2091
        %2118 = vmatprep.subr.mxu0 0.0
        %2119 = vmatpush1.msra.mxu0 %v2092
        %2120 = vmatprep.subr.mxu0 0.0
        %2121 = vmatpush1.msra.mxu0 %v2093
        %2122 = vmatprep.subr.mxu0 0.0
        %2123 = vmatpush1.msra.mxu0 %v2094
        %2124 = vmatprep.subr.mxu0 0.0
        %2125 = vmatpush1.msra.mxu0 %v2095
        %2126 = vmatprep.subr.mxu0 0.0
        %2127 = vmatpush1.msra.mxu0 %v2096
        %2128 = vmatprep.subr.mxu0 0.0
        %2129 = vmatpush1.msra.mxu0 %v2097
        %2130 = vmatprep.subr.mxu0 0.0
        %2131 = vmatpush1.msra.mxu0 0.0
        %2132 = vmatprep.subr.mxu0 0.0
        %2133 = vmatpush1.msra.mxu0 0.0
        %2134 = vmatprep.subr.mxu0 0.0
        %2135 = vmatpush1.msra.mxu0 0.0
        %2136 = vmatprep.subr.mxu0 0.0
        %2137 = vmatpush1.msra.mxu0 0.0
        %2138 = vmatprep.subr.mxu0 0.0
        %2139 = vmatpush1.msra.mxu0 0.0
        %2140 = vmatprep.subr.mxu0 0.0
        %2141 = vmatpush1.msra.mxu0 0.0
        %2142 = vmatprep.subr.mxu0 0.0
        %2143 = vmatpush1.msra.mxu0 0.0
        %2144 = vmatprep.subr.mxu0 0.0
        %2145 = vmatpush1.msra.mxu0 0.0
        %2146 = vmatprep.subr.mxu0 0.0
        %2147 = vmatpush1.msra.mxu0 0.0
        %2148 = vmatprep.subr.mxu0 0.0
        %2149 = vmatpush1.msra.mxu0 0.0
        %2150 = vmatprep.subr.mxu0 0.0
        %2151 = vmatpush1.msra.mxu0 0.0
        %2152 = vmatprep.subr.mxu0 0.0
        %2153 = vmatpush1.msra.mxu0 0.0
        %2154 = vmatprep.subr.mxu0 0.0
        %2155 = vmatpush1.msra.mxu0 0.0
        %2156 = vmatprep.subr.mxu0 0.0
        %2157 = vmatpush1.msra.mxu0 0.0
        %2158 = vmatprep.subr.mxu0 0.0
        %2159 = vmatpush1.msra.mxu0 0.0
        %2160 = vmatprep.subr.mxu0 0.0
        %2161 = vmatpush1.msra.mxu0 0.0
        %2162 = vmatprep.mubr.f32.mxu0 0.0
        %2163 = vmatmul.mubr.f32.gmra.mrb[0].mxu0 %v2077
        %v2164 = vpop.f32.mrb[0].mxu0
        %v2165 = vadd.f32 0.0, %v2164
        %v2166 = vpop.f32.mrb[0].mxu0
        %2167 = vmatprep.mubr.f32.mxu0 0.0
        %2168 = vmatmul.mubr.f32.gmra.mrb[0].mxu0 %v2078
        %v2169 = vpop.f32.mrb[0].mxu0
        %v2170 = vadd.f32 0.0, %v2169
        %v2171 = vpop.f32.mrb[0].mxu0
        %2172 = vmatprep.mubr.f32.mxu0 0.0
        %2173 = vmatmul.mubr.f32.gmra.mrb[0].mxu0 %v2079
        %v2174 = vpop.f32.mrb[0].mxu0
        %v2175 = vadd.f32 0.0, %v2174
        %v2176 = vpop.f32.mrb[0].mxu0
        %2177 = vmatprep.mubr.f32.mxu0 0.0
        %2178 = vmatmul.mubr.f32.gmra.mrb[0].mxu0 %v2080
        %v2179 = vpop.f32.mrb[0].mxu0
        %v2180 = vadd.f32 0.0, %v2179
        %v2181 = vpop.f32.mrb[0].mxu0
        %2182 = vdwg.mxu0
        %v2183 = vadd.f32 %v2073, %v2165
        %v2184 = vadd.f32 %v2074, %v2170
        %v2185 = vadd.f32 %v2075, %v2175
        %v2186 = vadd.f32 %v2076, %v2180
        %v2187 = vld [vmem:[%s741 + $0x1] sm:$0xff]
        %v2188 = vld [vmem:[%s741 + $0x11] sm:$0xff]
        %v2189 = vld [vmem:[%s741 + $0x21] sm:$0xff]
        %v2190 = vld [vmem:[%s741 + $0x31] sm:$0xff]
        %s2191 = scalar_lea.vmem [#allocation16], 512
        %v2192 = vld [vmem:[%s2191] sm:$0xff]
        %v2193 = vld [vmem:[%s2191 + $0x8] sm:$0xff]
        %v2194 = vld [vmem:[%s2191 + $0x10] sm:$0xff]
        %v2195 = vld [vmem:[%s2191 + $0x18] sm:$0xff]
        %v2196 = vld [vmem:[%s2191 + $0x20] sm:$0xff]
        %v2197 = vld [vmem:[%s2191 + $0x28] sm:$0xff]
        %v2198 = vld [vmem:[%s2191 + $0x30] sm:$0xff]
        %v2199 = vld [vmem:[%s2191 + $0x38] sm:$0xff]
        %v2200 = vld [vmem:[%s2191 + $0x40] sm:$0xff]
        %v2201 = vld [vmem:[%s2191 + $0x48] sm:$0xff]
        %v2202 = vld [vmem:[%s2191 + $0x50] sm:$0xff]
        %v2203 = vld [vmem:[%s2191 + $0x58] sm:$0xff]
        %v2204 = vld [vmem:[%s2191 + $0x60] sm:$0xff]
        %v2205 = vld [vmem:[%s2191 + $0x68] sm:$0xff]
        %v2206 = vld [vmem:[%s2191 + $0x70] sm:$0xff]
        %v2207 = vld [vmem:[%s2191 + $0x78] sm:$0xff]
        %2208 = vmatprep.subr.mxu0 0.0
        %2209 = vmatpush1.msra.mxu0 %v2192
        %2210 = vmatprep.subr.mxu0 0.0
        %2211 = vmatpush1.msra.mxu0 %v2193
        %2212 = vmatprep.subr.mxu0 0.0
        %2213 = vmatpush1.msra.mxu0 %v2194
        %2214 = vmatprep.subr.mxu0 0.0
        %2215 = vmatpush1.msra.mxu0 %v2195
        %2216 = vmatprep.subr.mxu0 0.0
        %2217 = vmatpush1.msra.mxu0 %v2196
        %2218 = vmatprep.subr.mxu0 0.0
        %2219 = vmatpush1.msra.mxu0 %v2197
        %2220 = vmatprep.subr.mxu0 0.0
        %2221 = vmatpush1.msra.mxu0 %v2198
        %2222 = vmatprep.subr.mxu0 0.0
        %2223 = vmatpush1.msra.mxu0 %v2199
        %2224 = vmatprep.subr.mxu0 0.0
        %2225 = vmatpush1.msra.mxu0 %v2200
        %2226 = vmatprep.subr.mxu0 0.0
        %2227 = vmatpush1.msra.mxu0 %v2201
        %2228 = vmatprep.subr.mxu0 0.0
        %2229 = vmatpush1.msra.mxu0 %v2202
        %2230 = vmatprep.subr.mxu0 0.0
        %2231 = vmatpush1.msra.mxu0 %v2203
        %2232 = vmatprep.subr.mxu0 0.0
        %2233 = vmatpush1.msra.mxu0 %v2204
        %2234 = vmatprep.subr.mxu0 0.0
        %2235 = vmatpush1.msra.mxu0 %v2205
        %2236 = vmatprep.subr.mxu0 0.0
        %2237 = vmatpush1.msra.mxu0 %v2206
        %2238 = vmatprep.subr.mxu0 0.0
        %2239 = vmatpush1.msra.mxu0 %v2207
        %2240 = vmatprep.subr.mxu0 0.0
        %2241 = vmatpush1.msra.mxu0 0.0
        %2242 = vmatprep.subr.mxu0 0.0
        %2243 = vmatpush1.msra.mxu0 0.0
        %2244 = vmatprep.subr.mxu0 0.0
        %2245 = vmatpush1.msra.mxu0 0.0
        %2246 = vmatprep.subr.mxu0 0.0
        %2247 = vmatpush1.msra.mxu0 0.0
        %2248 = vmatprep.subr.mxu0 0.0
        %2249 = vmatpush1.msra.mxu0 0.0
        %2250 = vmatprep.subr.mxu0 0.0
        %2251 = vmatpush1.msra.mxu0 0.0
        %2252 = vmatprep.subr.mxu0 0.0
        %2253 = vmatpush1.msra.mxu0 0.0
        %2254 = vmatprep.subr.mxu0 0.0
        %2255 = vmatpush1.msra.mxu0 0.0
        %2256 = vmatprep.subr.mxu0 0.0
        %2257 = vmatpush1.msra.mxu0 0.0
        %2258 = vmatprep.subr.mxu0 0.0
        %2259 = vmatpush1.msra.mxu0 0.0
        %2260 = vmatprep.subr.mxu0 0.0
        %2261 = vmatpush1.msra.mxu0 0.0
        %2262 = vmatprep.subr.mxu0 0.0
        %2263 = vmatpush1.msra.mxu0 0.0
        %2264 = vmatprep.subr.mxu0 0.0
        %2265 = vmatpush1.msra.mxu0 0.0
        %2266 = vmatprep.subr.mxu0 0.0
        %2267 = vmatpush1.msra.mxu0 0.0
        %2268 = vmatprep.subr.mxu0 0.0
        %2269 = vmatpush1.msra.mxu0 0.0
        %2270 = vmatprep.subr.mxu0 0.0
        %2271 = vmatpush1.msra.mxu0 0.0
        %2272 = vmatprep.mubr.f32.mxu0 0.0
        %2273 = vmatmul.mubr.f32.gmra.mrb[0].mxu0 %v2187
        %v2274 = vpop.f32.mrb[0].mxu0
        %v2275 = vadd.f32 0.0, %v2274
        %v2276 = vpop.f32.mrb[0].mxu0
        %2277 = vmatprep.mubr.f32.mxu0 0.0
        %2278 = vmatmul.mubr.f32.gmra.mrb[0].mxu0 %v2188
        %v2279 = vpop.f32.mrb[0].mxu0
        %v2280 = vadd.f32 0.0, %v2279
        %v2281 = vpop.f32.mrb[0].mxu0
        %2282 = vmatprep.mubr.f32.mxu0 0.0
        %2283 = vmatmul.mubr.f32.gmra.mrb[0].mxu0 %v2189
        %v2284 = vpop.f32.mrb[0].mxu0
        %v2285 = vadd.f32 0.0, %v2284
        %v2286 = vpop.f32.mrb[0].mxu0
        %2287 = vmatprep.mubr.f32.mxu0 0.0
        %2288 = vmatmul.mubr.f32.gmra.mrb[0].mxu0 %v2190
        %v2289 = vpop.f32.mrb[0].mxu0
        %v2290 = vadd.f32 0.0, %v2289
        %v2291 = vpop.f32.mrb[0].mxu0
        %2292 = vdwg.mxu0
        %v2293 = vadd.f32 %v2183, %v2275
        %v2294 = vadd.f32 %v2184, %v2280
        %v2295 = vadd.f32 %v2185, %v2285
        %v2296 = vadd.f32 %v2186, %v2290
        %v2297 = vld [vmem:[%s741 + $0x2] sm:$0xff]
        %v2298 = vld [vmem:[%s741 + $0x12] sm:$0xff]
        %v2299 = vld [vmem:[%s741 + $0x22] sm:$0xff]
        %v2300 = vld [vmem:[%s741 + $0x32] sm:$0xff]
        %s2301 = scalar_lea.vmem [#allocation16], 640
        %v2302 = vld [vmem:[%s2301] sm:$0xff]
        %v2303 = vld [vmem:[%s2301 + $0x8] sm:$0xff]
        %v2304 = vld [vmem:[%s2301 + $0x10] sm:$0xff]
        %v2305 = vld [vmem:[%s2301 + $0x18] sm:$0xff]
        %v2306 = vld [vmem:[%s2301 + $0x20] sm:$0xff]
        %v2307 = vld [vmem:[%s2301 + $0x28] sm:$0xff]
        %v2308 = vld [vmem:[%s2301 + $0x30] sm:$0xff]
        %v2309 = vld [vmem:[%s2301 + $0x38] sm:$0xff]
        %v2310 = vld [vmem:[%s2301 + $0x40] sm:$0xff]
        %v2311 = vld [vmem:[%s2301 + $0x48] sm:$0xff]
        %v2312 = vld [vmem:[%s2301 + $0x50] sm:$0xff]
        %v2313 = vld [vmem:[%s2301 + $0x58] sm:$0xff]
        %v2314 = vld [vmem:[%s2301 + $0x60] sm:$0xff]
        %v2315 = vld [vmem:[%s2301 + $0x68] sm:$0xff]
        %v2316 = vld [vmem:[%s2301 + $0x70] sm:$0xff]
        %v2317 = vld [vmem:[%s2301 + $0x78] sm:$0xff]
        %2318 = vmatprep.subr.mxu0 0.0
        %2319 = vmatpush1.msra.mxu0 %v2302
        %2320 = vmatprep.subr.mxu0 0.0
        %2321 = vmatpush1.msra.mxu0 %v2303
        %2322 = vmatprep.subr.mxu0 0.0
        %2323 = vmatpush1.msra.mxu0 %v2304
        %2324 = vmatprep.subr.mxu0 0.0
        %2325 = vmatpush1.msra.mxu0 %v2305
        %2326 = vmatprep.subr.mxu0 0.0
        %2327 = vmatpush1.msra.mxu0 %v2306
        %2328 = vmatprep.subr.mxu0 0.0
        %2329 = vmatpush1.msra.mxu0 %v2307
        %2330 = vmatprep.subr.mxu0 0.0
        %2331 = vmatpush1.msra.mxu0 %v2308
        %2332 = vmatprep.subr.mxu0 0.0
        %2333 = vmatpush1.msra.mxu0 %v2309
        %2334 = vmatprep.subr.mxu0 0.0
        %2335 = vmatpush1.msra.mxu0 %v2310
        %2336 = vmatprep.subr.mxu0 0.0
        %2337 = vmatpush1.msra.mxu0 %v2311
        %2338 = vmatprep.subr.mxu0 0.0
        %2339 = vmatpush1.msra.mxu0 %v2312
        %2340 = vmatprep.subr.mxu0 0.0
        %2341 = vmatpush1.msra.mxu0 %v2313
        %2342 = vmatprep.subr.mxu0 0.0
        %2343 = vmatpush1.msra.mxu0 %v2314
        %2344 = vmatprep.subr.mxu0 0.0
        %2345 = vmatpush1.msra.mxu0 %v2315
        %2346 = vmatprep.subr.mxu0 0.0
        %2347 = vmatpush1.msra.mxu0 %v2316
        %2348 = vmatprep.subr.mxu0 0.0
        %2349 = vmatpush1.msra.mxu0 %v2317
        %2350 = vmatprep.subr.mxu0 0.0
        %2351 = vmatpush1.msra.mxu0 0.0
        %2352 = vmatprep.subr.mxu0 0.0
        %2353 = vmatpush1.msra.mxu0 0.0
        %2354 = vmatprep.subr.mxu0 0.0
        %2355 = vmatpush1.msra.mxu0 0.0
        %2356 = vmatprep.subr.mxu0 0.0
        %2357 = vmatpush1.msra.mxu0 0.0
        %2358 = vmatprep.subr.mxu0 0.0
        %2359 = vmatpush1.msra.mxu0 0.0
        %2360 = vmatprep.subr.mxu0 0.0
        %2361 = vmatpush1.msra.mxu0 0.0
        %2362 = vmatprep.subr.mxu0 0.0
        %2363 = vmatpush1.msra.mxu0 0.0
        %2364 = vmatprep.subr.mxu0 0.0
        %2365 = vmatpush1.msra.mxu0 0.0
        %2366 = vmatprep.subr.mxu0 0.0
        %2367 = vmatpush1.msra.mxu0 0.0
        %2368 = vmatprep.subr.mxu0 0.0
        %2369 = vmatpush1.msra.mxu0 0.0
        %2370 = vmatprep.subr.mxu0 0.0
        %2371 = vmatpush1.msra.mxu0 0.0
        %2372 = vmatprep.subr.mxu0 0.0
        %2373 = vmatpush1.msra.mxu0 0.0
        %2374 = vmatprep.subr.mxu0 0.0
        %2375 = vmatpush1.msra.mxu0 0.0
        %2376 = vmatprep.subr.mxu0 0.0
        %2377 = vmatpush1.msra.mxu0 0.0
        %2378 = vmatprep.subr.mxu0 0.0
        %2379 = vmatpush1.msra.mxu0 0.0
        %2380 = vmatprep.subr.mxu0 0.0
        %2381 = vmatpush1.msra.mxu0 0.0
        %2382 = vmatprep.mubr.f32.mxu0 0.0
        %2383 = vmatmul.mubr.f32.gmra.mrb[0].mxu0 %v2297
        %v2384 = vpop.f32.mrb[0].mxu0
        %v2385 = vadd.f32 0.0, %v2384
        %v2386 = vpop.f32.mrb[0].mxu0
        %2387 = vmatprep.mubr.f32.mxu0 0.0
        %2388 = vmatmul.mubr.f32.gmra.mrb[0].mxu0 %v2298
        %v2389 = vpop.f32.mrb[0].mxu0
        %v2390 = vadd.f32 0.0, %v2389
        %v2391 = vpop.f32.mrb[0].mxu0
        %2392 = vmatprep.mubr.f32.mxu0 0.0
        %2393 = vmatmul.mubr.f32.gmra.mrb[0].mxu0 %v2299
        %v2394 = vpop.f32.mrb[0].mxu0
        %v2395 = vadd.f32 0.0, %v2394
        %v2396 = vpop.f32.mrb[0].mxu0
        %2397 = vmatprep.mubr.f32.mxu0 0.0
        %2398 = vmatmul.mubr.f32.gmra.mrb[0].mxu0 %v2300
        %v2399 = vpop.f32.mrb[0].mxu0
        %v2400 = vadd.f32 0.0, %v2399
        %v2401 = vpop.f32.mrb[0].mxu0
        %2402 = vdwg.mxu0
        %v2403 = vadd.f32 %v2293, %v2385
        %v2404 = vadd.f32 %v2294, %v2390
        %v2405 = vadd.f32 %v2295, %v2395
        %v2406 = vadd.f32 %v2296, %v2400
        %s2407 = scalar_lea.vmem [#allocation3], 32
        %v2408 = vld [vmem:[%s2407] sm:$0xff]
        %v2409 = vld [vmem:[%s2407 + $0x10] sm:$0xff]
        %v2410 = vld [vmem:[%s2407 + $0x20] sm:$0xff]
        %v2411 = vld [vmem:[%s2407 + $0x30] sm:$0xff]
        %s2412 = scalar_lea.vmem [#allocation16], 768
        %v2413 = vld [vmem:[%s2412] sm:$0xff]
        %v2414 = vld [vmem:[%s2412 + $0x8] sm:$0xff]
        %v2415 = vld [vmem:[%s2412 + $0x10] sm:$0xff]
        %v2416 = vld [vmem:[%s2412 + $0x18] sm:$0xff]
        %v2417 = vld [vmem:[%s2412 + $0x20] sm:$0xff]
        %v2418 = vld [vmem:[%s2412 + $0x28] sm:$0xff]
        %v2419 = vld [vmem:[%s2412 + $0x30] sm:$0xff]
        %v2420 = vld [vmem:[%s2412 + $0x38] sm:$0xff]
        %v2421 = vld [vmem:[%s2412 + $0x40] sm:$0xff]
        %v2422 = vld [vmem:[%s2412 + $0x48] sm:$0xff]
        %v2423 = vld [vmem:[%s2412 + $0x50] sm:$0xff]
        %v2424 = vld [vmem:[%s2412 + $0x58] sm:$0xff]
        %v2425 = vld [vmem:[%s2412 + $0x60] sm:$0xff]
        %v2426 = vld [vmem:[%s2412 + $0x68] sm:$0xff]
        %v2427 = vld [vmem:[%s2412 + $0x70] sm:$0xff]
        %v2428 = vld [vmem:[%s2412 + $0x78] sm:$0xff]
        %2429 = vmatprep.subr.mxu0 0.0
        %2430 = vmatpush1.msra.mxu0 %v2413
        %2431 = vmatprep.subr.mxu0 0.0
        %2432 = vmatpush1.msra.mxu0 %v2414
        %2433 = vmatprep.subr.mxu0 0.0
        %2434 = vmatpush1.msra.mxu0 %v2415
        %2435 = vmatprep.subr.mxu0 0.0
        %2436 = vmatpush1.msra.mxu0 %v2416
        %2437 = vmatprep.subr.mxu0 0.0
        %2438 = vmatpush1.msra.mxu0 %v2417
        %2439 = vmatprep.subr.mxu0 0.0
        %2440 = vmatpush1.msra.mxu0 %v2418
        %2441 = vmatprep.subr.mxu0 0.0
        %2442 = vmatpush1.msra.mxu0 %v2419
        %2443 = vmatprep.subr.mxu0 0.0
        %2444 = vmatpush1.msra.mxu0 %v2420
        %2445 = vmatprep.subr.mxu0 0.0
        %2446 = vmatpush1.msra.mxu0 %v2421
        %2447 = vmatprep.subr.mxu0 0.0
        %2448 = vmatpush1.msra.mxu0 %v2422
        %2449 = vmatprep.subr.mxu0 0.0
        %2450 = vmatpush1.msra.mxu0 %v2423
        %2451 = vmatprep.subr.mxu0 0.0
        %2452 = vmatpush1.msra.mxu0 %v2424
        %2453 = vmatprep.subr.mxu0 0.0
        %2454 = vmatpush1.msra.mxu0 %v2425
        %2455 = vmatprep.subr.mxu0 0.0
        %2456 = vmatpush1.msra.mxu0 %v2426
        %2457 = vmatprep.subr.mxu0 0.0
        %2458 = vmatpush1.msra.mxu0 %v2427
        %2459 = vmatprep.subr.mxu0 0.0
        %2460 = vmatpush1.msra.mxu0 %v2428
        %2461 = vmatprep.subr.mxu0 0.0
        %2462 = vmatpush1.msra.mxu0 0.0
        %2463 = vmatprep.subr.mxu0 0.0
        %2464 = vmatpush1.msra.mxu0 0.0
        %2465 = vmatprep.subr.mxu0 0.0
        %2466 = vmatpush1.msra.mxu0 0.0
        %2467 = vmatprep.subr.mxu0 0.0
        %2468 = vmatpush1.msra.mxu0 0.0
        %2469 = vmatprep.subr.mxu0 0.0
        %2470 = vmatpush1.msra.mxu0 0.0
        %2471 = vmatprep.subr.mxu0 0.0
        %2472 = vmatpush1.msra.mxu0 0.0
        %2473 = vmatprep.subr.mxu0 0.0
        %2474 = vmatpush1.msra.mxu0 0.0
        %2475 = vmatprep.subr.mxu0 0.0
        %2476 = vmatpush1.msra.mxu0 0.0
        %2477 = vmatprep.subr.mxu0 0.0
        %2478 = vmatpush1.msra.mxu0 0.0
        %2479 = vmatprep.subr.mxu0 0.0
        %2480 = vmatpush1.msra.mxu0 0.0
        %2481 = vmatprep.subr.mxu0 0.0
        %2482 = vmatpush1.msra.mxu0 0.0
        %2483 = vmatprep.subr.mxu0 0.0
        %2484 = vmatpush1.msra.mxu0 0.0
        %2485 = vmatprep.subr.mxu0 0.0
        %2486 = vmatpush1.msra.mxu0 0.0
        %2487 = vmatprep.subr.mxu0 0.0
        %2488 = vmatpush1.msra.mxu0 0.0
        %2489 = vmatprep.subr.mxu0 0.0
        %2490 = vmatpush1.msra.mxu0 0.0
        %2491 = vmatprep.subr.mxu0 0.0
        %2492 = vmatpush1.msra.mxu0 0.0
        %2493 = vmatprep.mubr.f32.mxu0 0.0
        %2494 = vmatmul.mubr.f32.gmra.mrb[0].mxu0 %v2408
        %v2495 = vpop.f32.mrb[0].mxu0
        %v2496 = vadd.f32 0.0, %v2495
        %v2497 = vpop.f32.mrb[0].mxu0
        %2498 = vmatprep.mubr.f32.mxu0 0.0
        %2499 = vmatmul.mubr.f32.gmra.mrb[0].mxu0 %v2409
        %v2500 = vpop.f32.mrb[0].mxu0
        %v2501 = vadd.f32 0.0, %v2500
        %v2502 = vpop.f32.mrb[0].mxu0
        %2503 = vmatprep.mubr.f32.mxu0 0.0
        %2504 = vmatmul.mubr.f32.gmra.mrb[0].mxu0 %v2410
        %v2505 = vpop.f32.mrb[0].mxu0
        %v2506 = vadd.f32 0.0, %v2505
        %v2507 = vpop.f32.mrb[0].mxu0
        %2508 = vmatprep.mubr.f32.mxu0 0.0
        %2509 = vmatmul.mubr.f32.gmra.mrb[0].mxu0 %v2411
        %v2510 = vpop.f32.mrb[0].mxu0
        %v2511 = vadd.f32 0.0, %v2510
        %v2512 = vpop.f32.mrb[0].mxu0
        %2513 = vdwg.mxu0
        %v2514 = vadd.f32 %v2403, %v2496
        %v2515 = vadd.f32 %v2404, %v2501
        %v2516 = vadd.f32 %v2405, %v2506
        %v2517 = vadd.f32 %v2406, %v2511
        %v2518 = vld [vmem:[%s2407 + $0x1] sm:$0xff]
        %v2519 = vld [vmem:[%s2407 + $0x11] sm:$0xff]
        %v2520 = vld [vmem:[%s2407 + $0x21] sm:$0xff]
        %v2521 = vld [vmem:[%s2407 + $0x31] sm:$0xff]
        %s2522 = scalar_lea.vmem [#allocation16], 896
        %v2523 = vld [vmem:[%s2522] sm:$0xff]
        %v2524 = vld [vmem:[%s2522 + $0x8] sm:$0xff]
        %v2525 = vld [vmem:[%s2522 + $0x10] sm:$0xff]
        %v2526 = vld [vmem:[%s2522 + $0x18] sm:$0xff]
        %v2527 = vld [vmem:[%s2522 + $0x20] sm:$0xff]
        %v2528 = vld [vmem:[%s2522 + $0x28] sm:$0xff]
        %v2529 = vld [vmem:[%s2522 + $0x30] sm:$0xff]
        %v2530 = vld [vmem:[%s2522 + $0x38] sm:$0xff]
        %v2531 = vld [vmem:[%s2522 + $0x40] sm:$0xff]
        %v2532 = vld [vmem:[%s2522 + $0x48] sm:$0xff]
        %v2533 = vld [vmem:[%s2522 + $0x50] sm:$0xff]
        %v2534 = vld [vmem:[%s2522 + $0x58] sm:$0xff]
        %v2535 = vld [vmem:[%s2522 + $0x60] sm:$0xff]
        %v2536 = vld [vmem:[%s2522 + $0x68] sm:$0xff]
        %v2537 = vld [vmem:[%s2522 + $0x70] sm:$0xff]
        %v2538 = vld [vmem:[%s2522 + $0x78] sm:$0xff]
        %2539 = vmatprep.subr.mxu0 0.0
        %2540 = vmatpush1.msra.mxu0 %v2523
        %2541 = vmatprep.subr.mxu0 0.0
        %2542 = vmatpush1.msra.mxu0 %v2524
        %2543 = vmatprep.subr.mxu0 0.0
        %2544 = vmatpush1.msra.mxu0 %v2525
        %2545 = vmatprep.subr.mxu0 0.0
        %2546 = vmatpush1.msra.mxu0 %v2526
        %2547 = vmatprep.subr.mxu0 0.0
        %2548 = vmatpush1.msra.mxu0 %v2527
        %2549 = vmatprep.subr.mxu0 0.0
        %2550 = vmatpush1.msra.mxu0 %v2528
        %2551 = vmatprep.subr.mxu0 0.0
        %2552 = vmatpush1.msra.mxu0 %v2529
        %2553 = vmatprep.subr.mxu0 0.0
        %2554 = vmatpush1.msra.mxu0 %v2530
        %2555 = vmatprep.subr.mxu0 0.0
        %2556 = vmatpush1.msra.mxu0 %v2531
        %2557 = vmatprep.subr.mxu0 0.0
        %2558 = vmatpush1.msra.mxu0 %v2532
        %2559 = vmatprep.subr.mxu0 0.0
        %2560 = vmatpush1.msra.mxu0 %v2533
        %2561 = vmatprep.subr.mxu0 0.0
        %2562 = vmatpush1.msra.mxu0 %v2534
        %2563 = vmatprep.subr.mxu0 0.0
        %2564 = vmatpush1.msra.mxu0 %v2535
        %2565 = vmatprep.subr.mxu0 0.0
        %2566 = vmatpush1.msra.mxu0 %v2536
        %2567 = vmatprep.subr.mxu0 0.0
        %2568 = vmatpush1.msra.mxu0 %v2537
        %2569 = vmatprep.subr.mxu0 0.0
        %2570 = vmatpush1.msra.mxu0 %v2538
        %2571 = vmatprep.subr.mxu0 0.0
        %2572 = vmatpush1.msra.mxu0 0.0
        %2573 = vmatprep.subr.mxu0 0.0
        %2574 = vmatpush1.msra.mxu0 0.0
        %2575 = vmatprep.subr.mxu0 0.0
        %2576 = vmatpush1.msra.mxu0 0.0
        %2577 = vmatprep.subr.mxu0 0.0
        %2578 = vmatpush1.msra.mxu0 0.0
        %2579 = vmatprep.subr.mxu0 0.0
        %2580 = vmatpush1.msra.mxu0 0.0
        %2581 = vmatprep.subr.mxu0 0.0
        %2582 = vmatpush1.msra.mxu0 0.0
        %2583 = vmatprep.subr.mxu0 0.0
        %2584 = vmatpush1.msra.mxu0 0.0
        %2585 = vmatprep.subr.mxu0 0.0
        %2586 = vmatpush1.msra.mxu0 0.0
        %2587 = vmatprep.subr.mxu0 0.0
        %2588 = vmatpush1.msra.mxu0 0.0
        %2589 = vmatprep.subr.mxu0 0.0
        %2590 = vmatpush1.msra.mxu0 0.0
        %2591 = vmatprep.subr.mxu0 0.0
        %2592 = vmatpush1.msra.mxu0 0.0
        %2593 = vmatprep.subr.mxu0 0.0
        %2594 = vmatpush1.msra.mxu0 0.0
        %2595 = vmatprep.subr.mxu0 0.0
        %2596 = vmatpush1.msra.mxu0 0.0
        %2597 = vmatprep.subr.mxu0 0.0
        %2598 = vmatpush1.msra.mxu0 0.0
        %2599 = vmatprep.subr.mxu0 0.0
        %2600 = vmatpush1.msra.mxu0 0.0
        %2601 = vmatprep.subr.mxu0 0.0
        %2602 = vmatpush1.msra.mxu0 0.0
        %2603 = vmatprep.mubr.f32.mxu0 0.0
        %2604 = vmatmul.mubr.f32.gmra.mrb[0].mxu0 %v2518
        %v2605 = vpop.f32.mrb[0].mxu0
        %v2606 = vadd.f32 0.0, %v2605
        %v2607 = vpop.f32.mrb[0].mxu0
        %2608 = vmatprep.mubr.f32.mxu0 0.0
        %2609 = vmatmul.mubr.f32.gmra.mrb[0].mxu0 %v2519
        %v2610 = vpop.f32.mrb[0].mxu0
        %v2611 = vadd.f32 0.0, %v2610
        %v2612 = vpop.f32.mrb[0].mxu0
        %2613 = vmatprep.mubr.f32.mxu0 0.0
        %2614 = vmatmul.mubr.f32.gmra.mrb[0].mxu0 %v2520
        %v2615 = vpop.f32.mrb[0].mxu0
        %v2616 = vadd.f32 0.0, %v2615
        %v2617 = vpop.f32.mrb[0].mxu0
        %2618 = vmatprep.mubr.f32.mxu0 0.0
        %2619 = vmatmul.mubr.f32.gmra.mrb[0].mxu0 %v2521
        %v2620 = vpop.f32.mrb[0].mxu0
        %v2621 = vadd.f32 0.0, %v2620
        %v2622 = vpop.f32.mrb[0].mxu0
        %2623 = vdwg.mxu0
        %v2624 = vadd.f32 %v2514, %v2606
        %v2625 = vadd.f32 %v2515, %v2611
        %v2626 = vadd.f32 %v2516, %v2616
        %v2627 = vadd.f32 %v2517, %v2621
        %v2628 = vld [vmem:[%s2407 + $0x2] sm:$0xff]
        %v2629 = vld [vmem:[%s2407 + $0x12] sm:$0xff]
        %v2630 = vld [vmem:[%s2407 + $0x22] sm:$0xff]
        %v2631 = vld [vmem:[%s2407 + $0x32] sm:$0xff]
        %s2632 = scalar_lea.vmem [#allocation16], 1024
        %v2633 = vld [vmem:[%s2632] sm:$0xff]
        %v2634 = vld [vmem:[%s2632 + $0x8] sm:$0xff]
        %v2635 = vld [vmem:[%s2632 + $0x10] sm:$0xff]
        %v2636 = vld [vmem:[%s2632 + $0x18] sm:$0xff]
        %v2637 = vld [vmem:[%s2632 + $0x20] sm:$0xff]
        %v2638 = vld [vmem:[%s2632 + $0x28] sm:$0xff]
        %v2639 = vld [vmem:[%s2632 + $0x30] sm:$0xff]
        %v2640 = vld [vmem:[%s2632 + $0x38] sm:$0xff]
        %v2641 = vld [vmem:[%s2632 + $0x40] sm:$0xff]
        %v2642 = vld [vmem:[%s2632 + $0x48] sm:$0xff]
        %v2643 = vld [vmem:[%s2632 + $0x50] sm:$0xff]
        %v2644 = vld [vmem:[%s2632 + $0x58] sm:$0xff]
        %v2645 = vld [vmem:[%s2632 + $0x60] sm:$0xff]
        %v2646 = vld [vmem:[%s2632 + $0x68] sm:$0xff]
        %v2647 = vld [vmem:[%s2632 + $0x70] sm:$0xff]
        %v2648 = vld [vmem:[%s2632 + $0x78] sm:$0xff]
        %2649 = vmatprep.subr.mxu0 0.0
        %2650 = vmatpush1.msra.mxu0 %v2633
        %2651 = vmatprep.subr.mxu0 0.0
        %2652 = vmatpush1.msra.mxu0 %v2634
        %2653 = vmatprep.subr.mxu0 0.0
        %2654 = vmatpush1.msra.mxu0 %v2635
        %2655 = vmatprep.subr.mxu0 0.0
        %2656 = vmatpush1.msra.mxu0 %v2636
        %2657 = vmatprep.subr.mxu0 0.0
        %2658 = vmatpush1.msra.mxu0 %v2637
        %2659 = vmatprep.subr.mxu0 0.0
        %2660 = vmatpush1.msra.mxu0 %v2638
        %2661 = vmatprep.subr.mxu0 0.0
        %2662 = vmatpush1.msra.mxu0 %v2639
        %2663 = vmatprep.subr.mxu0 0.0
        %2664 = vmatpush1.msra.mxu0 %v2640
        %2665 = vmatprep.subr.mxu0 0.0
        %2666 = vmatpush1.msra.mxu0 %v2641
        %2667 = vmatprep.subr.mxu0 0.0
        %2668 = vmatpush1.msra.mxu0 %v2642
        %2669 = vmatprep.subr.mxu0 0.0
        %2670 = vmatpush1.msra.mxu0 %v2643
        %2671 = vmatprep.subr.mxu0 0.0
        %2672 = vmatpush1.msra.mxu0 %v2644
        %2673 = vmatprep.subr.mxu0 0.0
        %2674 = vmatpush1.msra.mxu0 %v2645
        %2675 = vmatprep.subr.mxu0 0.0
        %2676 = vmatpush1.msra.mxu0 %v2646
        %2677 = vmatprep.subr.mxu0 0.0
        %2678 = vmatpush1.msra.mxu0 %v2647
        %2679 = vmatprep.subr.mxu0 0.0
        %2680 = vmatpush1.msra.mxu0 %v2648
        %2681 = vmatprep.subr.mxu0 0.0
        %2682 = vmatpush1.msra.mxu0 0.0
        %2683 = vmatprep.subr.mxu0 0.0
        %2684 = vmatpush1.msra.mxu0 0.0
        %2685 = vmatprep.subr.mxu0 0.0
        %2686 = vmatpush1.msra.mxu0 0.0
        %2687 = vmatprep.subr.mxu0 0.0
        %2688 = vmatpush1.msra.mxu0 0.0
        %2689 = vmatprep.subr.mxu0 0.0
        %2690 = vmatpush1.msra.mxu0 0.0
        %2691 = vmatprep.subr.mxu0 0.0
        %2692 = vmatpush1.msra.mxu0 0.0
        %2693 = vmatprep.subr.mxu0 0.0
        %2694 = vmatpush1.msra.mxu0 0.0
        %2695 = vmatprep.subr.mxu0 0.0
        %2696 = vmatpush1.msra.mxu0 0.0
        %2697 = vmatprep.subr.mxu0 0.0
        %2698 = vmatpush1.msra.mxu0 0.0
        %2699 = vmatprep.subr.mxu0 0.0
        %2700 = vmatpush1.msra.mxu0 0.0
        %2701 = vmatprep.subr.mxu0 0.0
        %2702 = vmatpush1.msra.mxu0 0.0
        %2703 = vmatprep.subr.mxu0 0.0
        %2704 = vmatpush1.msra.mxu0 0.0
        %2705 = vmatprep.subr.mxu0 0.0
        %2706 = vmatpush1.msra.mxu0 0.0
        %2707 = vmatprep.subr.mxu0 0.0
        %2708 = vmatpush1.msra.mxu0 0.0
        %2709 = vmatprep.subr.mxu0 0.0
        %2710 = vmatpush1.msra.mxu0 0.0
        %2711 = vmatprep.subr.mxu0 0.0
        %2712 = vmatpush1.msra.mxu0 0.0
        %2713 = vmatprep.mubr.f32.mxu0 0.0
        %2714 = vmatmul.mubr.f32.gmra.mrb[0].mxu0 %v2628
        %v2715 = vpop.f32.mrb[0].mxu0
        %v2716 = vadd.f32 0.0, %v2715
        %v2717 = vpop.f32.mrb[0].mxu0
        %2718 = vmatprep.mubr.f32.mxu0 0.0
        %2719 = vmatmul.mubr.f32.gmra.mrb[0].mxu0 %v2629
        %v2720 = vpop.f32.mrb[0].mxu0
        %v2721 = vadd.f32 0.0, %v2720
        %v2722 = vpop.f32.mrb[0].mxu0
        %2723 = vmatprep.mubr.f32.mxu0 0.0
        %2724 = vmatmul.mubr.f32.gmra.mrb[0].mxu0 %v2630
        %v2725 = vpop.f32.mrb[0].mxu0
        %v2726 = vadd.f32 0.0, %v2725
        %v2727 = vpop.f32.mrb[0].mxu0
        %2728 = vmatprep.mubr.f32.mxu0 0.0
        %2729 = vmatmul.mubr.f32.gmra.mrb[0].mxu0 %v2631
        %v2730 = vpop.f32.mrb[0].mxu0
        %v2731 = vadd.f32 0.0, %v2730
        %v2732 = vpop.f32.mrb[0].mxu0
        %2733 = vdwg.mxu0
        %v2734 = vadd.f32 %v2624, %v2716
        %v2735 = vadd.f32 %v2625, %v2721
        %v2736 = vadd.f32 %v2626, %v2726
        %v2737 = vadd.f32 %v2627, %v2731
        %2738 = vst [vmem:[%s653] sm:$0xff] %v2734
        %2739 = vst [vmem:[%s653 + $0x8] sm:$0xff] %v2735
        %2740 = vst [vmem:[%s653 + $0x10] sm:$0xff] %v2736
        %2741 = vst [vmem:[%s653 + $0x18] sm:$0xff] %v2737
        %v2742 = vadd.f32 %v2734, %v2735
        %v2743 = vadd.f32 %v2742, %v2736
        %v2744 = vadd.f32 %v2743, %v2737
        %v2745 = vrot.slane %v2744, 4
        %v2746 = vadd.f32 %v2744, %v2745
        %v2747 = vrot.slane %v2746, 2
        %v2748 = vadd.f32 %v2746, %v2747
        %v2749 = vrot.slane %v2748, 1
        %v2750 = vadd.f32 %v2748, %v2749
        %v2751 = vmul.f32 %v2734, %v2734
        %v2752 = vmul.f32 %v2735, %v2735
        %v2753 = vmul.f32 %v2736, %v2736
        %v2754 = vmul.f32 %v2737, %v2737
        %v2755 = vadd.f32 %v2751, %v2752
        %v2756 = vadd.f32 %v2755, %v2753
        %v2757 = vadd.f32 %v2756, %v2754
        %v2758 = vrot.slane %v2757, 4
        %v2759 = vadd.f32 %v2757, %v2758
        %v2760 = vrot.slane %v2759, 2
        %v2761 = vadd.f32 %v2759, %v2760
        %v2762 = vrot.slane %v2761, 1
        %v2763 = vadd.f32 %v2761, %v2762
        %vm2764 = vcmask 1040384
        %v2765 = vsel %vm2764, %v2750, %v2763
        %2766 = vst [vmem:[%s660] sm:$0x3] %v2765
        %s2767 = sand.u32 %s304, 1
        %s2768 = scalar_lea.sflag [#allocation6], %s2767
        %s2769 = sand.u32 %s304, 1
        %s2770 = smul.addr %s2769, 32
        %s2771 = scalar_lea.vmem [#allocation18], %s2770
        %s2772 = sand.u32 %s332, 1
        %s2773 = scalar_lea.sflag [#allocation20], %s2772
        %s2774 = sand.u32 %s332, 1
        %s2775 = smul.addr %s2774, 2
        %s2776 = scalar_lea.vmem [#allocation19], %s2775
        // Predicated region
        $region117: #{tpu_custom_call.1} parent=51 // pred_check
          %p2777 = pneg %p314
        $region118: #{tpu_custom_call.1} parent=51 // pred_check_branch
          %2779 = sbr.rel (%p2777) target = $region120
        $region119: #{tpu_custom_call.1} parent=51 // pred_region
          %s2780 = smul.u32 4, %s45
          %s2782 = ssub.s32 512, 512
          %2783 = vsyncadd %s2768, %s2782
          %s2784 = smul.addr %s44, 8
          %s2785 = sadd.s32 %s2780, %s2784
          %s2786 = smul.addr %s2785, 128
          %s2787 = scalar_lea.hbm %s8, %s2786
          %s2788 = sshll.u32 %s2771, 4
          %s2789 = int_to_ptr.vmem [resolvable:$true] %s2788
          %2794 = dma.vmem_to_hbm [thread:$0]  %s2789, 512, %s2787, %s2768, 128, 128, 8
        $region120: #{tpu_custom_call.1} parent=51 // pred_fallthru
          _
        // Predicated region
        $region121: #{tpu_custom_call.1} parent=51 // pred_check
          %p2795 = pneg %p342
        $region122: #{tpu_custom_call.1} parent=51 // pred_check_branch
          %2797 = sbr.rel (%p2795) target = $region124
        $region123: #{tpu_custom_call.1} parent=51 // pred_region
          %s2799 = ssub.s32 32, 32
          %2800 = vsyncadd %s2773, %s2799
          %s2801 = smul.addr %s44, 2
          %s2802 = sadd.s32 %s45, %s2801
          %s2803 = smul.addr %s2802, 32
          %s2804 = scalar_lea.hbm %s9, %s2803
          %s2806 = sshll.u32 %s2776, 4
          %s2807 = int_to_ptr.vmem [resolvable:$true] %s2806
          %2809 = dma.vmem_to_hbm [thread:$0]  %s2807, 32, %s2804, %s2773
        $region124: #{tpu_custom_call.1} parent=51 // pred_fallthru
          _
      $region52: #{tpu_custom_call.1} parent=5 // pred_fallthru
        _
      %p2810 = scmp.le.s32.totalorder 2, %s35
      // Predicated region
      $region125: #{tpu_custom_call.1} parent=5 // pred_check
        %p2811 = pneg %p2810
      $region126: #{tpu_custom_call.1} parent=5 // pred_check_branch
        %2813 = sbr.rel (%p2811) target = $region128
      $region127: #{tpu_custom_call.1} parent=5 // pred_region
        %s2814 = ssub.s32 %s35, 2
        // Predicated region
        $region129: #{tpu_custom_call.1} parent=127 // pred_check
          %p2815 = pneg %p320
        $region130: #{tpu_custom_call.1} parent=127 // pred_check_branch
          %2817 = sbr.rel (%p2815) target = $region132
        $region131: #{tpu_custom_call.1} parent=127 // pred_region
          %s2818 = sand.u32 %s305, 1
          %s2819 = scalar_lea.sflag [#allocation6], %s2818
          %s2820 = sand.u32 %s305, 1
          %s2821 = smul.addr %s2820, 32
          %s2822 = scalar_lea.vmem [#allocation18], %s2821
          %2823 = dma.done %s2819, 512
        $region132: #{tpu_custom_call.1} parent=127 // pred_fallthru
          _
        // Predicated region
        $region133: #{tpu_custom_call.1} parent=127 // pred_check
          %p2824 = pneg %p348
        $region134: #{tpu_custom_call.1} parent=127 // pred_check_branch
          %2826 = sbr.rel (%p2824) target = $region136
        $region135: #{tpu_custom_call.1} parent=127 // pred_region
          %s2827 = sand.u32 %s333, 1
          %s2828 = scalar_lea.sflag [#allocation20], %s2827
          %s2829 = sand.u32 %s333, 1
          %s2830 = smul.addr %s2829, 2
          %s2831 = scalar_lea.vmem [#allocation19], %s2830
          %2832 = dma.done %s2828, 32
        $region136: #{tpu_custom_call.1} parent=127 // pred_fallthru
          _
      $region128: #{tpu_custom_call.1} parent=5 // pred_fallthru
        _
    $region6: #{tpu_custom_call.1} parent=1 // loop_footer
      %s39 = sadd.s32 1, %s35
    $region7: #{tpu_custom_call.1} parent=1 // loop_footer_branch
      %34 = sbr.rel target = $region3
    $region8: #{tpu_custom_call.1} parent=1 // loop_exit
      _
    %2833 = vsyncpa [#allocation5], 1
    %s2834 = scalar_lea.sflag [#allocation5], 1
    %2835 = vsyncpa %s2834, 1
    %2836 = vsyncpa [#allocation8], 1
    %s2837 = scalar_lea.sflag [#allocation8], 1
    %2838 = vsyncpa %s2837, 1
    %2839 = vsyncpa [#allocation11], 1
    %s2840 = scalar_lea.sflag [#allocation11], 1
    %2841 = vsyncpa %s2840, 1
    %2842 = vsyncpa [#allocation14], 1
    %s2843 = scalar_lea.sflag [#allocation14], 1
    %2844 = vsyncpa %s2843, 1
    %2845 = vsyncpa [#allocation17], 1
    %2846 = vsyncpa [#allocation6], 1
    %s2847 = scalar_lea.sflag [#allocation6], 1
    %2848 = vsyncpa %s2847, 1
    %2849 = vsyncpa [#allocation20], 1
    %s2850 = scalar_lea.sflag [#allocation20], 1
    %2851 = vsyncpa %s2850, 1

</llo_original>
